<compile_context>
chip_gen: v6e
topology: v6e:2x2x1
jax: 0.10.0
libtpu: 0.0.40
codegen_flags: <defaults>
</compile_context>

<pallas_src>
import functools

import jax
import jax.numpy as jnp
from jax.experimental import pallas as pl
from jax.experimental.pallas import tpu as pltpu


def _layernorm(x, g, b, eps=1e-5):
    mu = jnp.mean(x, axis=-1, keepdims=True)
    var = jnp.mean(jnp.square(x - mu), axis=-1, keepdims=True)
    return (x - mu) * jax.lax.rsqrt(var + eps) * g + b


def _gelu_tanh(x):
    c = 0.7978845608028654  # sqrt(2/pi)
    return 0.5 * x * (1.0 + jnp.tanh(c * (x + 0.044715 * x * x * x)))


def block_moe_kernel(x_ref,
                     ln1_g_ref, ln1_b_ref,
                     w_qkv_ref,                   # (D, 3D) bf16, 1/sqrt(hd) folded into Q cols
                     w_proj_ref, b_proj_ref,      # (D, D) bf16 ; (1, D) f32
                     ln2_g_ref, ln2_b_ref,
                     w_gate_ref,                  # (D, LP) bf16, lane-padded router weight
                     w1_ref, b1_ref, w2_ref, b2_ref,   # resident (E,...) or streamed (1,...)
                     out_ref, logits_ref,
                     z_scr, gates_scr, acc_scr, attn_scr,
                     *, num_heads, num_experts, act_dtype):
    e = pl.program_id(1)
    TB, N, D = x_ref.shape
    M = TB * N
    LP = w_gate_ref.shape[1]
    hd = D // num_heads

    # ---- e == 0: norm1 + attention + residual + norm2 + router (persist in scratch) ----
    @pl.when(e == 0)
    def _prologue():
        x = x_ref[...].reshape(M, D).astype(jnp.float32)
        xn = _layernorm(x, ln1_g_ref[...], ln1_b_ref[...]).astype(jnp.bfloat16)

        # One fused, lane-dense QKV matmul over all M tokens (full MXU occupancy).
        qkv = jnp.dot(xn, w_qkv_ref[...],
                      preferred_element_type=jnp.float32).astype(jnp.bfloat16)  # (M, 3D)

        # Score / PV matmuls are inherently per-head (K = hd); batch them over TB and
        # stage each head's output into the (M, D) scratch slab (bounds live ranges).
        for h in range(num_heads):
            q_h = qkv[:, h * hd:(h + 1) * hd].reshape(TB, N, hd)        # scale pre-folded
            k_h = qkv[:, D + h * hd: D + (h + 1) * hd].reshape(TB, N, hd)
            v_h = qkv[:, 2 * D + h * hd: 2 * D + (h + 1) * hd].reshape(TB, N, hd)

            s = jnp.einsum('bqd,bkd->bqk', q_h, k_h,
                           preferred_element_type=jnp.float32)           # (TB, N, N)
            s = s - jnp.max(s, axis=-1, keepdims=True)
            p = jnp.exp(s)
            p = p * pl.reciprocal(jnp.sum(p, axis=-1, keepdims=True), approx=True)
            o_h = jnp.einsum('bqk,bkd->bqd', p.astype(jnp.bfloat16), v_h,
                             preferred_element_type=jnp.float32)         # (TB, N, hd)
            attn_scr[:, h * hd:(h + 1) * hd] = o_h.reshape(M, hd)

        # One fused output projection over all M tokens.
        proj = jnp.dot(attn_scr[...].astype(jnp.bfloat16), w_proj_ref[...],
                       preferred_element_type=jnp.float32) + b_proj_ref[...]
        y = x + proj                                                     # attention residual
        z = _layernorm(y, ln2_g_ref[...], ln2_b_ref[...])
        z_bf = z.astype(jnp.bfloat16)
        z_scr[...] = z_bf

        # Router: lane-dense (M, LP) logits; exact softmax over the first E lanes so the
        # kernel's mixing gates agree with the host-side aux-loss softmax.
        logits = jnp.dot(z_bf, w_gate_ref[...],
                         preferred_element_type=jnp.float32)             # (M, LP)
        logits_ref[...] = logits.reshape(TB, N, LP)
        lane = jax.lax.broadcasted_iota(jnp.int32, (M, LP), 1)
        masked = jnp.where(lane < num_experts, logits, -1e30)
        eg = jnp.exp(masked - jnp.max(masked, axis=-1, keepdims=True))
        gates_scr[...] = eg / jnp.sum(eg, axis=-1, keepdims=True)

        acc_scr[...] = jnp.zeros_like(acc_scr)

    # ---- every e: one expert MLP (weights resident or streamed along the e axis) ----
    we = e if w1_ref.shape[0] > 1 else 0            # static shape check at trace time
    z = z_scr[...]
    h1 = jnp.dot(z, w1_ref[we], preferred_element_type=jnp.float32) + b1_ref[we]
    h1 = _gelu_tanh(h1.astype(act_dtype))           # bf16 VPU/EUP path on v6e/v7x
    o = jnp.dot(h1.astype(jnp.bfloat16), w2_ref[we],
                preferred_element_type=jnp.float32) + b2_ref[we]         # (M, D)

    lane = jax.lax.broadcasted_iota(jnp.int32, (M, gates_scr.shape[1]), 1)
    g_e = jnp.sum(jnp.where(lane == e, gates_scr[...], 0.0),
                  axis=-1, keepdims=True)                                # (M, 1)
    acc_scr[...] += g_e * o

    @pl.when(e == num_experts - 1)
    def _epilogue():
        # x = moe_out; then x = x + ls2(x) with Identity ls2/drop_path2 -> 2 * moe_out
        out_ref[...] = (acc_scr[...] * 2.0).reshape(TB, N, D).astype(out_ref.dtype)


def prepare_block_moe_params(raw, num_heads):
    """One-time (outside pallas_call) transforms: bf16 MXU operands, 1/sqrt(hd) folded
    into the Q columns of the fused QKV weight, router weight lane-padded to >=128."""
    D = raw["w_qkv"].shape[0]
    E = raw["w1"].shape[0]
    hd = D // num_heads
    scale = float(hd) ** -0.5
    LP = max(128, ((E + 127) // 128) * 128)

    w_qkv = jnp.concatenate([raw["w_qkv"][:, :D] * scale, raw["w_qkv"][:, D:]],
                            axis=1).astype(jnp.bfloat16)                 # (D, 3D)
    w_gate_p = jnp.zeros((D, LP), jnp.float32).at[:, :E].set(raw["w_gate"])

    kparams = dict(
        ln1_g=raw["ln1_g"].astype(jnp.float32),
        ln1_b=raw["ln1_b"].astype(jnp.float32),
        w_qkv=w_qkv,
        w_proj=raw["w_proj"].astype(jnp.bfloat16),
        b_proj=raw["b_proj"].astype(jnp.float32),
        ln2_g=raw["ln2_g"].astype(jnp.float32),
        ln2_b=raw["ln2_b"].astype(jnp.float32),
        w_gate=w_gate_p.astype(jnp.bfloat16),
        w1=raw["w1"].astype(jnp.bfloat16),
        b1=raw["b1"].astype(jnp.float32),
        w2=raw["w2"].astype(jnp.bfloat16),
        b2=raw["b2"].astype(jnp.float32),
    )
    return kparams, LP


def _device_kind():
    try:
        return jax.devices()[0].device_kind.lower()
    except Exception:
        return ""


def block_moe_forward(x, raw_params, *, num_heads, num_experts,
                      samples_per_step=None, target_tokens_per_step=1024,
                      bf16_activations=None):
    B, N, D = x.shape
    E = num_experts
    assert D % num_heads == 0
    hd = D // num_heads

    kparams, LP = prepare_block_moe_params(raw_params, num_heads)
    assert kparams["w1"].shape[0] == E
    Hm = kparams["w1"].shape[2]

    kind = _device_kind()
    if bf16_activations is None:
        bf16_activations = "v5" not in kind      # v5e has no bf16 VPU/EUP
    act_dtype = jnp.bfloat16 if bf16_activations else jnp.float32
    is_v7 = "7" in kind                          # v7x: 64 MiB physical VMEM per TC
    vmem_limit = (44 if is_v7 else 96) * 1024 * 1024

    # Tokens per grid step: expert weights are re-fetched once per batch block when
    # streamed, so M = TB*N sets the MoE arithmetic intensity (~M flop/byte).
    if samples_per_step is not None:
        TB = samples_per_step
    else:
        TB = max(1, min(B, pl.cdiv(target_tokens_per_step, N)))
    while B % TB:
        TB -= 1          # largest divisor of B not above the target (may degrade for prime B)
    M = TB * N
    n_blocks = B // TB
    grid = (n_blocks, E)

    # Hoist all expert weights into VMEM (constant-index specs) when they are small.
    expert_bytes = int(sum(kparams[k].size * kparams[k].dtype.itemsize
                           for k in ("w1", "b1", "w2", "b2")))
    experts_resident = expert_bytes <= 8 * 1024 * 1024

    # Advisory cost estimate for the XLA scheduler.
    flops = (2 * B * N * D * 3 * D              # fused QKV projection
             + 4 * B * num_heads * N * N * hd   # scores + P@V
             + 2 * B * N * D * D                # fused output projection
             + 2 * B * N * D * LP               # router
             + 4 * E * B * N * D * Hm)          # expert MLPs
    transcendentals = B * num_heads * N * N + B * N * LP + E * B * N * Hm
    attn_param_bytes = int(sum(v.size * v.dtype.itemsize for k, v in kparams.items()
                               if k not in ("w1", "b1", "w2", "b2")))
    bytes_accessed = (2 * B * N * D * x.dtype.itemsize + B * N * LP * 4
                      + attn_param_bytes
                      + expert_bytes * (1 if experts_resident else n_blocks))

    kernel = functools.partial(block_moe_kernel, num_heads=num_heads,
                               num_experts=E, act_dtype=act_dtype)

    def build_and_call(single_buffer_consts):
        def const_spec(a):
            nd = a.ndim
            kw = {}
            if single_buffer_consts:
                # Constant block index -> double buffering only wastes VMEM.
                kw["pipeline_mode"] = pl.Buffered(1)
            return pl.BlockSpec(a.shape, lambda b, e, _nd=nd: (0,) * _nd, **kw)

        if experts_resident:
            w1_spec = const_spec(kparams["w1"])
            b1_spec = const_spec(kparams["b1"])
            w2_spec = const_spec(kparams["w2"])
            b2_spec = const_spec(kparams["b2"])
        else:
            w1_spec = pl.BlockSpec((1, D, Hm), lambda b, e: (e, 0, 0))
            b1_spec = pl.BlockSpec((1, 1, Hm), lambda b, e: (e, 0, 0))
            w2_spec = pl.BlockSpec((1, Hm, D), lambda b, e: (e, 0, 0))
            b2_spec = pl.BlockSpec((1, 1, D), lambda b, e: (e, 0, 0))

        return pl.pallas_call(
            kernel,
            out_shape=(jax.ShapeDtypeStruct((B, N, D), x.dtype),
                       jax.ShapeDtypeStruct((B, N, LP), jnp.float32)),
            grid_spec=pltpu.PrefetchScalarGridSpec(
                num_scalar_prefetch=0,
                grid=grid,
                in_specs=[
                    pl.BlockSpec((TB, N, D), lambda b, e: (b, 0, 0)),
                    const_spec(kparams["ln1_g"]), const_spec(kparams["ln1_b"]),
                    const_spec(kparams["w_qkv"]),
                    const_spec(kparams["w_proj"]), const_spec(kparams["b_proj"]),
                    const_spec(kparams["ln2_g"]), const_spec(kparams["ln2_b"]),
                    const_spec(kparams["w_gate"]),
                    w1_spec, b1_spec, w2_spec, b2_spec,
                ],
                out_specs=(pl.BlockSpec((TB, N, D), lambda b, e: (b, 0, 0)),
                           pl.BlockSpec((TB, N, LP), lambda b, e: (b, 0, 0))),
                scratch_shapes=[
                    pltpu.VMEM((M, D), jnp.bfloat16),    # z = norm2(y), MXU operand
                    pltpu.VMEM((M, LP), jnp.float32),    # lane-dense router gates
                    pltpu.VMEM((M, D), jnp.float32),     # MoE accumulator
                    pltpu.VMEM((M, D), jnp.float32),     # per-head attention outputs
                ],
            ),
            compiler_params=pltpu.CompilerParams(
                dimension_semantics=("parallel", "arbitrary"),
                vmem_limit_bytes=vmem_limit,
            ),
            cost_estimate=pl.CostEstimate(
                flops=int(flops),
                transcendentals=int(transcendentals),
                bytes_accessed=int(bytes_accessed)),
        )(x,
          kparams["ln1_g"], kparams["ln1_b"], kparams["w_qkv"],
          kparams["w_proj"], kparams["b_proj"],
          kparams["ln2_g"], kparams["ln2_b"], kparams["w_gate"],
          kparams["w1"], kparams["b1"], kparams["w2"], kparams["b2"])

    try:
        out, logits_p = build_and_call(True)
    except Exception:
        # pipeline_mode=pl.Buffered(1) is a recent knob; fall back to the default
        # double-buffered specs if this JAX/Mosaic build rejects it.
        out, logits_p = build_and_call(False)

    # Aux losses (stored on the module, not part of the returned tensor) — cheap JAX glue.
    logits = logits_p[:, :, :E]
    gates = jax.nn.softmax(logits, axis=-1)
    importance = jnp.mean(gates, axis=(0, 1))
    load = jnp.mean(jax.nn.one_hot(jnp.argmax(gates, axis=-1), E), axis=(0, 1))
    balance_loss = E * jnp.sum(importance * load)
    router_z_loss = jnp.mean(jax.nn.logsumexp(logits, axis=-1) ** 2)
    total_aux_loss = 1e-2 * balance_loss + 1e-3 * router_z_loss
    return out, total_aux_loss, balance_loss, router_z_loss


def _reference_forward(x, raw, num_heads, num_experts):
    """Pure-JAX f32 reference with identical semantics (exact softmax everywhere)."""
    B, N, D = x.shape
    hd = D // num_heads

    def ln(v, g, b, eps=1e-5):
        mu = v.mean(-1, keepdims=True)
        var = ((v - mu) ** 2).mean(-1, keepdims=True)
        return (v - mu) / jnp.sqrt(var + eps) * g + b

    xn = ln(x, raw["ln1_g"], raw["ln1_b"])
    qkv = xn @ raw["w_qkv"]                                    # (B, N, 3D)

    def heads(t):                                              # (B, N, D) -> (B, H, N, hd)
        return t.reshape(B, N, num_heads, hd).transpose(0, 2, 1, 3)

    q = heads(qkv[..., :D]) * (hd ** -0.5)
    k = heads(qkv[..., D:2 * D])
    v = heads(qkv[..., 2 * D:])
    s = jnp.einsum('bhqd,bhkd->bhqk', q, k)
    p = jax.nn.softmax(s, axis=-1)
    o = jnp.einsum('bhqk,bhkd->bhqd', p, v).transpose(0, 2, 1, 3).reshape(B, N, D)
    y = x + o @ raw["w_proj"] + raw["b_proj"]
    z = ln(y, raw["ln2_g"], raw["ln2_b"])
    gates = jax.nn.softmax(z @ raw["w_gate"], axis=-1)
    moe = jnp.zeros_like(z)
    for ei in range(num_experts):
        h1 = _gelu_tanh(z @ raw["w1"][ei] + raw["b1"][ei])
        moe = moe + gates[..., ei:ei + 1] * (h1 @ raw["w2"][ei] + raw["b2"][ei])
    return 2.0 * moe


if __name__ == "__main__":
    B, N, D = 2, 16, 64          # batch, tokens, embed dim
    num_heads = 4                # head_dim = 16
    num_experts = 4
    Hm = 4 * D                   # expert hidden dim (mlp_ratio = 4)

    key = jax.random.PRNGKey(0)
    keys = jax.random.split(key, 8)

    def init(k, shape, scale=0.05):
        return (jax.random.normal(k, shape, jnp.float32) * scale).astype(jnp.float32)

    raw = dict(
        ln1_g=jnp.ones((1, D), jnp.float32),
        ln1_b=jnp.zeros((1, D), jnp.float32),
        w_qkv=init(keys[0], (D, 3 * D)),            # qkv_bias=False
        w_proj=init(keys[1], (D, D)),
        b_proj=jnp.zeros((1, D), jnp.float32),
        ln2_g=jnp.ones((1, D), jnp.float32),
        ln2_b=jnp.zeros((1, D), jnp.float32),
        w_gate=init(keys[2], (D, num_experts)),
        w1=init(keys[3], (num_experts, D, Hm)),
        b1=jnp.zeros((num_experts, 1, Hm), jnp.float32),
        w2=init(keys[4], (num_experts, Hm, D)),
        b2=jnp.zeros((num_experts, 1, D), jnp.float32),
    )

    x = jax.random.normal(keys[5], (B, N, D), jnp.float32)

    out, total_aux, bal, zloss = block_moe_forward(
        x, raw, num_heads=num_heads, num_experts=num_experts)
    jax.block_until_ready(out)
    jax.block_until_ready(total_aux)
    assert out.shape == (B, N, D)

    ref = _reference_forward(x, raw, num_heads, num_experts)
    assert jnp.allclose(out, ref, atol=5e-2, rtol=5e-2), (
        float(jnp.max(jnp.abs(out - ref))))

    print("KERNEL_OK")
</pallas_src>

<mosaic_0001>
module attributes {stable_mosaic.version = 11 : i64} {
  func.func @block_moe_kernel(%arg0: i32, %arg1: i32, %arg2: memref<2x16x64xf32, #tpu.memory_space<vmem>>, %arg3: memref<1x64xf32, #tpu.memory_space<vmem>>, %arg4: memref<1x64xf32, #tpu.memory_space<vmem>>, %arg5: memref<64x192xbf16, #tpu.memory_space<vmem>>, %arg6: memref<64x64xbf16, #tpu.memory_space<vmem>>, %arg7: memref<1x64xf32, #tpu.memory_space<vmem>>, %arg8: memref<1x64xf32, #tpu.memory_space<vmem>>, %arg9: memref<1x64xf32, #tpu.memory_space<vmem>>, %arg10: memref<64x128xbf16, #tpu.memory_space<vmem>>, %arg11: memref<4x64x256xbf16, #tpu.memory_space<vmem>>, %arg12: memref<4x1x256xf32, #tpu.memory_space<vmem>>, %arg13: memref<4x256x64xbf16, #tpu.memory_space<vmem>>, %arg14: memref<4x1x64xf32, #tpu.memory_space<vmem>>, %arg15: memref<2x16x64xf32, #tpu.memory_space<vmem>>, %arg16: memref<2x16x128xf32, #tpu.memory_space<vmem>>, %arg17: memref<32x64xbf16, #tpu.memory_space<vmem>>, %arg18: memref<32x128xf32, #tpu.memory_space<vmem>>, %arg19: memref<32x64xf32, #tpu.memory_space<vmem>>, %arg20: memref<32x64xf32, #tpu.memory_space<vmem>>) attributes {dimension_semantics = [#tpu.dimension_semantics<parallel>, #tpu.dimension_semantics<arbitrary>], iteration_bounds = array<i64: 1, 4>, scalar_prefetch = 0 : i64, scratch_operands = 4 : i64, tpu.core_type = #tpu.core_type<tc>, window_params = [{transform_indices = @transform_0, window_bounds = array<i64: 2, 16, 64>}, {pipeline_mode = #tpu.pipeline_mode<synchronous>, transform_indices = @transform_1, window_bounds = array<i64: 1, 64>}, {pipeline_mode = #tpu.pipeline_mode<synchronous>, transform_indices = @transform_2, window_bounds = array<i64: 1, 64>}, {pipeline_mode = #tpu.pipeline_mode<synchronous>, transform_indices = @transform_3, window_bounds = array<i64: 64, 192>}, {pipeline_mode = #tpu.pipeline_mode<synchronous>, transform_indices = @transform_4, window_bounds = array<i64: 64, 64>}, {pipeline_mode = #tpu.pipeline_mode<synchronous>, transform_indices = @transform_5, window_bounds = array<i64: 1, 64>}, {pipeline_mode = #tpu.pipeline_mode<synchronous>, transform_indices = @transform_6, window_bounds = array<i64: 1, 64>}, {pipeline_mode = #tpu.pipeline_mode<synchronous>, transform_indices = @transform_7, window_bounds = array<i64: 1, 64>}, {pipeline_mode = #tpu.pipeline_mode<synchronous>, transform_indices = @transform_8, window_bounds = array<i64: 64, 128>}, {pipeline_mode = #tpu.pipeline_mode<synchronous>, transform_indices = @transform_9, window_bounds = array<i64: 4, 64, 256>}, {pipeline_mode = #tpu.pipeline_mode<synchronous>, transform_indices = @transform_10, window_bounds = array<i64: 4, 1, 256>}, {pipeline_mode = #tpu.pipeline_mode<synchronous>, transform_indices = @transform_11, window_bounds = array<i64: 4, 256, 64>}, {pipeline_mode = #tpu.pipeline_mode<synchronous>, transform_indices = @transform_12, window_bounds = array<i64: 4, 1, 64>}, {transform_indices = @transform_13, window_bounds = array<i64: 2, 16, 64>}, {transform_indices = @transform_14, window_bounds = array<i64: 2, 16, 128>}]} {
    %c0_i32 = arith.constant 0 : i32
    %0 = arith.cmpi eq, %arg1, %c0_i32 : i32
    %1 = arith.extui %0 : i1 to i32
    %c0_i32_0 = arith.constant 0 : i32
    %2 = arith.cmpi ne, %1, %c0_i32_0 : i32
    scf.if %2 {
      %c0_24 = arith.constant 0 : index
      %c0_25 = arith.constant 0 : index
      %c0_26 = arith.constant 0 : index
      %52 = vector.load %arg2[%c0_24, %c0_25, %c0_26] : memref<2x16x64xf32, #tpu.memory_space<vmem>>, vector<2x16x64xf32>
      %53 = vector.shape_cast %52 : vector<2x16x64xf32> to vector<32x64xf32>
      %c0_27 = arith.constant 0 : index
      %c0_28 = arith.constant 0 : index
      %54 = vector.load %arg3[%c0_27, %c0_28] : memref<1x64xf32, #tpu.memory_space<vmem>>, vector<1x64xf32>
      %c0_29 = arith.constant 0 : index
      %c0_30 = arith.constant 0 : index
      %55 = vector.load %arg4[%c0_29, %c0_30] : memref<1x64xf32, #tpu.memory_space<vmem>>, vector<1x64xf32>
      %cst_31 = arith.constant dense<0.000000e+00> : vector<32xf32>
      %56 = vector.multi_reduction <add>, %53, %cst_31 [1] : vector<32x64xf32> to vector<32xf32>
      %57 = vector.shape_cast %56 : vector<32xf32> to vector<32x1xf32>
      %cst_32 = arith.constant 6.400000e+01 : f32
      %58 = vector.broadcast %cst_32 : f32 to vector<32x1xf32>
      %59 = arith.divf %57, %58 : vector<32x1xf32>
      %60 = vector.broadcast %59 : vector<32x1xf32> to vector<32x64xf32>
      %61 = arith.subf %53, %60 : vector<32x64xf32>
      %62 = arith.mulf %61, %61 : vector<32x64xf32>
      %cst_33 = arith.constant dense<0.000000e+00> : vector<32xf32>
      %63 = vector.multi_reduction <add>, %62, %cst_33 [1] : vector<32x64xf32> to vector<32xf32>
      %64 = vector.shape_cast %63 : vector<32xf32> to vector<32x1xf32>
      %cst_34 = arith.constant 6.400000e+01 : f32
      %65 = vector.broadcast %cst_34 : f32 to vector<32x1xf32>
      %66 = arith.divf %64, %65 : vector<32x1xf32>
      %67 = vector.broadcast %59 : vector<32x1xf32> to vector<32x64xf32>
      %68 = arith.subf %53, %67 : vector<32x64xf32>
      %cst_35 = arith.constant 9.99999974E-6 : f32
      %69 = vector.broadcast %cst_35 : f32 to vector<32x1xf32>
      %70 = arith.addf %66, %69 : vector<32x1xf32>
      %71 = math.rsqrt %70 : vector<32x1xf32>
      %72 = vector.broadcast %71 : vector<32x1xf32> to vector<32x64xf32>
      %73 = arith.mulf %68, %72 : vector<32x64xf32>
      %74 = vector.broadcast %54 : vector<1x64xf32> to vector<32x64xf32>
      %75 = arith.mulf %73, %74 : vector<32x64xf32>
      %76 = vector.broadcast %55 : vector<1x64xf32> to vector<32x64xf32>
      %77 = arith.addf %75, %76 : vector<32x64xf32>
      %78 = arith.truncf %77 : vector<32x64xf32> to vector<32x64xbf16>
      %c0_36 = arith.constant 0 : index
      %c0_37 = arith.constant 0 : index
      %79 = vector.load %arg5[%c0_36, %c0_37] : memref<64x192xbf16, #tpu.memory_space<vmem>>, vector<64x192xbf16>
      %cst_38 = arith.constant dense<0.000000e+00> : vector<32x192xf32>
      %80 = tpu.matmul %78, %79, %cst_38 {dimension_numbers = #tpu.dot_dimension_numbers<[1], [0], [0], [1], [0, 0, 1, 1], [], []>} : vector<32x64xbf16>, vector<64x192xbf16>, vector<32x192xf32> -> vector<32x192xf32>
      %81 = arith.truncf %80 : vector<32x192xf32> to vector<32x192xbf16>
      %82 = vector.extract_strided_slice %81 {offsets = [0, 0], sizes = [32, 16], strides = [1, 1]} : vector<32x192xbf16> to vector<32x16xbf16>
      %83 = vector.shape_cast %82 : vector<32x16xbf16> to vector<2x16x16xbf16>
      %84 = vector.extract_strided_slice %81 {offsets = [0, 64], sizes = [32, 16], strides = [1, 1]} : vector<32x192xbf16> to vector<32x16xbf16>
      %85 = vector.shape_cast %84 : vector<32x16xbf16> to vector<2x16x16xbf16>
      %86 = vector.extract_strided_slice %81 {offsets = [0, 128], sizes = [32, 16], strides = [1, 1]} : vector<32x192xbf16> to vector<32x16xbf16>
      %87 = vector.shape_cast %86 : vector<32x16xbf16> to vector<2x16x16xbf16>
      "tpu.trace_start"() <{level = 10 : i32, message = "bqd,bkd->bqk"}> : () -> ()
      %cst_39 = arith.constant dense<0.000000e+00> : vector<2x16x16xf32>
      %88 = tpu.matmul %83, %85, %cst_39 {dimension_numbers = #tpu.dot_dimension_numbers<[2], [2], [1], [1], [0, 0, 0, 1, 1, 1], [0], [0]>} : vector<2x16x16xbf16>, vector<2x16x16xbf16>, vector<2x16x16xf32> -> vector<2x16x16xf32>
      "tpu.trace_stop"() : () -> ()
      %cst_40 = arith.constant dense<0xFF800000> : vector<2x16xf32>
      %89 = vector.multi_reduction <maximumf>, %88, %cst_40 [2] : vector<2x16x16xf32> to vector<2x16xf32>
      %90 = vector.shape_cast %89 : vector<2x16xf32> to vector<2x16x1xf32>
      %91 = vector.broadcast %90 : vector<2x16x1xf32> to vector<2x16x16xf32>
      %92 = arith.subf %88, %91 : vector<2x16x16xf32>
      %93 = math.exp %92 : vector<2x16x16xf32>
      %cst_41 = arith.constant dense<0.000000e+00> : vector<2x16xf32>
      %94 = vector.multi_reduction <add>, %93, %cst_41 [2] : vector<2x16x16xf32> to vector<2x16xf32>
      %95 = vector.shape_cast %94 : vector<2x16xf32> to vector<2x16x1xf32>
      %96 = tpu.reciprocal %95 {approx = true} : vector<2x16x1xf32> -> vector<2x16x1xf32>
      %97 = vector.broadcast %96 : vector<2x16x1xf32> to vector<2x16x16xf32>
      %98 = arith.mulf %93, %97 : vector<2x16x16xf32>
      %99 = arith.truncf %98 : vector<2x16x16xf32> to vector<2x16x16xbf16>
      "tpu.trace_start"() <{level = 10 : i32, message = "bqk,bkd->bqd"}> : () -> ()
      %cst_42 = arith.constant dense<0.000000e+00> : vector<2x16x16xf32>
      %100 = tpu.matmul %99, %87, %cst_42 {dimension_numbers = #tpu.dot_dimension_numbers<[2], [1], [1], [2], [0, 0, 0, 1, 1, 2], [0], [0]>} : vector<2x16x16xbf16>, vector<2x16x16xbf16>, vector<2x16x16xf32> -> vector<2x16x16xf32>
      "tpu.trace_stop"() : () -> ()
      %101 = vector.shape_cast %100 : vector<2x16x16xf32> to vector<32x16xf32>
      %c0_43 = arith.constant 0 : index
      %c0_44 = arith.constant 0 : index
      %102 = vector.load %arg20[%c0_43, %c0_44] : memref<32x64xf32, #tpu.memory_space<vmem>>, vector<32x16xf32>
      tpu.vector_store %arg20[%c0_43, %c0_44], %101 {strides = array<i32>} : memref<32x64xf32, #tpu.memory_space<vmem>>, vector<32x16xf32>,
      %103 = vector.extract_strided_slice %81 {offsets = [0, 16], sizes = [32, 16], strides = [1, 1]} : vector<32x192xbf16> to vector<32x16xbf16>
      %104 = vector.shape_cast %103 : vector<32x16xbf16> to vector<2x16x16xbf16>
      %105 = vector.extract_strided_slice %81 {offsets = [0, 80], sizes = [32, 16], strides = [1, 1]} : vector<32x192xbf16> to vector<32x16xbf16>
      %106 = vector.shape_cast %105 : vector<32x16xbf16> to vector<2x16x16xbf16>
      %107 = vector.extract_strided_slice %81 {offsets = [0, 144], sizes = [32, 16], strides = [1, 1]} : vector<32x192xbf16> to vector<32x16xbf16>
      %108 = vector.shape_cast %107 : vector<32x16xbf16> to vector<2x16x16xbf16>
      "tpu.trace_start"() <{level = 10 : i32, message = "bqd,bkd->bqk"}> : () -> ()
      %cst_45 = arith.constant dense<0.000000e+00> : vector<2x16x16xf32>
      %109 = tpu.matmul %104, %106, %cst_45 {dimension_numbers = #tpu.dot_dimension_numbers<[2], [2], [1], [1], [0, 0, 0, 1, 1, 1], [0], [0]>} : vector<2x16x16xbf16>, vector<2x16x16xbf16>, vector<2x16x16xf32> -> vector<2x16x16xf32>
      "tpu.trace_stop"() : () -> ()
      %cst_46 = arith.constant dense<0xFF800000> : vector<2x16xf32>
      %110 = vector.multi_reduction <maximumf>, %109, %cst_46 [2] : vector<2x16x16xf32> to vector<2x16xf32>
      %111 = vector.shape_cast %110 : vector<2x16xf32> to vector<2x16x1xf32>
      %112 = vector.broadcast %111 : vector<2x16x1xf32> to vector<2x16x16xf32>
      %113 = arith.subf %109, %112 : vector<2x16x16xf32>
      %114 = math.exp %113 : vector<2x16x16xf32>
      %cst_47 = arith.constant dense<0.000000e+00> : vector<2x16xf32>
      %115 = vector.multi_reduction <add>, %114, %cst_47 [2] : vector<2x16x16xf32> to vector<2x16xf32>
      %116 = vector.shape_cast %115 : vector<2x16xf32> to vector<2x16x1xf32>
      %117 = tpu.reciprocal %116 {approx = true} : vector<2x16x1xf32> -> vector<2x16x1xf32>
      %118 = vector.broadcast %117 : vector<2x16x1xf32> to vector<2x16x16xf32>
      %119 = arith.mulf %114, %118 : vector<2x16x16xf32>
      %120 = arith.truncf %119 : vector<2x16x16xf32> to vector<2x16x16xbf16>
      "tpu.trace_start"() <{level = 10 : i32, message = "bqk,bkd->bqd"}> : () -> ()
      %cst_48 = arith.constant dense<0.000000e+00> : vector<2x16x16xf32>
      %121 = tpu.matmul %120, %108, %cst_48 {dimension_numbers = #tpu.dot_dimension_numbers<[2], [1], [1], [2], [0, 0, 0, 1, 1, 2], [0], [0]>} : vector<2x16x16xbf16>, vector<2x16x16xbf16>, vector<2x16x16xf32> -> vector<2x16x16xf32>
      "tpu.trace_stop"() : () -> ()
      %122 = vector.shape_cast %121 : vector<2x16x16xf32> to vector<32x16xf32>
      %c0_49 = arith.constant 0 : index
      %c16 = arith.constant 16 : index
      %123 = vector.load %arg20[%c0_49, %c16] : memref<32x64xf32, #tpu.memory_space<vmem>>, vector<32x16xf32>
      tpu.vector_store %arg20[%c0_49, %c16], %122 {strides = array<i32>} : memref<32x64xf32, #tpu.memory_space<vmem>>, vector<32x16xf32>,
      %124 = vector.extract_strided_slice %81 {offsets = [0, 32], sizes = [32, 16], strides = [1, 1]} : vector<32x192xbf16> to vector<32x16xbf16>
      %125 = vector.shape_cast %124 : vector<32x16xbf16> to vector<2x16x16xbf16>
      %126 = vector.extract_strided_slice %81 {offsets = [0, 96], sizes = [32, 16], strides = [1, 1]} : vector<32x192xbf16> to vector<32x16xbf16>
      %127 = vector.shape_cast %126 : vector<32x16xbf16> to vector<2x16x16xbf16>
      %128 = vector.extract_strided_slice %81 {offsets = [0, 160], sizes = [32, 16], strides = [1, 1]} : vector<32x192xbf16> to vector<32x16xbf16>
      %129 = vector.shape_cast %128 : vector<32x16xbf16> to vector<2x16x16xbf16>
      "tpu.trace_start"() <{level = 10 : i32, message = "bqd,bkd->bqk"}> : () -> ()
      %cst_50 = arith.constant dense<0.000000e+00> : vector<2x16x16xf32>
      %130 = tpu.matmul %125, %127, %cst_50 {dimension_numbers = #tpu.dot_dimension_numbers<[2], [2], [1], [1], [0, 0, 0, 1, 1, 1], [0], [0]>} : vector<2x16x16xbf16>, vector<2x16x16xbf16>, vector<2x16x16xf32> -> vector<2x16x16xf32>
      "tpu.trace_stop"() : () -> ()
      %cst_51 = arith.constant dense<0xFF800000> : vector<2x16xf32>
      %131 = vector.multi_reduction <maximumf>, %130, %cst_51 [2] : vector<2x16x16xf32> to vector<2x16xf32>
      %132 = vector.shape_cast %131 : vector<2x16xf32> to vector<2x16x1xf32>
      %133 = vector.broadcast %132 : vector<2x16x1xf32> to vector<2x16x16xf32>
      %134 = arith.subf %130, %133 : vector<2x16x16xf32>
      %135 = math.exp %134 : vector<2x16x16xf32>
      %cst_52 = arith.constant dense<0.000000e+00> : vector<2x16xf32>
      %136 = vector.multi_reduction <add>, %135, %cst_52 [2] : vector<2x16x16xf32> to vector<2x16xf32>
      %137 = vector.shape_cast %136 : vector<2x16xf32> to vector<2x16x1xf32>
      %138 = tpu.reciprocal %137 {approx = true} : vector<2x16x1xf32> -> vector<2x16x1xf32>
      %139 = vector.broadcast %138 : vector<2x16x1xf32> to vector<2x16x16xf32>
      %140 = arith.mulf %135, %139 : vector<2x16x16xf32>
      %141 = arith.truncf %140 : vector<2x16x16xf32> to vector<2x16x16xbf16>
      "tpu.trace_start"() <{level = 10 : i32, message = "bqk,bkd->bqd"}> : () -> ()
      %cst_53 = arith.constant dense<0.000000e+00> : vector<2x16x16xf32>
      %142 = tpu.matmul %141, %129, %cst_53 {dimension_numbers = #tpu.dot_dimension_numbers<[2], [1], [1], [2], [0, 0, 0, 1, 1, 2], [0], [0]>} : vector<2x16x16xbf16>, vector<2x16x16xbf16>, vector<2x16x16xf32> -> vector<2x16x16xf32>
      "tpu.trace_stop"() : () -> ()
      %143 = vector.shape_cast %142 : vector<2x16x16xf32> to vector<32x16xf32>
      %c0_54 = arith.constant 0 : index
      %c32 = arith.constant 32 : index
      %144 = vector.load %arg20[%c0_54, %c32] : memref<32x64xf32, #tpu.memory_space<vmem>>, vector<32x16xf32>
      tpu.vector_store %arg20[%c0_54, %c32], %143 {strides = array<i32>} : memref<32x64xf32, #tpu.memory_space<vmem>>, vector<32x16xf32>,
      %145 = vector.extract_strided_slice %81 {offsets = [0, 48], sizes = [32, 16], strides = [1, 1]} : vector<32x192xbf16> to vector<32x16xbf16>
      %146 = vector.shape_cast %145 : vector<32x16xbf16> to vector<2x16x16xbf16>
      %147 = vector.extract_strided_slice %81 {offsets = [0, 112], sizes = [32, 16], strides = [1, 1]} : vector<32x192xbf16> to vector<32x16xbf16>
      %148 = vector.shape_cast %147 : vector<32x16xbf16> to vector<2x16x16xbf16>
      %149 = vector.extract_strided_slice %81 {offsets = [0, 176], sizes = [32, 16], strides = [1, 1]} : vector<32x192xbf16> to vector<32x16xbf16>
      %150 = vector.shape_cast %149 : vector<32x16xbf16> to vector<2x16x16xbf16>
      "tpu.trace_start"() <{level = 10 : i32, message = "bqd,bkd->bqk"}> : () -> ()
      %cst_55 = arith.constant dense<0.000000e+00> : vector<2x16x16xf32>
      %151 = tpu.matmul %146, %148, %cst_55 {dimension_numbers = #tpu.dot_dimension_numbers<[2], [2], [1], [1], [0, 0, 0, 1, 1, 1], [0], [0]>} : vector<2x16x16xbf16>, vector<2x16x16xbf16>, vector<2x16x16xf32> -> vector<2x16x16xf32>
      "tpu.trace_stop"() : () -> ()
      %cst_56 = arith.constant dense<0xFF800000> : vector<2x16xf32>
      %152 = vector.multi_reduction <maximumf>, %151, %cst_56 [2] : vector<2x16x16xf32> to vector<2x16xf32>
      %153 = vector.shape_cast %152 : vector<2x16xf32> to vector<2x16x1xf32>
      %154 = vector.broadcast %153 : vector<2x16x1xf32> to vector<2x16x16xf32>
      %155 = arith.subf %151, %154 : vector<2x16x16xf32>
      %156 = math.exp %155 : vector<2x16x16xf32>
      %cst_57 = arith.constant dense<0.000000e+00> : vector<2x16xf32>
      %157 = vector.multi_reduction <add>, %156, %cst_57 [2] : vector<2x16x16xf32> to vector<2x16xf32>
      %158 = vector.shape_cast %157 : vector<2x16xf32> to vector<2x16x1xf32>
      %159 = tpu.reciprocal %158 {approx = true} : vector<2x16x1xf32> -> vector<2x16x1xf32>
      %160 = vector.broadcast %159 : vector<2x16x1xf32> to vector<2x16x16xf32>
      %161 = arith.mulf %156, %160 : vector<2x16x16xf32>
      %162 = arith.truncf %161 : vector<2x16x16xf32> to vector<2x16x16xbf16>
      "tpu.trace_start"() <{level = 10 : i32, message = "bqk,bkd->bqd"}> : () -> ()
      %cst_58 = arith.constant dense<0.000000e+00> : vector<2x16x16xf32>
      %163 = tpu.matmul %162, %150, %cst_58 {dimension_numbers = #tpu.dot_dimension_numbers<[2], [1], [1], [2], [0, 0, 0, 1, 1, 2], [0], [0]>} : vector<2x16x16xbf16>, vector<2x16x16xbf16>, vector<2x16x16xf32> -> vector<2x16x16xf32>
      "tpu.trace_stop"() : () -> ()
      %164 = vector.shape_cast %163 : vector<2x16x16xf32> to vector<32x16xf32>
      %c0_59 = arith.constant 0 : index
      %c48 = arith.constant 48 : index
      %165 = vector.load %arg20[%c0_59, %c48] : memref<32x64xf32, #tpu.memory_space<vmem>>, vector<32x16xf32>
      tpu.vector_store %arg20[%c0_59, %c48], %164 {strides = array<i32>} : memref<32x64xf32, #tpu.memory_space<vmem>>, vector<32x16xf32>,
      %c0_60 = arith.constant 0 : index
      %c0_61 = arith.constant 0 : index
      %166 = vector.load %arg20[%c0_60, %c0_61] : memref<32x64xf32, #tpu.memory_space<vmem>>, vector<32x64xf32>
      %167 = arith.truncf %166 : vector<32x64xf32> to vector<32x64xbf16>
      %c0_62 = arith.constant 0 : index
      %c0_63 = arith.constant 0 : index
      %168 = vector.load %arg6[%c0_62, %c0_63] : memref<64x64xbf16, #tpu.memory_space<vmem>>, vector<64x64xbf16>
      %cst_64 = arith.constant dense<0.000000e+00> : vector<32x64xf32>
      %169 = tpu.matmul %167, %168, %cst_64 {dimension_numbers = #tpu.dot_dimension_numbers<[1], [0], [0], [1], [0, 0, 1, 1], [], []>} : vector<32x64xbf16>, vector<64x64xbf16>, vector<32x64xf32> -> vector<32x64xf32>
      %c0_65 = arith.constant 0 : index
      %c0_66 = arith.constant 0 : index
      %170 = vector.load %arg7[%c0_65, %c0_66] : memref<1x64xf32, #tpu.memory_space<vmem>>, vector<1x64xf32>
      %171 = vector.broadcast %170 : vector<1x64xf32> to vector<32x64xf32>
      %172 = arith.addf %169, %171 : vector<32x64xf32>
      %173 = arith.addf %53, %172 : vector<32x64xf32>
      %c0_67 = arith.constant 0 : index
      %c0_68 = arith.constant 0 : index
      %174 = vector.load %arg8[%c0_67, %c0_68] : memref<1x64xf32, #tpu.memory_space<vmem>>, vector<1x64xf32>
      %c0_69 = arith.constant 0 : index
      %c0_70 = arith.constant 0 : index
      %175 = vector.load %arg9[%c0_69, %c0_70] : memref<1x64xf32, #tpu.memory_space<vmem>>, vector<1x64xf32>
      %cst_71 = arith.constant dense<0.000000e+00> : vector<32xf32>
      %176 = vector.multi_reduction <add>, %173, %cst_71 [1] : vector<32x64xf32> to vector<32xf32>
      %177 = vector.shape_cast %176 : vector<32xf32> to vector<32x1xf32>
      %cst_72 = arith.constant 6.400000e+01 : f32
      %178 = vector.broadcast %cst_72 : f32 to vector<32x1xf32>
      %179 = arith.divf %177, %178 : vector<32x1xf32>
      %180 = vector.broadcast %179 : vector<32x1xf32> to vector<32x64xf32>
      %181 = arith.subf %173, %180 : vector<32x64xf32>
      %182 = arith.mulf %181, %181 : vector<32x64xf32>
      %cst_73 = arith.constant dense<0.000000e+00> : vector<32xf32>
      %183 = vector.multi_reduction <add>, %182, %cst_73 [1] : vector<32x64xf32> to vector<32xf32>
      %184 = vector.shape_cast %183 : vector<32xf32> to vector<32x1xf32>
      %cst_74 = arith.constant 6.400000e+01 : f32
      %185 = vector.broadcast %cst_74 : f32 to vector<32x1xf32>
      %186 = arith.divf %184, %185 : vector<32x1xf32>
      %187 = vector.broadcast %179 : vector<32x1xf32> to vector<32x64xf32>
      %188 = arith.subf %173, %187 : vector<32x64xf32>
      %cst_75 = arith.constant 9.99999974E-6 : f32
      %189 = vector.broadcast %cst_75 : f32 to vector<32x1xf32>
      %190 = arith.addf %186, %189 : vector<32x1xf32>
      %191 = math.rsqrt %190 : vector<32x1xf32>
      %192 = vector.broadcast %191 : vector<32x1xf32> to vector<32x64xf32>
      %193 = arith.mulf %188, %192 : vector<32x64xf32>
      %194 = vector.broadcast %174 : vector<1x64xf32> to vector<32x64xf32>
      %195 = arith.mulf %193, %194 : vector<32x64xf32>
      %196 = vector.broadcast %175 : vector<1x64xf32> to vector<32x64xf32>
      %197 = arith.addf %195, %196 : vector<32x64xf32>
      %198 = arith.truncf %197 : vector<32x64xf32> to vector<32x64xbf16>
      %c0_76 = arith.constant 0 : index
      %c0_77 = arith.constant 0 : index
      %199 = vector.load %arg17[%c0_76, %c0_77] : memref<32x64xbf16, #tpu.memory_space<vmem>>, vector<32x64xbf16>
      tpu.vector_store %arg17[%c0_76, %c0_77], %198 {strides = array<i32>} : memref<32x64xbf16, #tpu.memory_space<vmem>>, vector<32x64xbf16>,
      %c0_78 = arith.constant 0 : index
      %c0_79 = arith.constant 0 : index
      %200 = vector.load %arg10[%c0_78, %c0_79] : memref<64x128xbf16, #tpu.memory_space<vmem>>, vector<64x128xbf16>
      %cst_80 = arith.constant dense<0.000000e+00> : vector<32x128xf32>
      %201 = tpu.matmul %198, %200, %cst_80 {dimension_numbers = #tpu.dot_dimension_numbers<[1], [0], [0], [1], [0, 0, 1, 1], [], []>} : vector<32x64xbf16>, vector<64x128xbf16>, vector<32x128xf32> -> vector<32x128xf32>
      %202 = vector.shape_cast %201 : vector<32x128xf32> to vector<2x16x128xf32>
      %c0_81 = arith.constant 0 : index
      %c0_82 = arith.constant 0 : index
      %c0_83 = arith.constant 0 : index
      %203 = vector.load %arg16[%c0_81, %c0_82, %c0_83] : memref<2x16x128xf32, #tpu.memory_space<vmem>>, vector<2x16x128xf32>
      tpu.vector_store %arg16[%c0_81, %c0_82, %c0_83], %202 {strides = array<i32>} : memref<2x16x128xf32, #tpu.memory_space<vmem>>, vector<2x16x128xf32>,
      %204 = tpu.iota {dimensions = array<i32: 1>} : vector<32x128xi32>
      %c4_i32 = arith.constant 4 : i32
      %205 = vector.broadcast %c4_i32 : i32 to vector<32x128xi32>
      %206 = arith.cmpi slt, %204, %205 : vector<32x128xi32>
      %cst_84 = arith.constant -1.000000e+30 : f32
      %207 = vector.broadcast %cst_84 : f32 to vector<32x128xf32>
      %208 = arith.select %206, %201, %207 : vector<32x128xi1>, vector<32x128xf32>
      %cst_85 = arith.constant dense<0xFF800000> : vector<32xf32>
      %209 = vector.multi_reduction <maximumf>, %208, %cst_85 [1] : vector<32x128xf32> to vector<32xf32>
      %210 = vector.shape_cast %209 : vector<32xf32> to vector<32x1xf32>
      %211 = vector.broadcast %210 : vector<32x1xf32> to vector<32x128xf32>
      %212 = arith.subf %208, %211 : vector<32x128xf32>
      %213 = math.exp %212 : vector<32x128xf32>
      %cst_86 = arith.constant dense<0.000000e+00> : vector<32xf32>
      %214 = vector.multi_reduction <add>, %213, %cst_86 [1] : vector<32x128xf32> to vector<32xf32>
      %215 = vector.shape_cast %214 : vector<32xf32> to vector<32x1xf32>
      %216 = vector.broadcast %215 : vector<32x1xf32> to vector<32x128xf32>
      %217 = arith.divf %213, %216 : vector<32x128xf32>
      %c0_87 = arith.constant 0 : index
      %c0_88 = arith.constant 0 : index
      %218 = vector.load %arg18[%c0_87, %c0_88] : memref<32x128xf32, #tpu.memory_space<vmem>>, vector<32x128xf32>
      tpu.vector_store %arg18[%c0_87, %c0_88], %217 {strides = array<i32>} : memref<32x128xf32, #tpu.memory_space<vmem>>, vector<32x128xf32>,
      %cst_89 = arith.constant 0.000000e+00 : f32
      %219 = vector.broadcast %cst_89 : f32 to vector<32x64xf32>
      %c0_90 = arith.constant 0 : index
      %c0_91 = arith.constant 0 : index
      %220 = vector.load %arg19[%c0_90, %c0_91] : memref<32x64xf32, #tpu.memory_space<vmem>>, vector<32x64xf32>
      tpu.vector_store %arg19[%c0_90, %c0_91], %219 {strides = array<i32>} : memref<32x64xf32, #tpu.memory_space<vmem>>, vector<32x64xf32>,
    } else {
    }
    %c0 = arith.constant 0 : index
    %c0_1 = arith.constant 0 : index
    %3 = vector.load %arg17[%c0, %c0_1] : memref<32x64xbf16, #tpu.memory_space<vmem>>, vector<32x64xbf16>
    %4 = arith.index_cast %arg1 : i32 to index
    %c0_2 = arith.constant 0 : index
    %c0_3 = arith.constant 0 : index
    %5 = vector.load %arg11[%4, %c0_2, %c0_3] : memref<4x64x256xbf16, #tpu.memory_space<vmem>>, vector<1x64x256xbf16>
    %6 = vector.shape_cast %5 : vector<1x64x256xbf16> to vector<64x256xbf16>
    %cst = arith.constant dense<0.000000e+00> : vector<32x256xf32>
    %7 = tpu.matmul %3, %6, %cst {dimension_numbers = #tpu.dot_dimension_numbers<[1], [0], [0], [1], [0, 0, 1, 1], [], []>} : vector<32x64xbf16>, vector<64x256xbf16>, vector<32x256xf32> -> vector<32x256xf32>
    %8 = arith.index_cast %arg1 : i32 to index
    %c0_4 = arith.constant 0 : index
    %c0_5 = arith.constant 0 : index
    %9 = vector.load %arg12[%8, %c0_4, %c0_5] : memref<4x1x256xf32, #tpu.memory_space<vmem>>, vector<1x1x256xf32>
    %10 = vector.shape_cast %9 : vector<1x1x256xf32> to vector<1x256xf32>
    %11 = vector.broadcast %10 : vector<1x256xf32> to vector<32x256xf32>
    %12 = arith.addf %7, %11 : vector<32x256xf32>
    %13 = arith.truncf %12 : vector<32x256xf32> to vector<32x256xbf16>
    %cst_6 = arith.constant 5.000000e-01 : bf16
    %14 = vector.broadcast %cst_6 : bf16 to vector<32x256xbf16>
    %15 = arith.mulf %14, %13 : vector<32x256xbf16>
    %cst_7 = arith.constant 4.467770e-02 : bf16
    %16 = vector.broadcast %cst_7 : bf16 to vector<32x256xbf16>
    %17 = arith.mulf %16, %13 : vector<32x256xbf16>
    %18 = arith.mulf %17, %13 : vector<32x256xbf16>
    %19 = arith.mulf %18, %13 : vector<32x256xbf16>
    %20 = arith.addf %13, %19 : vector<32x256xbf16>
    %cst_8 = arith.constant 7.968750e-01 : bf16
    %21 = vector.broadcast %cst_8 : bf16 to vector<32x256xbf16>
    %22 = arith.mulf %21, %20 : vector<32x256xbf16>
    %23 = math.tanh %22 : vector<32x256xbf16>
    %cst_9 = arith.constant 1.000000e+00 : bf16
    %24 = vector.broadcast %cst_9 : bf16 to vector<32x256xbf16>
    %25 = arith.addf %24, %23 : vector<32x256xbf16>
    %26 = arith.mulf %15, %25 : vector<32x256xbf16>
    %27 = arith.index_cast %arg1 : i32 to index
    %c0_10 = arith.constant 0 : index
    %c0_11 = arith.constant 0 : index
    %28 = vector.load %arg13[%27, %c0_10, %c0_11] : memref<4x256x64xbf16, #tpu.memory_space<vmem>>, vector<1x256x64xbf16>
    %29 = vector.shape_cast %28 : vector<1x256x64xbf16> to vector<256x64xbf16>
    %cst_12 = arith.constant dense<0.000000e+00> : vector<32x64xf32>
    %30 = tpu.matmul %26, %29, %cst_12 {dimension_numbers = #tpu.dot_dimension_numbers<[1], [0], [0], [1], [0, 0, 1, 1], [], []>} : vector<32x256xbf16>, vector<256x64xbf16>, vector<32x64xf32> -> vector<32x64xf32>
    %31 = arith.index_cast %arg1 : i32 to index
    %c0_13 = arith.constant 0 : index
    %c0_14 = arith.constant 0 : index
    %32 = vector.load %arg14[%31, %c0_13, %c0_14] : memref<4x1x64xf32, #tpu.memory_space<vmem>>, vector<1x1x64xf32>
    %33 = vector.shape_cast %32 : vector<1x1x64xf32> to vector<1x64xf32>
    %34 = vector.broadcast %33 : vector<1x64xf32> to vector<32x64xf32>
    %35 = arith.addf %30, %34 : vector<32x64xf32>
    %36 = tpu.iota {dimensions = array<i32: 1>} : vector<32x128xi32>
    %37 = vector.broadcast %arg1 : i32 to vector<32x128xi32>
    %38 = arith.cmpi eq, %36, %37 : vector<32x128xi32>
    %c0_15 = arith.constant 0 : index
    %c0_16 = arith.constant 0 : index
    %39 = vector.load %arg18[%c0_15, %c0_16] : memref<32x128xf32, #tpu.memory_space<vmem>>, vector<32x128xf32>
    %cst_17 = arith.constant 0.000000e+00 : f32
    %40 = vector.broadcast %cst_17 : f32 to vector<32x128xf32>
    %41 = arith.select %38, %39, %40 : vector<32x128xi1>, vector<32x128xf32>
    %cst_18 = arith.constant dense<0.000000e+00> : vector<32xf32>
    %42 = vector.multi_reduction <add>, %41, %cst_18 [1] : vector<32x128xf32> to vector<32xf32>
    %43 = vector.shape_cast %42 : vector<32xf32> to vector<32x1xf32>
    %c0_19 = arith.constant 0 : index
    %c0_20 = arith.constant 0 : index
    %44 = vector.load %arg19[%c0_19, %c0_20] : memref<32x64xf32, #tpu.memory_space<vmem>>, vector<32x64xf32>
    %45 = vector.broadcast %43 : vector<32x1xf32> to vector<32x64xf32>
    %46 = arith.mulf %45, %35 : vector<32x64xf32>
    %47 = arith.addf %44, %46 : vector<32x64xf32>
    %c0_21 = arith.constant 0 : index
    %c0_22 = arith.constant 0 : index
    %48 = vector.load %arg19[%c0_21, %c0_22] : memref<32x64xf32, #tpu.memory_space<vmem>>, vector<32x64xf32>
    tpu.vector_store %arg19[%c0_21, %c0_22], %47 {strides = array<i32>} : memref<32x64xf32, #tpu.memory_space<vmem>>, vector<32x64xf32>,
    %c3_i32 = arith.constant 3 : i32
    %49 = arith.cmpi eq, %arg1, %c3_i32 : i32
    %50 = arith.extui %49 : i1 to i32
    %c0_i32_23 = arith.constant 0 : i32
    %51 = arith.cmpi ne, %50, %c0_i32_23 : i32
    scf.if %51 {
      %c0_24 = arith.constant 0 : index
      %c0_25 = arith.constant 0 : index
      %52 = vector.load %arg19[%c0_24, %c0_25] : memref<32x64xf32, #tpu.memory_space<vmem>>, vector<32x64xf32>
      %cst_26 = arith.constant 2.000000e+00 : f32
      %53 = vector.broadcast %cst_26 : f32 to vector<32x64xf32>
      %54 = arith.mulf %52, %53 : vector<32x64xf32>
      %55 = vector.shape_cast %54 : vector<32x64xf32> to vector<2x16x64xf32>
      %c0_27 = arith.constant 0 : index
      %c0_28 = arith.constant 0 : index
      %c0_29 = arith.constant 0 : index
      %56 = vector.load %arg15[%c0_27, %c0_28, %c0_29] : memref<2x16x64xf32, #tpu.memory_space<vmem>>, vector<2x16x64xf32>
      tpu.vector_store %arg15[%c0_27, %c0_28, %c0_29], %55 {strides = array<i32>} : memref<2x16x64xf32, #tpu.memory_space<vmem>>, vector<2x16x64xf32>,
    } else {
    }
    return
  }
  func.func @transform_0(%arg0: i32, %arg1: i32) -> (i32, i32, i32) {
    %c0_i32 = arith.constant 0 : i32
    %c0_i32_0 = arith.constant 0 : i32
    %c0_i32_1 = arith.constant 0 : i32
    return %arg0, %c0_i32, %c0_i32_0 : i32, i32, i32
  }
  func.func @transform_1(%arg0: i32, %arg1: i32) -> (i32, i32) {
    %c0_i32 = arith.constant 0 : i32
    %c0_i32_0 = arith.constant 0 : i32
    %c0_i32_1 = arith.constant 0 : i32
    return %c0_i32, %c0_i32_0 : i32, i32
  }
  func.func @transform_2(%arg0: i32, %arg1: i32) -> (i32, i32) {
    %c0_i32 = arith.constant 0 : i32
    %c0_i32_0 = arith.constant 0 : i32
    %c0_i32_1 = arith.constant 0 : i32
    return %c0_i32, %c0_i32_0 : i32, i32
  }
  func.func @transform_3(%arg0: i32, %arg1: i32) -> (i32, i32) {
    %c0_i32 = arith.constant 0 : i32
    %c0_i32_0 = arith.constant 0 : i32
    %c0_i32_1 = arith.constant 0 : i32
    return %c0_i32, %c0_i32_0 : i32, i32
  }
  func.func @transform_4(%arg0: i32, %arg1: i32) -> (i32, i32) {
    %c0_i32 = arith.constant 0 : i32
    %c0_i32_0 = arith.constant 0 : i32
    %c0_i32_1 = arith.constant 0 : i32
    return %c0_i32, %c0_i32_0 : i32, i32
  }
  func.func @transform_5(%arg0: i32, %arg1: i32) -> (i32, i32) {
    %c0_i32 = arith.constant 0 : i32
    %c0_i32_0 = arith.constant 0 : i32
    %c0_i32_1 = arith.constant 0 : i32
    return %c0_i32, %c0_i32_0 : i32, i32
  }
  func.func @transform_6(%arg0: i32, %arg1: i32) -> (i32, i32) {
    %c0_i32 = arith.constant 0 : i32
    %c0_i32_0 = arith.constant 0 : i32
    %c0_i32_1 = arith.constant 0 : i32
    return %c0_i32, %c0_i32_0 : i32, i32
  }
  func.func @transform_7(%arg0: i32, %arg1: i32) -> (i32, i32) {
    %c0_i32 = arith.constant 0 : i32
    %c0_i32_0 = arith.constant 0 : i32
    %c0_i32_1 = arith.constant 0 : i32
    return %c0_i32, %c0_i32_0 : i32, i32
  }
  func.func @transform_8(%arg0: i32, %arg1: i32) -> (i32, i32) {
    %c0_i32 = arith.constant 0 : i32
    %c0_i32_0 = arith.constant 0 : i32
    %c0_i32_1 = arith.constant 0 : i32
    return %c0_i32, %c0_i32_0 : i32, i32
  }
  func.func @transform_9(%arg0: i32, %arg1: i32) -> (i32, i32, i32) {
    %c0_i32 = arith.constant 0 : i32
    %c0_i32_0 = arith.constant 0 : i32
    %c0_i32_1 = arith.constant 0 : i32
    %c0_i32_2 = arith.constant 0 : i32
    return %c0_i32, %c0_i32_0, %c0_i32_1 : i32, i32, i32
  }
  func.func @transform_10(%arg0: i32, %arg1: i32) -> (i32, i32, i32) {
    %c0_i32 = arith.constant 0 : i32
    %c0_i32_0 = arith.constant 0 : i32
    %c0_i32_1 = arith.constant 0 : i32
    %c0_i32_2 = arith.constant 0 : i32
    return %c0_i32, %c0_i32_0, %c0_i32_1 : i32, i32, i32
  }
  func.func @transform_11(%arg0: i32, %arg1: i32) -> (i32, i32, i32) {
    %c0_i32 = arith.constant 0 : i32
    %c0_i32_0 = arith.constant 0 : i32
    %c0_i32_1 = arith.constant 0 : i32
    %c0_i32_2 = arith.constant 0 : i32
    return %c0_i32, %c0_i32_0, %c0_i32_1 : i32, i32, i32
  }
  func.func @transform_12(%arg0: i32, %arg1: i32) -> (i32, i32, i32) {
    %c0_i32 = arith.constant 0 : i32
    %c0_i32_0 = arith.constant 0 : i32
    %c0_i32_1 = arith.constant 0 : i32
    %c0_i32_2 = arith.constant 0 : i32
    return %c0_i32, %c0_i32_0, %c0_i32_1 : i32, i32, i32
  }
  func.func @transform_13(%arg0: i32, %arg1: i32) -> (i32, i32, i32) {
    %c0_i32 = arith.constant 0 : i32
    %c0_i32_0 = arith.constant 0 : i32
    %c0_i32_1 = arith.constant 0 : i32
    return %arg0, %c0_i32, %c0_i32_0 : i32, i32, i32
  }
  func.func @transform_14(%arg0: i32, %arg1: i32) -> (i32, i32, i32) {
    %c0_i32 = arith.constant 0 : i32
    %c0_i32_0 = arith.constant 0 : i32
    %c0_i32_1 = arith.constant 0 : i32
    return %arg0, %c0_i32, %c0_i32_0 : i32, i32, i32
  }
}

module attributes {stable_mosaic.version = 11 : i64} {
  func.func @block_moe_kernel(%arg0: i32, %arg1: i32, %arg2: memref<2x16x64xf32, #tpu.memory_space<vmem>>, %arg3: memref<1x64xf32, #tpu.memory_space<vmem>>, %arg4: memref<1x64xf32, #tpu.memory_space<vmem>>, %arg5: memref<64x192xbf16, #tpu.memory_space<vmem>>, %arg6: memref<64x64xbf16, #tpu.memory_space<vmem>>, %arg7: memref<1x64xf32, #tpu.memory_space<vmem>>, %arg8: memref<1x64xf32, #tpu.memory_space<vmem>>, %arg9: memref<1x64xf32, #tpu.memory_space<vmem>>, %arg10: memref<64x128xbf16, #tpu.memory_space<vmem>>, %arg11: memref<4x64x256xbf16, #tpu.memory_space<vmem>>, %arg12: memref<4x1x256xf32, #tpu.memory_space<vmem>>, %arg13: memref<4x256x64xbf16, #tpu.memory_space<vmem>>, %arg14: memref<4x1x64xf32, #tpu.memory_space<vmem>>, %arg15: memref<2x16x64xf32, #tpu.memory_space<vmem>>, %arg16: memref<2x16x128xf32, #tpu.memory_space<vmem>>, %arg17: memref<32x64xbf16, #tpu.memory_space<vmem>>, %arg18: memref<32x128xf32, #tpu.memory_space<vmem>>, %arg19: memref<32x64xf32, #tpu.memory_space<vmem>>, %arg20: memref<32x64xf32, #tpu.memory_space<vmem>>) attributes {dimension_semantics = [#tpu.dimension_semantics<parallel>, #tpu.dimension_semantics<arbitrary>], iteration_bounds = array<i64: 1, 4>, scalar_prefetch = 0 : i64, scratch_operands = 4 : i64, tpu.core_type = #tpu.core_type<tc>, window_params = [{transform_indices = @transform_0, window_bounds = array<i64: 2, 16, 64>}, {pipeline_mode = #tpu.pipeline_mode<synchronous>, transform_indices = @transform_1, window_bounds = array<i64: 1, 64>}, {pipeline_mode = #tpu.pipeline_mode<synchronous>, transform_indices = @transform_2, window_bounds = array<i64: 1, 64>}, {pipeline_mode = #tpu.pipeline_mode<synchronous>, transform_indices = @transform_3, window_bounds = array<i64: 64, 192>}, {pipeline_mode = #tpu.pipeline_mode<synchronous>, transform_indices = @transform_4, window_bounds = array<i64: 64, 64>}, {pipeline_mode = #tpu.pipeline_mode<synchronous>, transform_indices = @transform_5, window_bounds = array<i64: 1, 64>}, {pipeline_mode = #tpu.pipeline_mode<synchronous>, transform_indices = @transform_6, window_bounds = array<i64: 1, 64>}, {pipeline_mode = #tpu.pipeline_mode<synchronous>, transform_indices = @transform_7, window_bounds = array<i64: 1, 64>}, {pipeline_mode = #tpu.pipeline_mode<synchronous>, transform_indices = @transform_8, window_bounds = array<i64: 64, 128>}, {pipeline_mode = #tpu.pipeline_mode<synchronous>, transform_indices = @transform_9, window_bounds = array<i64: 4, 64, 256>}, {pipeline_mode = #tpu.pipeline_mode<synchronous>, transform_indices = @transform_10, window_bounds = array<i64: 4, 1, 256>}, {pipeline_mode = #tpu.pipeline_mode<synchronous>, transform_indices = @transform_11, window_bounds = array<i64: 4, 256, 64>}, {pipeline_mode = #tpu.pipeline_mode<synchronous>, transform_indices = @transform_12, window_bounds = array<i64: 4, 1, 64>}, {transform_indices = @transform_13, window_bounds = array<i64: 2, 16, 64>}, {transform_indices = @transform_14, window_bounds = array<i64: 2, 16, 128>}]} {
    %c0_i32 = arith.constant 0 : i32
    %0 = arith.cmpi eq, %arg1, %c0_i32 : i32
    %1 = arith.extui %0 : i1 to i32
    %c0_i32_0 = arith.constant 0 : i32
    %2 = arith.cmpi ne, %1, %c0_i32_0 : i32
    scf.if %2 {
      %c0_24 = arith.constant 0 : index
      %c0_25 = arith.constant 0 : index
      %c0_26 = arith.constant 0 : index
      %52 = vector.load %arg2[%c0_24, %c0_25, %c0_26] : memref<2x16x64xf32, #tpu.memory_space<vmem>>, vector<2x16x64xf32>
      %53 = vector.shape_cast %52 : vector<2x16x64xf32> to vector<32x64xf32>
      %c0_27 = arith.constant 0 : index
      %c0_28 = arith.constant 0 : index
      %54 = vector.load %arg3[%c0_27, %c0_28] : memref<1x64xf32, #tpu.memory_space<vmem>>, vector<1x64xf32>
      %c0_29 = arith.constant 0 : index
      %c0_30 = arith.constant 0 : index
      %55 = vector.load %arg4[%c0_29, %c0_30] : memref<1x64xf32, #tpu.memory_space<vmem>>, vector<1x64xf32>
      %cst_31 = arith.constant dense<0.000000e+00> : vector<32xf32>
      %56 = vector.multi_reduction <add>, %53, %cst_31 [1] : vector<32x64xf32> to vector<32xf32>
      %57 = vector.shape_cast %56 : vector<32xf32> to vector<32x1xf32>
      %cst_32 = arith.constant 6.400000e+01 : f32
      %58 = vector.broadcast %cst_32 : f32 to vector<32x1xf32>
      %59 = arith.divf %57, %58 : vector<32x1xf32>
      %60 = vector.broadcast %59 : vector<32x1xf32> to vector<32x64xf32>
      %61 = arith.subf %53, %60 : vector<32x64xf32>
      %62 = arith.mulf %61, %61 : vector<32x64xf32>
      %cst_33 = arith.constant dense<0.000000e+00> : vector<32xf32>
      %63 = vector.multi_reduction <add>, %62, %cst_33 [1] : vector<32x64xf32> to vector<32xf32>
      %64 = vector.shape_cast %63 : vector<32xf32> to vector<32x1xf32>
      %cst_34 = arith.constant 6.400000e+01 : f32
      %65 = vector.broadcast %cst_34 : f32 to vector<32x1xf32>
      %66 = arith.divf %64, %65 : vector<32x1xf32>
      %67 = vector.broadcast %59 : vector<32x1xf32> to vector<32x64xf32>
      %68 = arith.subf %53, %67 : vector<32x64xf32>
      %cst_35 = arith.constant 9.99999974E-6 : f32
      %69 = vector.broadcast %cst_35 : f32 to vector<32x1xf32>
      %70 = arith.addf %66, %69 : vector<32x1xf32>
      %71 = math.rsqrt %70 : vector<32x1xf32>
      %72 = vector.broadcast %71 : vector<32x1xf32> to vector<32x64xf32>
      %73 = arith.mulf %68, %72 : vector<32x64xf32>
      %74 = vector.broadcast %54 : vector<1x64xf32> to vector<32x64xf32>
      %75 = arith.mulf %73, %74 : vector<32x64xf32>
      %76 = vector.broadcast %55 : vector<1x64xf32> to vector<32x64xf32>
      %77 = arith.addf %75, %76 : vector<32x64xf32>
      %78 = arith.truncf %77 : vector<32x64xf32> to vector<32x64xbf16>
      %c0_36 = arith.constant 0 : index
      %c0_37 = arith.constant 0 : index
      %79 = vector.load %arg5[%c0_36, %c0_37] : memref<64x192xbf16, #tpu.memory_space<vmem>>, vector<64x192xbf16>
      %cst_38 = arith.constant dense<0.000000e+00> : vector<32x192xf32>
      %80 = tpu.matmul %78, %79, %cst_38 {dimension_numbers = #tpu.dot_dimension_numbers<[1], [0], [0], [1], [0, 0, 1, 1], [], []>} : vector<32x64xbf16>, vector<64x192xbf16>, vector<32x192xf32> -> vector<32x192xf32>
      %81 = arith.truncf %80 : vector<32x192xf32> to vector<32x192xbf16>
      %82 = vector.extract_strided_slice %81 {offsets = [0, 0], sizes = [32, 16], strides = [1, 1]} : vector<32x192xbf16> to vector<32x16xbf16>
      %83 = vector.shape_cast %82 : vector<32x16xbf16> to vector<2x16x16xbf16>
      %84 = vector.extract_strided_slice %81 {offsets = [0, 64], sizes = [32, 16], strides = [1, 1]} : vector<32x192xbf16> to vector<32x16xbf16>
      %85 = vector.shape_cast %84 : vector<32x16xbf16> to vector<2x16x16xbf16>
      %86 = vector.extract_strided_slice %81 {offsets = [0, 128], sizes = [32, 16], strides = [1, 1]} : vector<32x192xbf16> to vector<32x16xbf16>
      %87 = vector.shape_cast %86 : vector<32x16xbf16> to vector<2x16x16xbf16>
      "tpu.trace_start"() <{level = 10 : i32, message = "bqd,bkd->bqk"}> : () -> ()
      %cst_39 = arith.constant dense<0.000000e+00> : vector<2x16x16xf32>
      %88 = tpu.matmul %83, %85, %cst_39 {dimension_numbers = #tpu.dot_dimension_numbers<[2], [2], [1], [1], [0, 0, 0, 1, 1, 1], [0], [0]>} : vector<2x16x16xbf16>, vector<2x16x16xbf16>, vector<2x16x16xf32> -> vector<2x16x16xf32>
      "tpu.trace_stop"() : () -> ()
      %cst_40 = arith.constant dense<0xFF800000> : vector<2x16xf32>
      %89 = vector.multi_reduction <maximumf>, %88, %cst_40 [2] : vector<2x16x16xf32> to vector<2x16xf32>
      %90 = vector.shape_cast %89 : vector<2x16xf32> to vector<2x16x1xf32>
      %91 = vector.broadcast %90 : vector<2x16x1xf32> to vector<2x16x16xf32>
      %92 = arith.subf %88, %91 : vector<2x16x16xf32>
      %93 = math.exp %92 : vector<2x16x16xf32>
      %cst_41 = arith.constant dense<0.000000e+00> : vector<2x16xf32>
      %94 = vector.multi_reduction <add>, %93, %cst_41 [2] : vector<2x16x16xf32> to vector<2x16xf32>
      %95 = vector.shape_cast %94 : vector<2x16xf32> to vector<2x16x1xf32>
      %96 = tpu.reciprocal %95 {approx = true} : vector<2x16x1xf32> -> vector<2x16x1xf32>
      %97 = vector.broadcast %96 : vector<2x16x1xf32> to vector<2x16x16xf32>
      %98 = arith.mulf %93, %97 : vector<2x16x16xf32>
      %99 = arith.truncf %98 : vector<2x16x16xf32> to vector<2x16x16xbf16>
      "tpu.trace_start"() <{level = 10 : i32, message = "bqk,bkd->bqd"}> : () -> ()
      %cst_42 = arith.constant dense<0.000000e+00> : vector<2x16x16xf32>
      %100 = tpu.matmul %99, %87, %cst_42 {dimension_numbers = #tpu.dot_dimension_numbers<[2], [1], [1], [2], [0, 0, 0, 1, 1, 2], [0], [0]>} : vector<2x16x16xbf16>, vector<2x16x16xbf16>, vector<2x16x16xf32> -> vector<2x16x16xf32>
      "tpu.trace_stop"() : () -> ()
      %101 = vector.shape_cast %100 : vector<2x16x16xf32> to vector<32x16xf32>
      %c0_43 = arith.constant 0 : index
      %c0_44 = arith.constant 0 : index
      %102 = vector.load %arg20[%c0_43, %c0_44] : memref<32x64xf32, #tpu.memory_space<vmem>>, vector<32x16xf32>
      tpu.vector_store %arg20[%c0_43, %c0_44], %101 {strides = array<i32>} : memref<32x64xf32, #tpu.memory_space<vmem>>, vector<32x16xf32>,
      %103 = vector.extract_strided_slice %81 {offsets = [0, 16], sizes = [32, 16], strides = [1, 1]} : vector<32x192xbf16> to vector<32x16xbf16>
      %104 = vector.shape_cast %103 : vector<32x16xbf16> to vector<2x16x16xbf16>
      %105 = vector.extract_strided_slice %81 {offsets = [0, 80], sizes = [32, 16], strides = [1, 1]} : vector<32x192xbf16> to vector<32x16xbf16>
      %106 = vector.shape_cast %105 : vector<32x16xbf16> to vector<2x16x16xbf16>
      %107 = vector.extract_strided_slice %81 {offsets = [0, 144], sizes = [32, 16], strides = [1, 1]} : vector<32x192xbf16> to vector<32x16xbf16>
      %108 = vector.shape_cast %107 : vector<32x16xbf16> to vector<2x16x16xbf16>
      "tpu.trace_start"() <{level = 10 : i32, message = "bqd,bkd->bqk"}> : () -> ()
      %cst_45 = arith.constant dense<0.000000e+00> : vector<2x16x16xf32>
      %109 = tpu.matmul %104, %106, %cst_45 {dimension_numbers = #tpu.dot_dimension_numbers<[2], [2], [1], [1], [0, 0, 0, 1, 1, 1], [0], [0]>} : vector<2x16x16xbf16>, vector<2x16x16xbf16>, vector<2x16x16xf32> -> vector<2x16x16xf32>
      "tpu.trace_stop"() : () -> ()
      %cst_46 = arith.constant dense<0xFF800000> : vector<2x16xf32>
      %110 = vector.multi_reduction <maximumf>, %109, %cst_46 [2] : vector<2x16x16xf32> to vector<2x16xf32>
      %111 = vector.shape_cast %110 : vector<2x16xf32> to vector<2x16x1xf32>
      %112 = vector.broadcast %111 : vector<2x16x1xf32> to vector<2x16x16xf32>
      %113 = arith.subf %109, %112 : vector<2x16x16xf32>
      %114 = math.exp %113 : vector<2x16x16xf32>
      %cst_47 = arith.constant dense<0.000000e+00> : vector<2x16xf32>
      %115 = vector.multi_reduction <add>, %114, %cst_47 [2] : vector<2x16x16xf32> to vector<2x16xf32>
      %116 = vector.shape_cast %115 : vector<2x16xf32> to vector<2x16x1xf32>
      %117 = tpu.reciprocal %116 {approx = true} : vector<2x16x1xf32> -> vector<2x16x1xf32>
      %118 = vector.broadcast %117 : vector<2x16x1xf32> to vector<2x16x16xf32>
      %119 = arith.mulf %114, %118 : vector<2x16x16xf32>
      %120 = arith.truncf %119 : vector<2x16x16xf32> to vector<2x16x16xbf16>
      "tpu.trace_start"() <{level = 10 : i32, message = "bqk,bkd->bqd"}> : () -> ()
      %cst_48 = arith.constant dense<0.000000e+00> : vector<2x16x16xf32>
      %121 = tpu.matmul %120, %108, %cst_48 {dimension_numbers = #tpu.dot_dimension_numbers<[2], [1], [1], [2], [0, 0, 0, 1, 1, 2], [0], [0]>} : vector<2x16x16xbf16>, vector<2x16x16xbf16>, vector<2x16x16xf32> -> vector<2x16x16xf32>
      "tpu.trace_stop"() : () -> ()
      %122 = vector.shape_cast %121 : vector<2x16x16xf32> to vector<32x16xf32>
      %c0_49 = arith.constant 0 : index
      %c16 = arith.constant 16 : index
      %123 = vector.load %arg20[%c0_49, %c16] : memref<32x64xf32, #tpu.memory_space<vmem>>, vector<32x16xf32>
      tpu.vector_store %arg20[%c0_49, %c16], %122 {strides = array<i32>} : memref<32x64xf32, #tpu.memory_space<vmem>>, vector<32x16xf32>,
      %124 = vector.extract_strided_slice %81 {offsets = [0, 32], sizes = [32, 16], strides = [1, 1]} : vector<32x192xbf16> to vector<32x16xbf16>
      %125 = vector.shape_cast %124 : vector<32x16xbf16> to vector<2x16x16xbf16>
      %126 = vector.extract_strided_slice %81 {offsets = [0, 96], sizes = [32, 16], strides = [1, 1]} : vector<32x192xbf16> to vector<32x16xbf16>
      %127 = vector.shape_cast %126 : vector<32x16xbf16> to vector<2x16x16xbf16>
      %128 = vector.extract_strided_slice %81 {offsets = [0, 160], sizes = [32, 16], strides = [1, 1]} : vector<32x192xbf16> to vector<32x16xbf16>
      %129 = vector.shape_cast %128 : vector<32x16xbf16> to vector<2x16x16xbf16>
      "tpu.trace_start"() <{level = 10 : i32, message = "bqd,bkd->bqk"}> : () -> ()
      %cst_50 = arith.constant dense<0.000000e+00> : vector<2x16x16xf32>
      %130 = tpu.matmul %125, %127, %cst_50 {dimension_numbers = #tpu.dot_dimension_numbers<[2], [2], [1], [1], [0, 0, 0, 1, 1, 1], [0], [0]>} : vector<2x16x16xbf16>, vector<2x16x16xbf16>, vector<2x16x16xf32> -> vector<2x16x16xf32>
      "tpu.trace_stop"() : () -> ()
      %cst_51 = arith.constant dense<0xFF800000> : vector<2x16xf32>
      %131 = vector.multi_reduction <maximumf>, %130, %cst_51 [2] : vector<2x16x16xf32> to vector<2x16xf32>
      %132 = vector.shape_cast %131 : vector<2x16xf32> to vector<2x16x1xf32>
      %133 = vector.broadcast %132 : vector<2x16x1xf32> to vector<2x16x16xf32>
      %134 = arith.subf %130, %133 : vector<2x16x16xf32>
      %135 = math.exp %134 : vector<2x16x16xf32>
      %cst_52 = arith.constant dense<0.000000e+00> : vector<2x16xf32>
      %136 = vector.multi_reduction <add>, %135, %cst_52 [2] : vector<2x16x16xf32> to vector<2x16xf32>
      %137 = vector.shape_cast %136 : vector<2x16xf32> to vector<2x16x1xf32>
      %138 = tpu.reciprocal %137 {approx = true} : vector<2x16x1xf32> -> vector<2x16x1xf32>
      %139 = vector.broadcast %138 : vector<2x16x1xf32> to vector<2x16x16xf32>
      %140 = arith.mulf %135, %139 : vector<2x16x16xf32>
      %141 = arith.truncf %140 : vector<2x16x16xf32> to vector<2x16x16xbf16>
      "tpu.trace_start"() <{level = 10 : i32, message = "bqk,bkd->bqd"}> : () -> ()
      %cst_53 = arith.constant dense<0.000000e+00> : vector<2x16x16xf32>
      %142 = tpu.matmul %141, %129, %cst_53 {dimension_numbers = #tpu.dot_dimension_numbers<[2], [1], [1], [2], [0, 0, 0, 1, 1, 2], [0], [0]>} : vector<2x16x16xbf16>, vector<2x16x16xbf16>, vector<2x16x16xf32> -> vector<2x16x16xf32>
      "tpu.trace_stop"() : () -> ()
      %143 = vector.shape_cast %142 : vector<2x16x16xf32> to vector<32x16xf32>
      %c0_54 = arith.constant 0 : index
      %c32 = arith.constant 32 : index
      %144 = vector.load %arg20[%c0_54, %c32] : memref<32x64xf32, #tpu.memory_space<vmem>>, vector<32x16xf32>
      tpu.vector_store %arg20[%c0_54, %c32], %143 {strides = array<i32>} : memref<32x64xf32, #tpu.memory_space<vmem>>, vector<32x16xf32>,
      %145 = vector.extract_strided_slice %81 {offsets = [0, 48], sizes = [32, 16], strides = [1, 1]} : vector<32x192xbf16> to vector<32x16xbf16>
      %146 = vector.shape_cast %145 : vector<32x16xbf16> to vector<2x16x16xbf16>
      %147 = vector.extract_strided_slice %81 {offsets = [0, 112], sizes = [32, 16], strides = [1, 1]} : vector<32x192xbf16> to vector<32x16xbf16>
      %148 = vector.shape_cast %147 : vector<32x16xbf16> to vector<2x16x16xbf16>
      %149 = vector.extract_strided_slice %81 {offsets = [0, 176], sizes = [32, 16], strides = [1, 1]} : vector<32x192xbf16> to vector<32x16xbf16>
      %150 = vector.shape_cast %149 : vector<32x16xbf16> to vector<2x16x16xbf16>
      "tpu.trace_start"() <{level = 10 : i32, message = "bqd,bkd->bqk"}> : () -> ()
      %cst_55 = arith.constant dense<0.000000e+00> : vector<2x16x16xf32>
      %151 = tpu.matmul %146, %148, %cst_55 {dimension_numbers = #tpu.dot_dimension_numbers<[2], [2], [1], [1], [0, 0, 0, 1, 1, 1], [0], [0]>} : vector<2x16x16xbf16>, vector<2x16x16xbf16>, vector<2x16x16xf32> -> vector<2x16x16xf32>
      "tpu.trace_stop"() : () -> ()
      %cst_56 = arith.constant dense<0xFF800000> : vector<2x16xf32>
      %152 = vector.multi_reduction <maximumf>, %151, %cst_56 [2] : vector<2x16x16xf32> to vector<2x16xf32>
      %153 = vector.shape_cast %152 : vector<2x16xf32> to vector<2x16x1xf32>
      %154 = vector.broadcast %153 : vector<2x16x1xf32> to vector<2x16x16xf32>
      %155 = arith.subf %151, %154 : vector<2x16x16xf32>
      %156 = math.exp %155 : vector<2x16x16xf32>
      %cst_57 = arith.constant dense<0.000000e+00> : vector<2x16xf32>
      %157 = vector.multi_reduction <add>, %156, %cst_57 [2] : vector<2x16x16xf32> to vector<2x16xf32>
      %158 = vector.shape_cast %157 : vector<2x16xf32> to vector<2x16x1xf32>
      %159 = tpu.reciprocal %158 {approx = true} : vector<2x16x1xf32> -> vector<2x16x1xf32>
      %160 = vector.broadcast %159 : vector<2x16x1xf32> to vector<2x16x16xf32>
      %161 = arith.mulf %156, %160 : vector<2x16x16xf32>
      %162 = arith.truncf %161 : vector<2x16x16xf32> to vector<2x16x16xbf16>
      "tpu.trace_start"() <{level = 10 : i32, message = "bqk,bkd->bqd"}> : () -> ()
      %cst_58 = arith.constant dense<0.000000e+00> : vector<2x16x16xf32>
      %163 = tpu.matmul %162, %150, %cst_58 {dimension_numbers = #tpu.dot_dimension_numbers<[2], [1], [1], [2], [0, 0, 0, 1, 1, 2], [0], [0]>} : vector<2x16x16xbf16>, vector<2x16x16xbf16>, vector<2x16x16xf32> -> vector<2x16x16xf32>
      "tpu.trace_stop"() : () -> ()
      %164 = vector.shape_cast %163 : vector<2x16x16xf32> to vector<32x16xf32>
      %c0_59 = arith.constant 0 : index
      %c48 = arith.constant 48 : index
      %165 = vector.load %arg20[%c0_59, %c48] : memref<32x64xf32, #tpu.memory_space<vmem>>, vector<32x16xf32>
      tpu.vector_store %arg20[%c0_59, %c48], %164 {strides = array<i32>} : memref<32x64xf32, #tpu.memory_space<vmem>>, vector<32x16xf32>,
      %c0_60 = arith.constant 0 : index
      %c0_61 = arith.constant 0 : index
      %166 = vector.load %arg20[%c0_60, %c0_61] : memref<32x64xf32, #tpu.memory_space<vmem>>, vector<32x64xf32>
      %167 = arith.truncf %166 : vector<32x64xf32> to vector<32x64xbf16>
      %c0_62 = arith.constant 0 : index
      %c0_63 = arith.constant 0 : index
      %168 = vector.load %arg6[%c0_62, %c0_63] : memref<64x64xbf16, #tpu.memory_space<vmem>>, vector<64x64xbf16>
      %cst_64 = arith.constant dense<0.000000e+00> : vector<32x64xf32>
      %169 = tpu.matmul %167, %168, %cst_64 {dimension_numbers = #tpu.dot_dimension_numbers<[1], [0], [0], [1], [0, 0, 1, 1], [], []>} : vector<32x64xbf16>, vector<64x64xbf16>, vector<32x64xf32> -> vector<32x64xf32>
      %c0_65 = arith.constant 0 : index
      %c0_66 = arith.constant 0 : index
      %170 = vector.load %arg7[%c0_65, %c0_66] : memref<1x64xf32, #tpu.memory_space<vmem>>, vector<1x64xf32>
      %171 = vector.broadcast %170 : vector<1x64xf32> to vector<32x64xf32>
      %172 = arith.addf %169, %171 : vector<32x64xf32>
      %173 = arith.addf %53, %172 : vector<32x64xf32>
      %c0_67 = arith.constant 0 : index
      %c0_68 = arith.constant 0 : index
      %174 = vector.load %arg8[%c0_67, %c0_68] : memref<1x64xf32, #tpu.memory_space<vmem>>, vector<1x64xf32>
      %c0_69 = arith.constant 0 : index
      %c0_70 = arith.constant 0 : index
      %175 = vector.load %arg9[%c0_69, %c0_70] : memref<1x64xf32, #tpu.memory_space<vmem>>, vector<1x64xf32>
      %cst_71 = arith.constant dense<0.000000e+00> : vector<32xf32>
      %176 = vector.multi_reduction <add>, %173, %cst_71 [1] : vector<32x64xf32> to vector<32xf32>
      %177 = vector.shape_cast %176 : vector<32xf32> to vector<32x1xf32>
      %cst_72 = arith.constant 6.400000e+01 : f32
      %178 = vector.broadcast %cst_72 : f32 to vector<32x1xf32>
      %179 = arith.divf %177, %178 : vector<32x1xf32>
      %180 = vector.broadcast %179 : vector<32x1xf32> to vector<32x64xf32>
      %181 = arith.subf %173, %180 : vector<32x64xf32>
      %182 = arith.mulf %181, %181 : vector<32x64xf32>
      %cst_73 = arith.constant dense<0.000000e+00> : vector<32xf32>
      %183 = vector.multi_reduction <add>, %182, %cst_73 [1] : vector<32x64xf32> to vector<32xf32>
      %184 = vector.shape_cast %183 : vector<32xf32> to vector<32x1xf32>
      %cst_74 = arith.constant 6.400000e+01 : f32
      %185 = vector.broadcast %cst_74 : f32 to vector<32x1xf32>
      %186 = arith.divf %184, %185 : vector<32x1xf32>
      %187 = vector.broadcast %179 : vector<32x1xf32> to vector<32x64xf32>
      %188 = arith.subf %173, %187 : vector<32x64xf32>
      %cst_75 = arith.constant 9.99999974E-6 : f32
      %189 = vector.broadcast %cst_75 : f32 to vector<32x1xf32>
      %190 = arith.addf %186, %189 : vector<32x1xf32>
      %191 = math.rsqrt %190 : vector<32x1xf32>
      %192 = vector.broadcast %191 : vector<32x1xf32> to vector<32x64xf32>
      %193 = arith.mulf %188, %192 : vector<32x64xf32>
      %194 = vector.broadcast %174 : vector<1x64xf32> to vector<32x64xf32>
      %195 = arith.mulf %193, %194 : vector<32x64xf32>
      %196 = vector.broadcast %175 : vector<1x64xf32> to vector<32x64xf32>
      %197 = arith.addf %195, %196 : vector<32x64xf32>
      %198 = arith.truncf %197 : vector<32x64xf32> to vector<32x64xbf16>
      %c0_76 = arith.constant 0 : index
      %c0_77 = arith.constant 0 : index
      %199 = vector.load %arg17[%c0_76, %c0_77] : memref<32x64xbf16, #tpu.memory_space<vmem>>, vector<32x64xbf16>
      tpu.vector_store %arg17[%c0_76, %c0_77], %198 {strides = array<i32>} : memref<32x64xbf16, #tpu.memory_space<vmem>>, vector<32x64xbf16>,
      %c0_78 = arith.constant 0 : index
      %c0_79 = arith.constant 0 : index
      %200 = vector.load %arg10[%c0_78, %c0_79] : memref<64x128xbf16, #tpu.memory_space<vmem>>, vector<64x128xbf16>
      %cst_80 = arith.constant dense<0.000000e+00> : vector<32x128xf32>
      %201 = tpu.matmul %198, %200, %cst_80 {dimension_numbers = #tpu.dot_dimension_numbers<[1], [0], [0], [1], [0, 0, 1, 1], [], []>} : vector<32x64xbf16>, vector<64x128xbf16>, vector<32x128xf32> -> vector<32x128xf32>
      %202 = vector.shape_cast %201 : vector<32x128xf32> to vector<2x16x128xf32>
      %c0_81 = arith.constant 0 : index
      %c0_82 = arith.constant 0 : index
      %c0_83 = arith.constant 0 : index
      %203 = vector.load %arg16[%c0_81, %c0_82, %c0_83] : memref<2x16x128xf32, #tpu.memory_space<vmem>>, vector<2x16x128xf32>
      tpu.vector_store %arg16[%c0_81, %c0_82, %c0_83], %202 {strides = array<i32>} : memref<2x16x128xf32, #tpu.memory_space<vmem>>, vector<2x16x128xf32>,
      %204 = tpu.iota {dimensions = array<i32: 1>} : vector<32x128xi32>
      %c4_i32 = arith.constant 4 : i32
      %205 = vector.broadcast %c4_i32 : i32 to vector<32x128xi32>
      %206 = arith.cmpi slt, %204, %205 : vector<32x128xi32>
      %cst_84 = arith.constant -1.000000e+30 : f32
      %207 = vector.broadcast %cst_84 : f32 to vector<32x128xf32>
      %208 = arith.select %206, %201, %207 : vector<32x128xi1>, vector<32x128xf32>
      %cst_85 = arith.constant dense<0xFF800000> : vector<32xf32>
      %209 = vector.multi_reduction <maximumf>, %208, %cst_85 [1] : vector<32x128xf32> to vector<32xf32>
      %210 = vector.shape_cast %209 : vector<32xf32> to vector<32x1xf32>
      %211 = vector.broadcast %210 : vector<32x1xf32> to vector<32x128xf32>
      %212 = arith.subf %208, %211 : vector<32x128xf32>
      %213 = math.exp %212 : vector<32x128xf32>
      %cst_86 = arith.constant dense<0.000000e+00> : vector<32xf32>
      %214 = vector.multi_reduction <add>, %213, %cst_86 [1] : vector<32x128xf32> to vector<32xf32>
      %215 = vector.shape_cast %214 : vector<32xf32> to vector<32x1xf32>
      %216 = vector.broadcast %215 : vector<32x1xf32> to vector<32x128xf32>
      %217 = arith.divf %213, %216 : vector<32x128xf32>
      %c0_87 = arith.constant 0 : index
      %c0_88 = arith.constant 0 : index
      %218 = vector.load %arg18[%c0_87, %c0_88] : memref<32x128xf32, #tpu.memory_space<vmem>>, vector<32x128xf32>
      tpu.vector_store %arg18[%c0_87, %c0_88], %217 {strides = array<i32>} : memref<32x128xf32, #tpu.memory_space<vmem>>, vector<32x128xf32>,
      %cst_89 = arith.constant 0.000000e+00 : f32
      %219 = vector.broadcast %cst_89 : f32 to vector<32x64xf32>
      %c0_90 = arith.constant 0 : index
      %c0_91 = arith.constant 0 : index
      %220 = vector.load %arg19[%c0_90, %c0_91] : memref<32x64xf32, #tpu.memory_space<vmem>>, vector<32x64xf32>
      tpu.vector_store %arg19[%c0_90, %c0_91], %219 {strides = array<i32>} : memref<32x64xf32, #tpu.memory_space<vmem>>, vector<32x64xf32>,
    } else {
    }
    %c0 = arith.constant 0 : index
    %c0_1 = arith.constant 0 : index
    %3 = vector.load %arg17[%c0, %c0_1] : memref<32x64xbf16, #tpu.memory_space<vmem>>, vector<32x64xbf16>
    %4 = arith.index_cast %arg1 : i32 to index
    %c0_2 = arith.constant 0 : index
    %c0_3 = arith.constant 0 : index
    %5 = vector.load %arg11[%4, %c0_2, %c0_3] : memref<4x64x256xbf16, #tpu.memory_space<vmem>>, vector<1x64x256xbf16>
    %6 = vector.shape_cast %5 : vector<1x64x256xbf16> to vector<64x256xbf16>
    %cst = arith.constant dense<0.000000e+00> : vector<32x256xf32>
    %7 = tpu.matmul %3, %6, %cst {dimension_numbers = #tpu.dot_dimension_numbers<[1], [0], [0], [1], [0, 0, 1, 1], [], []>} : vector<32x64xbf16>, vector<64x256xbf16>, vector<32x256xf32> -> vector<32x256xf32>
    %8 = arith.index_cast %arg1 : i32 to index
    %c0_4 = arith.constant 0 : index
    %c0_5 = arith.constant 0 : index
    %9 = vector.load %arg12[%8, %c0_4, %c0_5] : memref<4x1x256xf32, #tpu.memory_space<vmem>>, vector<1x1x256xf32>
    %10 = vector.shape_cast %9 : vector<1x1x256xf32> to vector<1x256xf32>
    %11 = vector.broadcast %10 : vector<1x256xf32> to vector<32x256xf32>
    %12 = arith.addf %7, %11 : vector<32x256xf32>
    %13 = arith.truncf %12 : vector<32x256xf32> to vector<32x256xbf16>
    %cst_6 = arith.constant 5.000000e-01 : bf16
    %14 = vector.broadcast %cst_6 : bf16 to vector<32x256xbf16>
    %15 = arith.mulf %14, %13 : vector<32x256xbf16>
    %cst_7 = arith.constant 4.467770e-02 : bf16
    %16 = vector.broadcast %cst_7 : bf16 to vector<32x256xbf16>
    %17 = arith.mulf %16, %13 : vector<32x256xbf16>
    %18 = arith.mulf %17, %13 : vector<32x256xbf16>
    %19 = arith.mulf %18, %13 : vector<32x256xbf16>
    %20 = arith.addf %13, %19 : vector<32x256xbf16>
    %cst_8 = arith.constant 7.968750e-01 : bf16
    %21 = vector.broadcast %cst_8 : bf16 to vector<32x256xbf16>
    %22 = arith.mulf %21, %20 : vector<32x256xbf16>
    %23 = math.tanh %22 : vector<32x256xbf16>
    %cst_9 = arith.constant 1.000000e+00 : bf16
    %24 = vector.broadcast %cst_9 : bf16 to vector<32x256xbf16>
    %25 = arith.addf %24, %23 : vector<32x256xbf16>
    %26 = arith.mulf %15, %25 : vector<32x256xbf16>
    %27 = arith.index_cast %arg1 : i32 to index
    %c0_10 = arith.constant 0 : index
    %c0_11 = arith.constant 0 : index
    %28 = vector.load %arg13[%27, %c0_10, %c0_11] : memref<4x256x64xbf16, #tpu.memory_space<vmem>>, vector<1x256x64xbf16>
    %29 = vector.shape_cast %28 : vector<1x256x64xbf16> to vector<256x64xbf16>
    %cst_12 = arith.constant dense<0.000000e+00> : vector<32x64xf32>
    %30 = tpu.matmul %26, %29, %cst_12 {dimension_numbers = #tpu.dot_dimension_numbers<[1], [0], [0], [1], [0, 0, 1, 1], [], []>} : vector<32x256xbf16>, vector<256x64xbf16>, vector<32x64xf32> -> vector<32x64xf32>
    %31 = arith.index_cast %arg1 : i32 to index
    %c0_13 = arith.constant 0 : index
    %c0_14 = arith.constant 0 : index
    %32 = vector.load %arg14[%31, %c0_13, %c0_14] : memref<4x1x64xf32, #tpu.memory_space<vmem>>, vector<1x1x64xf32>
    %33 = vector.shape_cast %32 : vector<1x1x64xf32> to vector<1x64xf32>
    %34 = vector.broadcast %33 : vector<1x64xf32> to vector<32x64xf32>
    %35 = arith.addf %30, %34 : vector<32x64xf32>
    %36 = tpu.iota {dimensions = array<i32: 1>} : vector<32x128xi32>
    %37 = vector.broadcast %arg1 : i32 to vector<32x128xi32>
    %38 = arith.cmpi eq, %36, %37 : vector<32x128xi32>
    %c0_15 = arith.constant 0 : index
    %c0_16 = arith.constant 0 : index
    %39 = vector.load %arg18[%c0_15, %c0_16] : memref<32x128xf32, #tpu.memory_space<vmem>>, vector<32x128xf32>
    %cst_17 = arith.constant 0.000000e+00 : f32
    %40 = vector.broadcast %cst_17 : f32 to vector<32x128xf32>
    %41 = arith.select %38, %39, %40 : vector<32x128xi1>, vector<32x128xf32>
    %cst_18 = arith.constant dense<0.000000e+00> : vector<32xf32>
    %42 = vector.multi_reduction <add>, %41, %cst_18 [1] : vector<32x128xf32> to vector<32xf32>
    %43 = vector.shape_cast %42 : vector<32xf32> to vector<32x1xf32>
    %c0_19 = arith.constant 0 : index
    %c0_20 = arith.constant 0 : index
    %44 = vector.load %arg19[%c0_19, %c0_20] : memref<32x64xf32, #tpu.memory_space<vmem>>, vector<32x64xf32>
    %45 = vector.broadcast %43 : vector<32x1xf32> to vector<32x64xf32>
    %46 = arith.mulf %45, %35 : vector<32x64xf32>
    %47 = arith.addf %44, %46 : vector<32x64xf32>
    %c0_21 = arith.constant 0 : index
    %c0_22 = arith.constant 0 : index
    %48 = vector.load %arg19[%c0_21, %c0_22] : memref<32x64xf32, #tpu.memory_space<vmem>>, vector<32x64xf32>
    tpu.vector_store %arg19[%c0_21, %c0_22], %47 {strides = array<i32>} : memref<32x64xf32, #tpu.memory_space<vmem>>, vector<32x64xf32>,
    %c3_i32 = arith.constant 3 : i32
    %49 = arith.cmpi eq, %arg1, %c3_i32 : i32
    %50 = arith.extui %49 : i1 to i32
    %c0_i32_23 = arith.constant 0 : i32
    %51 = arith.cmpi ne, %50, %c0_i32_23 : i32
    scf.if %51 {
      %c0_24 = arith.constant 0 : index
      %c0_25 = arith.constant 0 : index
      %52 = vector.load %arg19[%c0_24, %c0_25] : memref<32x64xf32, #tpu.memory_space<vmem>>, vector<32x64xf32>
      %cst_26 = arith.constant 2.000000e+00 : f32
      %53 = vector.broadcast %cst_26 : f32 to vector<32x64xf32>
      %54 = arith.mulf %52, %53 : vector<32x64xf32>
      %55 = vector.shape_cast %54 : vector<32x64xf32> to vector<2x16x64xf32>
      %c0_27 = arith.constant 0 : index
      %c0_28 = arith.constant 0 : index
      %c0_29 = arith.constant 0 : index
      %56 = vector.load %arg15[%c0_27, %c0_28, %c0_29] : memref<2x16x64xf32, #tpu.memory_space<vmem>>, vector<2x16x64xf32>
      tpu.vector_store %arg15[%c0_27, %c0_28, %c0_29], %55 {strides = array<i32>} : memref<2x16x64xf32, #tpu.memory_space<vmem>>, vector<2x16x64xf32>,
    } else {
    }
    return
  }
  func.func @transform_0(%arg0: i32, %arg1: i32) -> (i32, i32, i32) {
    %c0_i32 = arith.constant 0 : i32
    %c0_i32_0 = arith.constant 0 : i32
    %c0_i32_1 = arith.constant 0 : i32
    return %arg0, %c0_i32, %c0_i32_0 : i32, i32, i32
  }
  func.func @transform_1(%arg0: i32, %arg1: i32) -> (i32, i32) {
    %c0_i32 = arith.constant 0 : i32
    %c0_i32_0 = arith.constant 0 : i32
    %c0_i32_1 = arith.constant 0 : i32
    return %c0_i32, %c0_i32_0 : i32, i32
  }
  func.func @transform_2(%arg0: i32, %arg1: i32) -> (i32, i32) {
    %c0_i32 = arith.constant 0 : i32
    %c0_i32_0 = arith.constant 0 : i32
    %c0_i32_1 = arith.constant 0 : i32
    return %c0_i32, %c0_i32_0 : i32, i32
  }
  func.func @transform_3(%arg0: i32, %arg1: i32) -> (i32, i32) {
    %c0_i32 = arith.constant 0 : i32
    %c0_i32_0 = arith.constant 0 : i32
    %c0_i32_1 = arith.constant 0 : i32
    return %c0_i32, %c0_i32_0 : i32, i32
  }
  func.func @transform_4(%arg0: i32, %arg1: i32) -> (i32, i32) {
    %c0_i32 = arith.constant 0 : i32
    %c0_i32_0 = arith.constant 0 : i32
    %c0_i32_1 = arith.constant 0 : i32
    return %c0_i32, %c0_i32_0 : i32, i32
  }
  func.func @transform_5(%arg0: i32, %arg1: i32) -> (i32, i32) {
    %c0_i32 = arith.constant 0 : i32
    %c0_i32_0 = arith.constant 0 : i32
    %c0_i32_1 = arith.constant 0 : i32
    return %c0_i32, %c0_i32_0 : i32, i32
  }
  func.func @transform_6(%arg0: i32, %arg1: i32) -> (i32, i32) {
    %c0_i32 = arith.constant 0 : i32
    %c0_i32_0 = arith.constant 0 : i32
    %c0_i32_1 = arith.constant 0 : i32
    return %c0_i32, %c0_i32_0 : i32, i32
  }
  func.func @transform_7(%arg0: i32, %arg1: i32) -> (i32, i32) {
    %c0_i32 = arith.constant 0 : i32
    %c0_i32_0 = arith.constant 0 : i32
    %c0_i32_1 = arith.constant 0 : i32
    return %c0_i32, %c0_i32_0 : i32, i32
  }
  func.func @transform_8(%arg0: i32, %arg1: i32) -> (i32, i32) {
    %c0_i32 = arith.constant 0 : i32
    %c0_i32_0 = arith.constant 0 : i32
    %c0_i32_1 = arith.constant 0 : i32
    return %c0_i32, %c0_i32_0 : i32, i32
  }
  func.func @transform_9(%arg0: i32, %arg1: i32) -> (i32, i32, i32) {
    %c0_i32 = arith.constant 0 : i32
    %c0_i32_0 = arith.constant 0 : i32
    %c0_i32_1 = arith.constant 0 : i32
    %c0_i32_2 = arith.constant 0 : i32
    return %c0_i32, %c0_i32_0, %c0_i32_1 : i32, i32, i32
  }
  func.func @transform_10(%arg0: i32, %arg1: i32) -> (i32, i32, i32) {
    %c0_i32 = arith.constant 0 : i32
    %c0_i32_0 = arith.constant 0 : i32
    %c0_i32_1 = arith.constant 0 : i32
    %c0_i32_2 = arith.constant 0 : i32
    return %c0_i32, %c0_i32_0, %c0_i32_1 : i32, i32, i32
  }
  func.func @transform_11(%arg0: i32, %arg1: i32) -> (i32, i32, i32) {
    %c0_i32 = arith.constant 0 : i32
    %c0_i32_0 = arith.constant 0 : i32
    %c0_i32_1 = arith.constant 0 : i32
    %c0_i32_2 = arith.constant 0 : i32
    return %c0_i32, %c0_i32_0, %c0_i32_1 : i32, i32, i32
  }
  func.func @transform_12(%arg0: i32, %arg1: i32) -> (i32, i32, i32) {
    %c0_i32 = arith.constant 0 : i32
    %c0_i32_0 = arith.constant 0 : i32
    %c0_i32_1 = arith.constant 0 : i32
    %c0_i32_2 = arith.constant 0 : i32
    return %c0_i32, %c0_i32_0, %c0_i32_1 : i32, i32, i32
  }
  func.func @transform_13(%arg0: i32, %arg1: i32) -> (i32, i32, i32) {
    %c0_i32 = arith.constant 0 : i32
    %c0_i32_0 = arith.constant 0 : i32
    %c0_i32_1 = arith.constant 0 : i32
    return %arg0, %c0_i32, %c0_i32_0 : i32, i32, i32
  }
  func.func @transform_14(%arg0: i32, %arg1: i32) -> (i32, i32, i32) {
    %c0_i32 = arith.constant 0 : i32
    %c0_i32_0 = arith.constant 0 : i32
    %c0_i32_1 = arith.constant 0 : i32
    return %arg0, %c0_i32, %c0_i32_0 : i32, i32, i32
  }
}

</mosaic_0001>

<llo_original>
// kernel: tpu_custom_call.1
$region0: #{tpu_custom_call.1}
  #allocation0 [shape = 'u32[]', space=smem, size = 0x4, offset = 0x4, fixed_abs, tag = 'smem constant byte address 0x4 - core index']
  #allocation1 [shape = 'u32[144,128]{1,0:T(1,128)}', space=vmem, size = 0x12000, scoped, tag = 'internal scratch']
  #allocation2 [shape = 'bf16[32,64]{1,0:T(8,128)(2,1)}', space=vmem, size = 0x2000, scoped, tag = 'scratch operand']
  #allocation3 [shape = 'f32[32,128]{1,0:T(8,128)}', space=vmem, size = 0x4000, scoped, tag = 'scratch operand']
  #allocation4 [shape = 'f32[32,64]{1,0:T(8,128)}', space=vmem, size = 0x4000, scoped, tag = 'scratch operand']
  #allocation5 [shape = 'f32[32,64]{1,0:T(8,128)}', space=vmem, size = 0x4000, scoped, tag = 'scratch operand']
  %s0 = inlined_call_operand.vmem [shape: f32[2,16,64], index: 0, kind: input, shape index: {}]
  %s1 = inlined_call_operand.vmem [shape: f32[1,64], index: 1, kind: input, shape index: {}]
  %s2 = inlined_call_operand.vmem [shape: f32[1,64], index: 2, kind: input, shape index: {}]
  %s3 = inlined_call_operand.vmem [shape: bf16[64,192], index: 3, kind: input, shape index: {}]
  %s4 = inlined_call_operand.vmem [shape: bf16[64,64], index: 4, kind: input, shape index: {}]
  %s5 = inlined_call_operand.vmem [shape: f32[1,64], index: 5, kind: input, shape index: {}]
  %s6 = inlined_call_operand.vmem [shape: f32[1,64], index: 6, kind: input, shape index: {}]
  %s7 = inlined_call_operand.vmem [shape: f32[1,64], index: 7, kind: input, shape index: {}]
  %s8 = inlined_call_operand.vmem [shape: bf16[64,128], index: 8, kind: input, shape index: {}]
  %s9 = inlined_call_operand.vmem [shape: bf16[4,64,256], index: 9, kind: input, shape index: {}]
  %s10 = inlined_call_operand.vmem [shape: f32[4,1,256], index: 10, kind: input, shape index: {}]
  %s11 = inlined_call_operand.vmem [shape: bf16[4,256,64], index: 11, kind: input, shape index: {}]
  %s12 = inlined_call_operand.vmem [shape: f32[4,1,64], index: 12, kind: input, shape index: {}]
  %s13 = inlined_call_operand.hbm [shape: f32[2,16,64], index: 13, kind: output, shape index: {0}]
  %s14 = inlined_call_operand.hbm [shape: f32[2,16,128], index: 14, kind: output, shape index: {1}]
  %15 = xla_tuple %s13, %s14
  %s16 = sld [smem:[#allocation0]]
  $region101: #{tpu_custom_call.1} parent=0
    _
  %s18 = ssub.s32 1, %s16
  %s19 = scalar_select 0, %s18, %s16
  $region1: #{tpu_custom_call.1} parent=0
    #allocation6 [shape = 'u8[16384]{0}', space=vmem, size = 0x4000, scoped, tag = 'output window, operand 0, single buffered']
    #allocation7 [shape = 's32[2]{0}', space=sflag, size = 0x8, scoped, tag = 'scoped memory for tpu_custom_call.1']
    #allocation8 [shape = 'u8[16384]{0}', space=vmem, size = 0x4000, scoped, tag = 'output window, operand 1, single buffered']
    #allocation9 [shape = 's32[1]{0}', space=sflag, size = 0x4, scoped, tag = 'scoped memory for tpu_custom_call.1']
    %20 = vsyncpa [#allocation7], 0
    %21 = vsyncpa [#allocation9], 0
    loop: start=0, step=1, limit=6
    $region2: #{tpu_custom_call.1} parent=1 // loop_pre_header
      _
    $region3: #{tpu_custom_call.1} parent=1 // loop_header
      %s23 = sphi 0, %s27
      %p24 = scmp.ge.s32.totalorder %s23, 6
      %s30 = sphi 0, %s42
      %s31 = sphi 0, %s38
      %s32 = sphi 0, %s30
      %s33 = sphi 0, %s31
      %s34 = sphi 0, %s32
      %s35 = sphi 0, %s33
      %s45 = sphi 0, %s47
      %s48 = sphi 0, %s45
      %s49 = sphi 0, %s48
      %s65 = sphi 0, %s49
      %s69 = sphi 0, %s69
      %s71 = sphi 0, %s69
      %s72 = sphi 0, %s71
      %s86 = sphi 0, %s72
      %s90 = sphi 0, %s90
      %s92 = sphi 0, %s90
      %s93 = sphi 0, %s92
      %s107 = sphi 0, %s93
      %s111 = sphi 0, %s111
      %s113 = sphi 0, %s111
      %s114 = sphi 0, %s113
      %s128 = sphi 0, %s114
      %s132 = sphi 0, %s132
      %s134 = sphi 0, %s132
      %s135 = sphi 0, %s134
      %s149 = sphi 0, %s135
      %s153 = sphi 0, %s153
      %s155 = sphi 0, %s153
      %s156 = sphi 0, %s155
      %s170 = sphi 0, %s156
      %s174 = sphi 0, %s174
      %s176 = sphi 0, %s174
      %s177 = sphi 0, %s176
      %s191 = sphi 0, %s177
      %s195 = sphi 0, %s195
      %s197 = sphi 0, %s195
      %s198 = sphi 0, %s197
      %s212 = sphi 0, %s198
      %s216 = sphi 0, %s216
      %s218 = sphi 0, %s216
      %s219 = sphi 0, %s218
      %s233 = sphi 0, %s219
      %s237 = sphi 0, %s237
      %s239 = sphi 0, %s237
      %s240 = sphi 0, %s239
      %s254 = sphi 0, %s240
      %s258 = sphi 0, %s258
      %s260 = sphi 0, %s258
      %s261 = sphi 0, %s260
      %s275 = sphi 0, %s261
      %s279 = sphi 0, %s279
      %s281 = sphi 0, %s279
      %s282 = sphi 0, %s281
      %s296 = sphi 0, %s282
      %s300 = sphi 0, %s300
      %s302 = sphi 0, %s300
      %s303 = sphi 0, %s302
      %s317 = sphi 0, %s303
      %s323 = sphi 0, %s325
      %s326 = sphi 0, %s323
      %s327 = sphi 0, %s326
      %s343 = sphi 0, %s327
      %s349 = sphi 0, %s351
      %s352 = sphi 0, %s349
      %s353 = sphi 0, %s352
      %s369 = sphi 0, %s353
    $region4: #{tpu_custom_call.1} parent=1 // loop_header_branch
      %26 = sbr.rel (%p24) target = $region8
    $region5: #{tpu_custom_call.1} parent=1 // loop_body
      %s28 = ssub.s32 %s23, 1
      %s29 = ssub.s32 %s23, 2
      %s36 = sadd.s32 1, %s31
      %p37 = scmp.ge.s32.totalorder %s36, 4
      %s38 = scalar_select %p37, 0, %s36
      %s39 = sadd.s32 1, %s30
      %s40 = scalar_select %p37, %s39, %s30
      %p41 = scmp.ge.s32.totalorder %s40, 1
      %s42 = scalar_select %p41, 0, %s40
      %s43 = ssub.s32 %s30, %s42
      %p44 = scmp.eq.s32.totalorder %s43, 0
      %s46 = sadd.s32 %s45, 1
      %s47 = scalar_select %p44, %s45, %s46
      %p50 = pneg %p44
      %p51 = scmp.eq.s32.totalorder %s23, 3
      %p52 = por %p50, %p51
      %p53 = scmp.ne.s32.totalorder %s45, %s48
      %p54 = scmp.eq.s32.totalorder %s23, 0
      %p55 = por %p53, %p54
      %p56 = scmp.ne.s32.totalorder %s45, %s48
      %p57 = scmp.eq.s32.totalorder %s28, 3
      %p58 = por %p56, %p57
      %p59 = scmp.ne.s32.totalorder %s48, %s49
      %p60 = scmp.eq.s32.totalorder %s28, 0
      %p61 = por %p59, %p60
      %p62 = scmp.ne.s32.totalorder %s48, %s49
      %p63 = scmp.eq.s32.totalorder %s29, 3
      %p64 = por %p62, %p63
      %p66 = scmp.ne.s32.totalorder %s49, %s65
      %p67 = scmp.eq.s32.totalorder %s29, 0
      %p68 = por %p66, %p67
      %s70 = sadd.s32 %s69, 1
      %p73 = scmp.eq.s32.totalorder %s23, 3
      %p74 = scmp.ne.s32.totalorder %s69, %s71
      %p75 = scmp.eq.s32.totalorder %s23, 0
      %p76 = por %p74, %p75
      %p77 = scmp.ne.s32.totalorder %s69, %s71
      %p78 = scmp.eq.s32.totalorder %s28, 3
      %p79 = por %p77, %p78
      %p80 = scmp.ne.s32.totalorder %s71, %s72
      %p81 = scmp.eq.s32.totalorder %s28, 0
      %p82 = por %p80, %p81
      %p83 = scmp.ne.s32.totalorder %s71, %s72
      %p84 = scmp.eq.s32.totalorder %s29, 3
      %p85 = por %p83, %p84
      %p87 = scmp.ne.s32.totalorder %s72, %s86
      %p88 = scmp.eq.s32.totalorder %s29, 0
      %p89 = por %p87, %p88
      %s91 = sadd.s32 %s90, 1
      %p94 = scmp.eq.s32.totalorder %s23, 3
      %p95 = scmp.ne.s32.totalorder %s90, %s92
      %p96 = scmp.eq.s32.totalorder %s23, 0
      %p97 = por %p95, %p96
      %p98 = scmp.ne.s32.totalorder %s90, %s92
      %p99 = scmp.eq.s32.totalorder %s28, 3
      %p100 = por %p98, %p99
      %p101 = scmp.ne.s32.totalorder %s92, %s93
      %p102 = scmp.eq.s32.totalorder %s28, 0
      %p103 = por %p101, %p102
      %p104 = scmp.ne.s32.totalorder %s92, %s93
      %p105 = scmp.eq.s32.totalorder %s29, 3
      %p106 = por %p104, %p105
      %p108 = scmp.ne.s32.totalorder %s93, %s107
      %p109 = scmp.eq.s32.totalorder %s29, 0
      %p110 = por %p108, %p109
      %s112 = sadd.s32 %s111, 1
      %p115 = scmp.eq.s32.totalorder %s23, 3
      %p116 = scmp.ne.s32.totalorder %s111, %s113
      %p117 = scmp.eq.s32.totalorder %s23, 0
      %p118 = por %p116, %p117
      %p119 = scmp.ne.s32.totalorder %s111, %s113
      %p120 = scmp.eq.s32.totalorder %s28, 3
      %p121 = por %p119, %p120
      %p122 = scmp.ne.s32.totalorder %s113, %s114
      %p123 = scmp.eq.s32.totalorder %s28, 0
      %p124 = por %p122, %p123
      %p125 = scmp.ne.s32.totalorder %s113, %s114
      %p126 = scmp.eq.s32.totalorder %s29, 3
      %p127 = por %p125, %p126
      %p129 = scmp.ne.s32.totalorder %s114, %s128
      %p130 = scmp.eq.s32.totalorder %s29, 0
      %p131 = por %p129, %p130
      %s133 = sadd.s32 %s132, 1
      %p136 = scmp.eq.s32.totalorder %s23, 3
      %p137 = scmp.ne.s32.totalorder %s132, %s134
      %p138 = scmp.eq.s32.totalorder %s23, 0
      %p139 = por %p137, %p138
      %p140 = scmp.ne.s32.totalorder %s132, %s134
      %p141 = scmp.eq.s32.totalorder %s28, 3
      %p142 = por %p140, %p141
      %p143 = scmp.ne.s32.totalorder %s134, %s135
      %p144 = scmp.eq.s32.totalorder %s28, 0
      %p145 = por %p143, %p144
      %p146 = scmp.ne.s32.totalorder %s134, %s135
      %p147 = scmp.eq.s32.totalorder %s29, 3
      %p148 = por %p146, %p147
      %p150 = scmp.ne.s32.totalorder %s135, %s149
      %p151 = scmp.eq.s32.totalorder %s29, 0
      %p152 = por %p150, %p151
      %s154 = sadd.s32 %s153, 1
      %p157 = scmp.eq.s32.totalorder %s23, 3
      %p158 = scmp.ne.s32.totalorder %s153, %s155
      %p159 = scmp.eq.s32.totalorder %s23, 0
      %p160 = por %p158, %p159
      %p161 = scmp.ne.s32.totalorder %s153, %s155
      %p162 = scmp.eq.s32.totalorder %s28, 3
      %p163 = por %p161, %p162
      %p164 = scmp.ne.s32.totalorder %s155, %s156
      %p165 = scmp.eq.s32.totalorder %s28, 0
      %p166 = por %p164, %p165
      %p167 = scmp.ne.s32.totalorder %s155, %s156
      %p168 = scmp.eq.s32.totalorder %s29, 3
      %p169 = por %p167, %p168
      %p171 = scmp.ne.s32.totalorder %s156, %s170
      %p172 = scmp.eq.s32.totalorder %s29, 0
      %p173 = por %p171, %p172
      %s175 = sadd.s32 %s174, 1
      %p178 = scmp.eq.s32.totalorder %s23, 3
      %p179 = scmp.ne.s32.totalorder %s174, %s176
      %p180 = scmp.eq.s32.totalorder %s23, 0
      %p181 = por %p179, %p180
      %p182 = scmp.ne.s32.totalorder %s174, %s176
      %p183 = scmp.eq.s32.totalorder %s28, 3
      %p184 = por %p182, %p183
      %p185 = scmp.ne.s32.totalorder %s176, %s177
      %p186 = scmp.eq.s32.totalorder %s28, 0
      %p187 = por %p185, %p186
      %p188 = scmp.ne.s32.totalorder %s176, %s177
      %p189 = scmp.eq.s32.totalorder %s29, 3
      %p190 = por %p188, %p189
      %p192 = scmp.ne.s32.totalorder %s177, %s191
      %p193 = scmp.eq.s32.totalorder %s29, 0
      %p194 = por %p192, %p193
      %s196 = sadd.s32 %s195, 1
      %p199 = scmp.eq.s32.totalorder %s23, 3
      %p200 = scmp.ne.s32.totalorder %s195, %s197
      %p201 = scmp.eq.s32.totalorder %s23, 0
      %p202 = por %p200, %p201
      %p203 = scmp.ne.s32.totalorder %s195, %s197
      %p204 = scmp.eq.s32.totalorder %s28, 3
      %p205 = por %p203, %p204
      %p206 = scmp.ne.s32.totalorder %s197, %s198
      %p207 = scmp.eq.s32.totalorder %s28, 0
      %p208 = por %p206, %p207
      %p209 = scmp.ne.s32.totalorder %s197, %s198
      %p210 = scmp.eq.s32.totalorder %s29, 3
      %p211 = por %p209, %p210
      %p213 = scmp.ne.s32.totalorder %s198, %s212
      %p214 = scmp.eq.s32.totalorder %s29, 0
      %p215 = por %p213, %p214
      %s217 = sadd.s32 %s216, 1
      %p220 = scmp.eq.s32.totalorder %s23, 3
      %p221 = scmp.ne.s32.totalorder %s216, %s218
      %p222 = scmp.eq.s32.totalorder %s23, 0
      %p223 = por %p221, %p222
      %p224 = scmp.ne.s32.totalorder %s216, %s218
      %p225 = scmp.eq.s32.totalorder %s28, 3
      %p226 = por %p224, %p225
      %p227 = scmp.ne.s32.totalorder %s218, %s219
      %p228 = scmp.eq.s32.totalorder %s28, 0
      %p229 = por %p227, %p228
      %p230 = scmp.ne.s32.totalorder %s218, %s219
      %p231 = scmp.eq.s32.totalorder %s29, 3
      %p232 = por %p230, %p231
      %p234 = scmp.ne.s32.totalorder %s219, %s233
      %p235 = scmp.eq.s32.totalorder %s29, 0
      %p236 = por %p234, %p235
      %s238 = sadd.s32 %s237, 1
      %p241 = scmp.eq.s32.totalorder %s23, 3
      %p242 = scmp.ne.s32.totalorder %s237, %s239
      %p243 = scmp.eq.s32.totalorder %s23, 0
      %p244 = por %p242, %p243
      %p245 = scmp.ne.s32.totalorder %s237, %s239
      %p246 = scmp.eq.s32.totalorder %s28, 3
      %p247 = por %p245, %p246
      %p248 = scmp.ne.s32.totalorder %s239, %s240
      %p249 = scmp.eq.s32.totalorder %s28, 0
      %p250 = por %p248, %p249
      %p251 = scmp.ne.s32.totalorder %s239, %s240
      %p252 = scmp.eq.s32.totalorder %s29, 3
      %p253 = por %p251, %p252
      %p255 = scmp.ne.s32.totalorder %s240, %s254
      %p256 = scmp.eq.s32.totalorder %s29, 0
      %p257 = por %p255, %p256
      %s259 = sadd.s32 %s258, 1
      %p262 = scmp.eq.s32.totalorder %s23, 3
      %p263 = scmp.ne.s32.totalorder %s258, %s260
      %p264 = scmp.eq.s32.totalorder %s23, 0
      %p265 = por %p263, %p264
      %p266 = scmp.ne.s32.totalorder %s258, %s260
      %p267 = scmp.eq.s32.totalorder %s28, 3
      %p268 = por %p266, %p267
      %p269 = scmp.ne.s32.totalorder %s260, %s261
      %p270 = scmp.eq.s32.totalorder %s28, 0
      %p271 = por %p269, %p270
      %p272 = scmp.ne.s32.totalorder %s260, %s261
      %p273 = scmp.eq.s32.totalorder %s29, 3
      %p274 = por %p272, %p273
      %p276 = scmp.ne.s32.totalorder %s261, %s275
      %p277 = scmp.eq.s32.totalorder %s29, 0
      %p278 = por %p276, %p277
      %s280 = sadd.s32 %s279, 1
      %p283 = scmp.eq.s32.totalorder %s23, 3
      %p284 = scmp.ne.s32.totalorder %s279, %s281
      %p285 = scmp.eq.s32.totalorder %s23, 0
      %p286 = por %p284, %p285
      %p287 = scmp.ne.s32.totalorder %s279, %s281
      %p288 = scmp.eq.s32.totalorder %s28, 3
      %p289 = por %p287, %p288
      %p290 = scmp.ne.s32.totalorder %s281, %s282
      %p291 = scmp.eq.s32.totalorder %s28, 0
      %p292 = por %p290, %p291
      %p293 = scmp.ne.s32.totalorder %s281, %s282
      %p294 = scmp.eq.s32.totalorder %s29, 3
      %p295 = por %p293, %p294
      %p297 = scmp.ne.s32.totalorder %s282, %s296
      %p298 = scmp.eq.s32.totalorder %s29, 0
      %p299 = por %p297, %p298
      %s301 = sadd.s32 %s300, 1
      %p304 = scmp.eq.s32.totalorder %s23, 3
      %p305 = scmp.ne.s32.totalorder %s300, %s302
      %p306 = scmp.eq.s32.totalorder %s23, 0
      %p307 = por %p305, %p306
      %p308 = scmp.ne.s32.totalorder %s300, %s302
      %p309 = scmp.eq.s32.totalorder %s28, 3
      %p310 = por %p308, %p309
      %p311 = scmp.ne.s32.totalorder %s302, %s303
      %p312 = scmp.eq.s32.totalorder %s28, 0
      %p313 = por %p311, %p312
      %p314 = scmp.ne.s32.totalorder %s302, %s303
      %p315 = scmp.eq.s32.totalorder %s29, 3
      %p316 = por %p314, %p315
      %p318 = scmp.ne.s32.totalorder %s303, %s317
      %p319 = scmp.eq.s32.totalorder %s29, 0
      %p320 = por %p318, %p319
      %s321 = ssub.s32 %s30, %s42
      %p322 = scmp.eq.s32.totalorder %s321, 0
      %s324 = sadd.s32 %s323, 1
      %s325 = scalar_select %p322, %s323, %s324
      %p328 = pneg %p322
      %p329 = scmp.eq.s32.totalorder %s23, 3
      %p330 = por %p328, %p329
      %p331 = scmp.ne.s32.totalorder %s323, %s326
      %p332 = scmp.eq.s32.totalorder %s23, 0
      %p333 = por %p331, %p332
      %p334 = scmp.ne.s32.totalorder %s323, %s326
      %p335 = scmp.eq.s32.totalorder %s28, 3
      %p336 = por %p334, %p335
      %p337 = scmp.ne.s32.totalorder %s326, %s327
      %p338 = scmp.eq.s32.totalorder %s28, 0
      %p339 = por %p337, %p338
      %p340 = scmp.ne.s32.totalorder %s326, %s327
      %p341 = scmp.eq.s32.totalorder %s29, 3
      %p342 = por %p340, %p341
      %p344 = scmp.ne.s32.totalorder %s327, %s343
      %p345 = scmp.eq.s32.totalorder %s29, 0
      %p346 = por %p344, %p345
      %s347 = ssub.s32 %s30, %s42
      %p348 = scmp.eq.s32.totalorder %s347, 0
      %s350 = sadd.s32 %s349, 1
      %s351 = scalar_select %p348, %s349, %s350
      %p354 = pneg %p348
      %p355 = scmp.eq.s32.totalorder %s23, 3
      %p356 = por %p354, %p355
      %p357 = scmp.ne.s32.totalorder %s349, %s352
      %p358 = scmp.eq.s32.totalorder %s23, 0
      %p359 = por %p357, %p358
      %p360 = scmp.ne.s32.totalorder %s349, %s352
      %p361 = scmp.eq.s32.totalorder %s28, 3
      %p362 = por %p360, %p361
      %p363 = scmp.ne.s32.totalorder %s352, %s353
      %p364 = scmp.eq.s32.totalorder %s28, 0
      %p365 = por %p363, %p364
      %p366 = scmp.ne.s32.totalorder %s352, %s353
      %p367 = scmp.eq.s32.totalorder %s29, 3
      %p368 = por %p366, %p367
      %p370 = scmp.ne.s32.totalorder %s353, %s369
      %p371 = scmp.eq.s32.totalorder %s29, 0
      %p372 = por %p370, %p371
      %p373 = scmp.le.s32.totalorder 1, %s23
      %p374 = scmp.lt.s32.totalorder %s23, 5
      %p375 = pnand %p373, %p374
      %p376 = pneg %p375
      // Predicated region
      $region9: #{tpu_custom_call.1} parent=5 // pred_check
        _
      $region10: #{tpu_custom_call.1} parent=5 // pred_check_branch
        %378 = sbr.rel (%p375) target = $region12
      $region11: #{tpu_custom_call.1} parent=5 // pred_region
        %s379 = ssub.s32 %s23, 1
        // Predicated region
        $region13: #{tpu_custom_call.1} parent=11 // pred_check
          %p380 = pneg %p61
        $region14: #{tpu_custom_call.1} parent=11 // pred_check_branch
          %382 = sbr.rel (%p380) target = $region16
        $region15: #{tpu_custom_call.1} parent=11 // pred_region
          %s383 = smul.u32 2, %s32
          %p384 = scmp.lt.s32.totalorder %s383, 1
          %s385 = scalar_select %p384, %s383, 1
          %s386 = smul.addr %s385, 2
          %s387 = smul.addr %s386, 8
          %s388 = scalar_lea.vmem %s0, %s387
          %s389 = smul.u32 2, %s32
        $region16: #{tpu_custom_call.1} parent=11 // pred_fallthru
          _
        // Predicated region
        $region17: #{tpu_custom_call.1} parent=11 // pred_check
          %p390 = pneg %p82
        $region18: #{tpu_custom_call.1} parent=11 // pred_check_branch
          %392 = sbr.rel (%p390) target = $region20
        $region19: #{tpu_custom_call.1} parent=11 // pred_region
          _
        $region20: #{tpu_custom_call.1} parent=11 // pred_fallthru
          _
        // Predicated region
        $region21: #{tpu_custom_call.1} parent=11 // pred_check
          %p393 = pneg %p103
        $region22: #{tpu_custom_call.1} parent=11 // pred_check_branch
          %395 = sbr.rel (%p393) target = $region24
        $region23: #{tpu_custom_call.1} parent=11 // pred_region
          _
        $region24: #{tpu_custom_call.1} parent=11 // pred_fallthru
          _
        // Predicated region
        $region25: #{tpu_custom_call.1} parent=11 // pred_check
          %p396 = pneg %p124
        $region26: #{tpu_custom_call.1} parent=11 // pred_check_branch
          %398 = sbr.rel (%p396) target = $region28
        $region27: #{tpu_custom_call.1} parent=11 // pred_region
          _
        $region28: #{tpu_custom_call.1} parent=11 // pred_fallthru
          _
        // Predicated region
        $region29: #{tpu_custom_call.1} parent=11 // pred_check
          %p399 = pneg %p145
        $region30: #{tpu_custom_call.1} parent=11 // pred_check_branch
          %401 = sbr.rel (%p399) target = $region32
        $region31: #{tpu_custom_call.1} parent=11 // pred_region
          _
        $region32: #{tpu_custom_call.1} parent=11 // pred_fallthru
          _
        // Predicated region
        $region33: #{tpu_custom_call.1} parent=11 // pred_check
          %p402 = pneg %p166
        $region34: #{tpu_custom_call.1} parent=11 // pred_check_branch
          %404 = sbr.rel (%p402) target = $region36
        $region35: #{tpu_custom_call.1} parent=11 // pred_region
          _
        $region36: #{tpu_custom_call.1} parent=11 // pred_fallthru
          _
        // Predicated region
        $region37: #{tpu_custom_call.1} parent=11 // pred_check
          %p405 = pneg %p187
        $region38: #{tpu_custom_call.1} parent=11 // pred_check_branch
          %407 = sbr.rel (%p405) target = $region40
        $region39: #{tpu_custom_call.1} parent=11 // pred_region
          _
        $region40: #{tpu_custom_call.1} parent=11 // pred_fallthru
          _
        // Predicated region
        $region41: #{tpu_custom_call.1} parent=11 // pred_check
          %p408 = pneg %p208
        $region42: #{tpu_custom_call.1} parent=11 // pred_check_branch
          %410 = sbr.rel (%p408) target = $region44
        $region43: #{tpu_custom_call.1} parent=11 // pred_region
          _
        $region44: #{tpu_custom_call.1} parent=11 // pred_fallthru
          _
        // Predicated region
        $region45: #{tpu_custom_call.1} parent=11 // pred_check
          %p411 = pneg %p229
        $region46: #{tpu_custom_call.1} parent=11 // pred_check_branch
          %413 = sbr.rel (%p411) target = $region48
        $region47: #{tpu_custom_call.1} parent=11 // pred_region
          _
        $region48: #{tpu_custom_call.1} parent=11 // pred_fallthru
          _
        // Predicated region
        $region49: #{tpu_custom_call.1} parent=11 // pred_check
          %p414 = pneg %p250
        $region50: #{tpu_custom_call.1} parent=11 // pred_check_branch
          %416 = sbr.rel (%p414) target = $region52
        $region51: #{tpu_custom_call.1} parent=11 // pred_region
          _
        $region52: #{tpu_custom_call.1} parent=11 // pred_fallthru
          _
        // Predicated region
        $region53: #{tpu_custom_call.1} parent=11 // pred_check
          %p417 = pneg %p271
        $region54: #{tpu_custom_call.1} parent=11 // pred_check_branch
          %419 = sbr.rel (%p417) target = $region56
        $region55: #{tpu_custom_call.1} parent=11 // pred_region
          _
        $region56: #{tpu_custom_call.1} parent=11 // pred_fallthru
          _
        // Predicated region
        $region57: #{tpu_custom_call.1} parent=11 // pred_check
          %p420 = pneg %p292
        $region58: #{tpu_custom_call.1} parent=11 // pred_check_branch
          %422 = sbr.rel (%p420) target = $region60
        $region59: #{tpu_custom_call.1} parent=11 // pred_region
          _
        $region60: #{tpu_custom_call.1} parent=11 // pred_fallthru
          _
        // Predicated region
        $region61: #{tpu_custom_call.1} parent=11 // pred_check
          %p423 = pneg %p313
        $region62: #{tpu_custom_call.1} parent=11 // pred_check_branch
          %425 = sbr.rel (%p423) target = $region64
        $region63: #{tpu_custom_call.1} parent=11 // pred_region
          _
        $region64: #{tpu_custom_call.1} parent=11 // pred_fallthru
          _
      $region12: #{tpu_custom_call.1} parent=5 // pred_fallthru
        _
      %p426 = scmp.lt.s32.totalorder %s23, 4
      // Predicated region
      $region65: #{tpu_custom_call.1} parent=5 // pred_check
        %p427 = pneg %p426
      $region66: #{tpu_custom_call.1} parent=5 // pred_check_branch
        %429 = sbr.rel (%p427) target = $region68
      $region67: #{tpu_custom_call.1} parent=5 // pred_region
        _
      $region68: #{tpu_custom_call.1} parent=5 // pred_fallthru
        _
      %p430 = scmp.le.s32.totalorder 1, %s23
      %p431 = scmp.lt.s32.totalorder %s23, 5
      %p432 = pnand %p430, %p431
      %p433 = pneg %p432
      // Predicated region
      $region69: #{tpu_custom_call.1} parent=5 // pred_check
        _
      $region70: #{tpu_custom_call.1} parent=5 // pred_check_branch
        %435 = sbr.rel (%p432) target = $region72
      $region71: #{tpu_custom_call.1} parent=5 // pred_region
        %s436 = ssub.s32 %s23, 1
        %s437 = smul.u32 2, %s32
        %p438 = scmp.lt.s32.totalorder %s437, 1
        %s439 = scalar_select %p438, %s437, 1
        %s440 = smul.addr %s439, 2
        %s441 = smul.addr %s440, 8
        %s442 = scalar_lea.vmem %s0, %s441
        %p443 = pneg %p61
        %p444 = pneg %p58
        %p445 = pneg %p82
        %p446 = pneg %p79
        %p447 = pneg %p103
        %p448 = pneg %p100
        %p449 = pneg %p124
        %p450 = pneg %p121
        %p451 = pneg %p145
        %p452 = pneg %p142
        %p453 = pneg %p166
        %p454 = pneg %p163
        %p455 = pneg %p187
        %p456 = pneg %p184
        %p457 = pneg %p208
        %p458 = pneg %p205
        %p459 = pneg %p229
        %p460 = pneg %p226
        %p461 = pneg %p250
        %p462 = pneg %p247
        %p463 = pneg %p271
        %p464 = pneg %p268
        %p465 = pneg %p292
        %p466 = pneg %p289
        %p467 = pneg %p313
        %p468 = pneg %p310
        %p469 = pneg %p339
        %p470 = pneg %p336
        %p471 = pneg %p365
        %p472 = pneg %p362
        %s473 = smul.u32 2, %s32
        %p474 = scmp.lt.s32.totalorder %s473, 1
        %s475 = scalar_select %p474, %s473, 1
        %s476 = smul.addr %s475, 2
        %s477 = smul.addr %s476, 8
        %s478 = scalar_lea.vmem %s0, %s477
        %s479 = smul.u32 2, %s32
        %s480 = smul.u32 2, %s32
        %s481 = smul.u32 2, %s32
        %p487 = scmp.eq.s32.totalorder %s33, 0
        // Predicated region
        $region73: #{tpu_custom_call.1} parent=71 // pred_check
          %p488 = pneg %p487
        $region74: #{tpu_custom_call.1} parent=71 // pred_check_branch
          %490 = sbr.rel (%p488) target = $region76
        $region75: #{tpu_custom_call.1} parent=71 // pred_region
          %v491 = vld [vmem:[%s478] sm:$0xff]
          %v492 = vld [vmem:[%s478 + $0x8] sm:$0xff]
          %v493 = vld [vmem:[%s478 + $0x10] sm:$0xff]
          %v494 = vld [vmem:[%s478 + $0x18] sm:$0xff]
          %v495 = vld [vmem:[%s1] sm:$0x1]
          %v496 = vld [vmem:[%s2] sm:$0x1]
          %vm497 = vcmask 523264
          %v498 = vsel %vm497, %v491, 0.0
          %499 = vadd.xlane.f32.xlu0 %v498
          %v500 = vpop.xlane.xlu0 %499
          %v501 = vsel %vm497, %v492, 0.0
          %502 = vadd.xlane.f32.xlu0 %v501
          %v503 = vpop.xlane.xlu0 %502
          %v504 = vsel %vm497, %v493, 0.0
          %505 = vadd.xlane.f32.xlu0 %v504
          %v506 = vpop.xlane.xlu0 %505
          %v507 = vsel %vm497, %v494, 0.0
          %508 = vadd.xlane.f32.xlu0 %v507
          %v509 = vpop.xlane.xlu0 %508
          %v510 = vrcp.pop 64.0
          %v511 = vmul.f32 %v500, %v510
          %v512 = vmul.f32 %v503, %v510
          %v513 = vmul.f32 %v506, %v510
          %v514 = vmul.f32 %v509, %v510
          %v515 = vsub.f32 %v491, %v511
          %v516 = vsub.f32 %v492, %v512
          %v517 = vsub.f32 %v493, %v513
          %v518 = vsub.f32 %v494, %v514
          %v519 = vmul.f32 %v515, %v515
          %v520 = vmul.f32 %v516, %v516
          %v521 = vmul.f32 %v517, %v517
          %v522 = vmul.f32 %v518, %v518
          %v523 = vsel %vm497, %v519, 0.0
          %524 = vadd.xlane.f32.xlu0 %v523
          %v525 = vpop.xlane.xlu0 %524
          %v526 = vsel %vm497, %v520, 0.0
          %527 = vadd.xlane.f32.xlu0 %v526
          %v528 = vpop.xlane.xlu0 %527
          %v529 = vsel %vm497, %v521, 0.0
          %530 = vadd.xlane.f32.xlu0 %v529
          %v531 = vpop.xlane.xlu0 %530
          %v532 = vsel %vm497, %v522, 0.0
          %533 = vadd.xlane.f32.xlu0 %v532
          %v534 = vpop.xlane.xlu0 %533
          %v535 = vmul.f32 %v525, %v510
          %v536 = vmul.f32 %v528, %v510
          %v537 = vmul.f32 %v531, %v510
          %v538 = vmul.f32 %v534, %v510
          %v539 = vadd.f32 %v535, 1e-05
          %v540 = vadd.f32 %v536, 1e-05
          %v541 = vadd.f32 %v537, 1e-05
          %v542 = vadd.f32 %v538, 1e-05
          %v543 = vrsqrt.pop %v539
          %v544 = vrsqrt.pop %v540
          %v545 = vrsqrt.pop %v541
          %v546 = vrsqrt.pop %v542
          %v547 = vmul.f32 %v515, %v543
          %v548 = vmul.f32 %v516, %v544
          %v549 = vmul.f32 %v517, %v545
          %v550 = vmul.f32 %v518, %v546
          %v552 = vlaneseq
          %v553 = vshrl.u32 %v552, 7
          %v554 = vsub.s32 0, %v553
          %v555 = vrot.slane %v495, %v554
          %v557 = vmul.f32 %v547, %v555
          %v558 = vmul.f32 %v548, %v555
          %v559 = vmul.f32 %v549, %v555
          %v560 = vmul.f32 %v550, %v555
          %v562 = vlaneseq
          %v563 = vshrl.u32 %v562, 7
          %v564 = vsub.s32 0, %v563
          %v565 = vrot.slane %v496, %v564
          %v567 = vadd.f32 %v557, %v565
          %v568 = vadd.f32 %v558, %v565
          %v569 = vadd.f32 %v559, %v565
          %v570 = vadd.f32 %v560, %v565
          %v571 = vpack.c.bf16 %v568, %v567
          %v572 = vpack.c.bf16 %v570, %v569
          %v573 = vld [vmem:[%s3] sm:$0xff]
          %v574 = vld [vmem:[%s3 + $0x8] sm:$0xff]
          %v575 = vld [vmem:[%s3 + $0x10] sm:$0xff]
          %v576 = vld [vmem:[%s3 + $0x18] sm:$0xff]
          %v577 = vld [vmem:[%s3 + $0x20] sm:$0xff]
          %v578 = vld [vmem:[%s3 + $0x28] sm:$0xff]
          %v579 = vld [vmem:[%s3 + $0x30] sm:$0xff]
          %v580 = vld [vmem:[%s3 + $0x38] sm:$0xff]
          %v589 = vunpack.c.l.b16 %v573
          %v590 = vunpack.c.h.b16 %v573
          %v591 = vunpack.c.l.b16 %v574
          %v592 = vunpack.c.h.b16 %v574
          %v593 = vunpack.c.l.b16 %v575
          %v594 = vunpack.c.h.b16 %v575
          %v595 = vunpack.c.l.b16 %v576
          %v596 = vunpack.c.h.b16 %v576
          %v597 = vunpack.c.l.b16 %v577
          %v598 = vunpack.c.h.b16 %v577
          %v599 = vunpack.c.l.b16 %v578
          %v600 = vunpack.c.h.b16 %v578
          %v601 = vunpack.c.l.b16 %v579
          %v602 = vunpack.c.h.b16 %v579
          %v603 = vunpack.c.l.b16 %v580
          %v604 = vunpack.c.h.b16 %v580
          %v605 = vpack.c.b16 %v591, %v589
          %v606 = vpack.c.b16 %v592, %v590
          %v607 = vpack.c.b16 %v595, %v593
          %v608 = vpack.c.b16 %v596, %v594
          %v609 = vpack.c.b16 %v599, %v597
          %v610 = vpack.c.b16 %v600, %v598
          %v611 = vpack.c.b16 %v603, %v601
          %v612 = vpack.c.b16 %v604, %v602
          %v622 = vsel %vm497, %v571, 0
          %v625 = vsel %vm497, %v572, 0
          %627 = vmatprep.subr.bf16.mxu0 0
          %628 = vmatpush1.bf16.msra.mxu0 0
          %629 = vmatprep.subr.bf16.mxu0 0
          %630 = vmatpush1.bf16.msra.mxu0 0
          %631 = vmatprep.subr.bf16.mxu0 0
          %632 = vmatpush1.bf16.msra.mxu0 0
          %633 = vmatprep.subr.bf16.mxu0 0
          %634 = vmatpush1.bf16.msra.mxu0 0
          %635 = vmatprep.subr.bf16.mxu0 %v612
          %636 = vmatpush1.bf16.msra.mxu0 %v611
          %637 = vmatprep.subr.bf16.mxu0 %v610
          %638 = vmatpush1.bf16.msra.mxu0 %v609
          %639 = vmatprep.subr.bf16.mxu0 %v608
          %640 = vmatpush1.bf16.msra.mxu0 %v607
          %641 = vmatprep.subr.bf16.mxu0 %v606
          %642 = vmatpush1.bf16.msra.mxu0 %v605
          %643 = vmatprep.subr.bf16.mxu0 0
          %644 = vmatpush2.bf16.msra.mxu0 0
          %645 = vmatprep.subr.bf16.mxu0 0
          %646 = vmatpush2.bf16.msra.mxu0 0
          %647 = vmatprep.subr.bf16.mxu0 0
          %648 = vmatpush2.bf16.msra.mxu0 0
          %649 = vmatprep.subr.bf16.mxu0 0
          %650 = vmatpush2.bf16.msra.mxu0 0
          %651 = vmatprep.subr.bf16.mxu0 0
          %652 = vmatpush2.bf16.msra.mxu0 0
          %653 = vmatprep.subr.bf16.mxu0 0
          %654 = vmatpush2.bf16.msra.mxu0 0
          %655 = vmatprep.subr.bf16.mxu0 0
          %656 = vmatpush2.bf16.msra.mxu0 0
          %657 = vmatprep.subr.bf16.mxu0 0
          %658 = vmatpush2.bf16.msra.mxu0 0
          %659 = vmatprep.mubr.bf16.mxu0 0
          %660 = vmatmul.mubr.bf16.gmra.mxu0 %v622
          %v661 = vpop.f32.mrf.mxu0
          %v662 = vadd.f32 0.0, %v661
          %v663 = vpop.f32.mrf.mxu0
          %v664 = vadd.f32 0.0, %v663
          %v665 = vpop.f32.mrf.mxu0
          %v666 = vadd.f32 0.0, %v665
          %v667 = vpop.f32.mrf.mxu0
          %v668 = vadd.f32 0.0, %v667
          %669 = vmatprep.mubr.bf16.mxu0 0
          %670 = vmatmul.mubr.bf16.gmra.mxu0 %v625
          %v671 = vpop.f32.mrf.mxu0
          %v672 = vadd.f32 0.0, %v671
          %v673 = vpop.f32.mrf.mxu0
          %v674 = vadd.f32 0.0, %v673
          %v675 = vpop.f32.mrf.mxu0
          %v676 = vadd.f32 0.0, %v675
          %v677 = vpop.f32.mrf.mxu0
          %v678 = vadd.f32 0.0, %v677
          %679 = vdwg.mxu0
          %v680 = vpack.c.bf16 %v666, %v662
          %v681 = vpack.c.bf16 %v668, %v664
          %v682 = vpack.c.bf16 %v676, %v672
          %v683 = vpack.c.bf16 %v678, %v674
          %685 = vrot.lane.b32.xlu0 %v680, 64
          %v686 = vpop.permute.xlu0 %685
          %vm687 = vcmask 130048
          %v689 = vsel %vm687, %v680, 0
          %v692 = vsel %vm687, %v686, 0
          %694 = vmatprep.subr.bf16.mxu0 0
          %695 = vmatpush1.bf16.xpose.msra.mxu0 0
          %696 = vmatprep.subr.bf16.mxu0 0
          %697 = vmatpush1.bf16.xpose.msra.mxu0 0
          %698 = vmatprep.subr.bf16.mxu0 0
          %699 = vmatpush1.bf16.xpose.msra.mxu0 0
          %700 = vmatprep.subr.bf16.mxu0 0
          %701 = vmatpush1.bf16.xpose.msra.mxu0 0
          %702 = vmatprep.subr.bf16.mxu0 0
          %703 = vmatpush1.bf16.xpose.msra.mxu0 0
          %704 = vmatprep.subr.bf16.mxu0 0
          %705 = vmatpush1.bf16.xpose.msra.mxu0 0
          %706 = vmatprep.subr.bf16.mxu0 0
          %707 = vmatpush1.bf16.xpose.msra.mxu0 0
          %708 = vmatprep.subr.bf16.mxu0 0
          %709 = vmatpush1.bf16.xpose.msra.mxu0 %v692
          %710 = vmatprep.subr.bf16.mxu0 0
          %711 = vmatpush2.bf16.xpose.msra.mxu0 0
          %712 = vmatprep.subr.bf16.mxu0 0
          %713 = vmatpush2.bf16.xpose.msra.mxu0 0
          %714 = vmatprep.subr.bf16.mxu0 0
          %715 = vmatpush2.bf16.xpose.msra.mxu0 0
          %716 = vmatprep.subr.bf16.mxu0 0
          %717 = vmatpush2.bf16.xpose.msra.mxu0 0
          %718 = vmatprep.subr.bf16.mxu0 0
          %719 = vmatpush2.bf16.xpose.msra.mxu0 0
          %720 = vmatprep.subr.bf16.mxu0 0
          %721 = vmatpush2.bf16.xpose.msra.mxu0 0
          %722 = vmatprep.subr.bf16.mxu0 0
          %723 = vmatpush2.bf16.xpose.msra.mxu0 0
          %724 = vmatprep.subr.bf16.mxu0 0
          %725 = vmatpush2.bf16.xpose.msra.mxu0 0
          %726 = vmatprep.mubr.bf16.mxu0 0
          %727 = vmatmul.mubr.bf16.gmra.mxu0 %v689
          %v728 = vpop.f32.mrf.mxu0
          %v729 = vadd.f32 0.0, %v728
          %v730 = vpop.f32.mrf.mxu0
          %v731 = vpop.f32.mrf.mxu0
          %v732 = vadd.f32 0.0, %v731
          %v733 = vpop.f32.mrf.mxu0
          %734 = vdwg.mxu0
          %736 = vrot.lane.b32.xlu0 %v682, 64
          %v737 = vpop.permute.xlu0 %736
          %v739 = vsel %vm687, %v682, 0
          %v742 = vsel %vm687, %v737, 0
          %744 = vmatprep.subr.bf16.mxu0 0
          %745 = vmatpush1.bf16.xpose.msra.mxu0 0
          %746 = vmatprep.subr.bf16.mxu0 0
          %747 = vmatpush1.bf16.xpose.msra.mxu0 0
          %748 = vmatprep.subr.bf16.mxu0 0
          %749 = vmatpush1.bf16.xpose.msra.mxu0 0
          %750 = vmatprep.subr.bf16.mxu0 0
          %751 = vmatpush1.bf16.xpose.msra.mxu0 0
          %752 = vmatprep.subr.bf16.mxu0 0
          %753 = vmatpush1.bf16.xpose.msra.mxu0 0
          %754 = vmatprep.subr.bf16.mxu0 0
          %755 = vmatpush1.bf16.xpose.msra.mxu0 0
          %756 = vmatprep.subr.bf16.mxu0 0
          %757 = vmatpush1.bf16.xpose.msra.mxu0 0
          %758 = vmatprep.subr.bf16.mxu0 0
          %759 = vmatpush1.bf16.xpose.msra.mxu0 %v742
          %760 = vmatprep.subr.bf16.mxu0 0
          %761 = vmatpush2.bf16.xpose.msra.mxu0 0
          %762 = vmatprep.subr.bf16.mxu0 0
          %763 = vmatpush2.bf16.xpose.msra.mxu0 0
          %764 = vmatprep.subr.bf16.mxu0 0
          %765 = vmatpush2.bf16.xpose.msra.mxu0 0
          %766 = vmatprep.subr.bf16.mxu0 0
          %767 = vmatpush2.bf16.xpose.msra.mxu0 0
          %768 = vmatprep.subr.bf16.mxu0 0
          %769 = vmatpush2.bf16.xpose.msra.mxu0 0
          %770 = vmatprep.subr.bf16.mxu0 0
          %771 = vmatpush2.bf16.xpose.msra.mxu0 0
          %772 = vmatprep.subr.bf16.mxu0 0
          %773 = vmatpush2.bf16.xpose.msra.mxu0 0
          %774 = vmatprep.subr.bf16.mxu0 0
          %775 = vmatpush2.bf16.xpose.msra.mxu0 0
          %776 = vmatprep.mubr.bf16.mxu0 0
          %777 = vmatmul.mubr.bf16.gmra.mxu0 %v739
          %v778 = vpop.f32.mrf.mxu0
          %v779 = vadd.f32 0.0, %v778
          %v780 = vpop.f32.mrf.mxu0
          %v781 = vpop.f32.mrf.mxu0
          %v782 = vadd.f32 0.0, %v781
          %v783 = vpop.f32.mrf.mxu0
          %784 = vdwg.mxu0
          %v785 = vsel %vm687, %v729, -inf
          %786 = vmax.xlane.f32.xlu0 %v785
          %v787 = vpop.xlane.xlu0 %786
          %v788 = vsel %vm687, %v732, -inf
          %789 = vmax.xlane.f32.xlu0 %v788
          %v790 = vpop.xlane.xlu0 %789
          %v791 = vsel %vm687, %v779, -inf
          %792 = vmax.xlane.f32.xlu0 %v791
          %v793 = vpop.xlane.xlu0 %792
          %v794 = vsel %vm687, %v782, -inf
          %795 = vmax.xlane.f32.xlu0 %v794
          %v796 = vpop.xlane.xlu0 %795
          %v797 = vsub.f32 %v729, %v787
          %v798 = vsub.f32 %v732, %v790
          %v799 = vsub.f32 %v779, %v793
          %v800 = vsub.f32 %v782, %v796
          %v801 = vmul.f32 %v797, 1.442695
          %v802 = vpow.pop %v801
          %v803 = vmul.f32 %v798, 1.442695
          %v804 = vpow.pop %v803
          %v805 = vmul.f32 %v799, 1.442695
          %v806 = vpow.pop %v805
          %v807 = vmul.f32 %v800, 1.442695
          %v808 = vpow.pop %v807
          %v809 = vsel %vm687, %v802, 0.0
          %810 = vadd.xlane.f32.xlu0 %v809
          %v811 = vpop.xlane.xlu0 %810
          %v812 = vsel %vm687, %v804, 0.0
          %813 = vadd.xlane.f32.xlu0 %v812
          %v814 = vpop.xlane.xlu0 %813
          %v815 = vsel %vm687, %v806, 0.0
          %816 = vadd.xlane.f32.xlu0 %v815
          %v817 = vpop.xlane.xlu0 %816
          %v818 = vsel %vm687, %v808, 0.0
          %819 = vadd.xlane.f32.xlu0 %v818
          %v820 = vpop.xlane.xlu0 %819
          %v821 = vrcp.pop %v811
          %v822 = vrcp.pop %v814
          %v823 = vrcp.pop %v817
          %v824 = vrcp.pop %v820
          %v825 = vmul.f32 %v802, %v821
          %v826 = vmul.f32 %v804, %v822
          %v827 = vmul.f32 %v806, %v823
          %v828 = vmul.f32 %v808, %v824
          %v829 = vpack.c.bf16 %v826, %v825
          %v830 = vpack.c.bf16 %v828, %v827
          %v832 = vsel %vm687, %v829, 0
          %834 = vmatprep.subr.bf16.mxu0 0
          %835 = vmatpush1.bf16.msra.mxu0 0
          %836 = vmatprep.subr.bf16.mxu0 0
          %837 = vmatpush1.bf16.msra.mxu0 0
          %838 = vmatprep.subr.bf16.mxu0 0
          %839 = vmatpush1.bf16.msra.mxu0 0
          %840 = vmatprep.subr.bf16.mxu0 0
          %841 = vmatpush1.bf16.msra.mxu0 0
          %842 = vmatprep.subr.bf16.mxu0 0
          %843 = vmatpush1.bf16.msra.mxu0 0
          %844 = vmatprep.subr.bf16.mxu0 0
          %845 = vmatpush1.bf16.msra.mxu0 0
          %846 = vmatprep.subr.bf16.mxu0 0
          %847 = vmatpush1.bf16.msra.mxu0 0
          %848 = vmatprep.subr.bf16.mxu0 0
          %849 = vmatpush1.bf16.msra.mxu0 %v681
          %850 = vmatprep.subr.bf16.mxu0 0
          %851 = vmatpush2.bf16.msra.mxu0 0
          %852 = vmatprep.subr.bf16.mxu0 0
          %853 = vmatpush2.bf16.msra.mxu0 0
          %854 = vmatprep.subr.bf16.mxu0 0
          %855 = vmatpush2.bf16.msra.mxu0 0
          %856 = vmatprep.subr.bf16.mxu0 0
          %857 = vmatpush2.bf16.msra.mxu0 0
          %858 = vmatprep.subr.bf16.mxu0 0
          %859 = vmatpush2.bf16.msra.mxu0 0
          %860 = vmatprep.subr.bf16.mxu0 0
          %861 = vmatpush2.bf16.msra.mxu0 0
          %862 = vmatprep.subr.bf16.mxu0 0
          %863 = vmatpush2.bf16.msra.mxu0 0
          %864 = vmatprep.subr.bf16.mxu0 0
          %865 = vmatpush2.bf16.msra.mxu0 0
          %866 = vmatprep.mubr.bf16.mxu0 0
          %867 = vmatmul.mubr.bf16.gmra.mxu0 %v832
          %v868 = vpop.f32.mrf.mxu0
          %v869 = vadd.f32 0.0, %v868
          %v870 = vpop.f32.mrf.mxu0
          %v871 = vpop.f32.mrf.mxu0
          %v872 = vadd.f32 0.0, %v871
          %v873 = vpop.f32.mrf.mxu0
          %874 = vdwg.mxu0
          %v876 = vsel %vm687, %v830, 0
          %878 = vmatprep.subr.bf16.mxu0 0
          %879 = vmatpush1.bf16.msra.mxu0 0
          %880 = vmatprep.subr.bf16.mxu0 0
          %881 = vmatpush1.bf16.msra.mxu0 0
          %882 = vmatprep.subr.bf16.mxu0 0
          %883 = vmatpush1.bf16.msra.mxu0 0
          %884 = vmatprep.subr.bf16.mxu0 0
          %885 = vmatpush1.bf16.msra.mxu0 0
          %886 = vmatprep.subr.bf16.mxu0 0
          %887 = vmatpush1.bf16.msra.mxu0 0
          %888 = vmatprep.subr.bf16.mxu0 0
          %889 = vmatpush1.bf16.msra.mxu0 0
          %890 = vmatprep.subr.bf16.mxu0 0
          %891 = vmatpush1.bf16.msra.mxu0 0
          %892 = vmatprep.subr.bf16.mxu0 0
          %893 = vmatpush1.bf16.msra.mxu0 %v683
          %894 = vmatprep.subr.bf16.mxu0 0
          %895 = vmatpush2.bf16.msra.mxu0 0
          %896 = vmatprep.subr.bf16.mxu0 0
          %897 = vmatpush2.bf16.msra.mxu0 0
          %898 = vmatprep.subr.bf16.mxu0 0
          %899 = vmatpush2.bf16.msra.mxu0 0
          %900 = vmatprep.subr.bf16.mxu0 0
          %901 = vmatpush2.bf16.msra.mxu0 0
          %902 = vmatprep.subr.bf16.mxu0 0
          %903 = vmatpush2.bf16.msra.mxu0 0
          %904 = vmatprep.subr.bf16.mxu0 0
          %905 = vmatpush2.bf16.msra.mxu0 0
          %906 = vmatprep.subr.bf16.mxu0 0
          %907 = vmatpush2.bf16.msra.mxu0 0
          %908 = vmatprep.subr.bf16.mxu0 0
          %909 = vmatpush2.bf16.msra.mxu0 0
          %910 = vmatprep.mubr.bf16.mxu0 0
          %911 = vmatmul.mubr.bf16.gmra.mxu0 %v876
          %v912 = vpop.f32.mrf.mxu0
          %v913 = vadd.f32 0.0, %v912
          %v914 = vpop.f32.mrf.mxu0
          %v915 = vpop.f32.mrf.mxu0
          %v916 = vadd.f32 0.0, %v915
          %v917 = vpop.f32.mrf.mxu0
          %918 = vdwg.mxu0
          %919 = vst.msk [vmem:[#allocation5] sm:$0xff] %vm687, %v869
          %920 = vst.msk [vmem:[#allocation5 + $0x8] sm:$0xff] %vm687, %v872
          %921 = vst.msk [vmem:[#allocation5 + $0x10] sm:$0xff] %vm687, %v913
          %922 = vst.msk [vmem:[#allocation5 + $0x18] sm:$0xff] %vm687, %v916
          %923 = vrot.lane.b32.xlu0 %v680, 112
          %v924 = vpop.permute.xlu0 %923
          %925 = vrot.lane.b32.xlu0 %v680, 48
          %v926 = vpop.permute.xlu0 %925
          %v928 = vsel %vm687, %v924, 0
          %v931 = vsel %vm687, %v926, 0
          %933 = vmatprep.subr.bf16.mxu0 0
          %934 = vmatpush1.bf16.xpose.msra.mxu0 0
          %935 = vmatprep.subr.bf16.mxu0 0
          %936 = vmatpush1.bf16.xpose.msra.mxu0 0
          %937 = vmatprep.subr.bf16.mxu0 0
          %938 = vmatpush1.bf16.xpose.msra.mxu0 0
          %939 = vmatprep.subr.bf16.mxu0 0
          %940 = vmatpush1.bf16.xpose.msra.mxu0 0
          %941 = vmatprep.subr.bf16.mxu0 0
          %942 = vmatpush1.bf16.xpose.msra.mxu0 0
          %943 = vmatprep.subr.bf16.mxu0 0
          %944 = vmatpush1.bf16.xpose.msra.mxu0 0
          %945 = vmatprep.subr.bf16.mxu0 0
          %946 = vmatpush1.bf16.xpose.msra.mxu0 0
          %947 = vmatprep.subr.bf16.mxu0 0
          %948 = vmatpush1.bf16.xpose.msra.mxu0 %v931
          %949 = vmatprep.subr.bf16.mxu0 0
          %950 = vmatpush2.bf16.xpose.msra.mxu0 0
          %951 = vmatprep.subr.bf16.mxu0 0
          %952 = vmatpush2.bf16.xpose.msra.mxu0 0
          %953 = vmatprep.subr.bf16.mxu0 0
          %954 = vmatpush2.bf16.xpose.msra.mxu0 0
          %955 = vmatprep.subr.bf16.mxu0 0
          %956 = vmatpush2.bf16.xpose.msra.mxu0 0
          %957 = vmatprep.subr.bf16.mxu0 0
          %958 = vmatpush2.bf16.xpose.msra.mxu0 0
          %959 = vmatprep.subr.bf16.mxu0 0
          %960 = vmatpush2.bf16.xpose.msra.mxu0 0
          %961 = vmatprep.subr.bf16.mxu0 0
          %962 = vmatpush2.bf16.xpose.msra.mxu0 0
          %963 = vmatprep.subr.bf16.mxu0 0
          %964 = vmatpush2.bf16.xpose.msra.mxu0 0
          %965 = vmatprep.mubr.bf16.mxu0 0
          %966 = vmatmul.mubr.bf16.gmra.mxu0 %v928
          %v967 = vpop.f32.mrf.mxu0
          %v968 = vadd.f32 0.0, %v967
          %v969 = vpop.f32.mrf.mxu0
          %v970 = vpop.f32.mrf.mxu0
          %v971 = vadd.f32 0.0, %v970
          %v972 = vpop.f32.mrf.mxu0
          %973 = vdwg.mxu0
          %974 = vrot.lane.b32.xlu0 %v682, 112
          %v975 = vpop.permute.xlu0 %974
          %976 = vrot.lane.b32.xlu0 %v682, 48
          %v977 = vpop.permute.xlu0 %976
          %v979 = vsel %vm687, %v975, 0
          %v982 = vsel %vm687, %v977, 0
          %984 = vmatprep.subr.bf16.mxu0 0
          %985 = vmatpush1.bf16.xpose.msra.mxu0 0
          %986 = vmatprep.subr.bf16.mxu0 0
          %987 = vmatpush1.bf16.xpose.msra.mxu0 0
          %988 = vmatprep.subr.bf16.mxu0 0
          %989 = vmatpush1.bf16.xpose.msra.mxu0 0
          %990 = vmatprep.subr.bf16.mxu0 0
          %991 = vmatpush1.bf16.xpose.msra.mxu0 0
          %992 = vmatprep.subr.bf16.mxu0 0
          %993 = vmatpush1.bf16.xpose.msra.mxu0 0
          %994 = vmatprep.subr.bf16.mxu0 0
          %995 = vmatpush1.bf16.xpose.msra.mxu0 0
          %996 = vmatprep.subr.bf16.mxu0 0
          %997 = vmatpush1.bf16.xpose.msra.mxu0 0
          %998 = vmatprep.subr.bf16.mxu0 0
          %999 = vmatpush1.bf16.xpose.msra.mxu0 %v982
          %1000 = vmatprep.subr.bf16.mxu0 0
          %1001 = vmatpush2.bf16.xpose.msra.mxu0 0
          %1002 = vmatprep.subr.bf16.mxu0 0
          %1003 = vmatpush2.bf16.xpose.msra.mxu0 0
          %1004 = vmatprep.subr.bf16.mxu0 0
          %1005 = vmatpush2.bf16.xpose.msra.mxu0 0
          %1006 = vmatprep.subr.bf16.mxu0 0
          %1007 = vmatpush2.bf16.xpose.msra.mxu0 0
          %1008 = vmatprep.subr.bf16.mxu0 0
          %1009 = vmatpush2.bf16.xpose.msra.mxu0 0
          %1010 = vmatprep.subr.bf16.mxu0 0
          %1011 = vmatpush2.bf16.xpose.msra.mxu0 0
          %1012 = vmatprep.subr.bf16.mxu0 0
          %1013 = vmatpush2.bf16.xpose.msra.mxu0 0
          %1014 = vmatprep.subr.bf16.mxu0 0
          %1015 = vmatpush2.bf16.xpose.msra.mxu0 0
          %1016 = vmatprep.mubr.bf16.mxu0 0
          %1017 = vmatmul.mubr.bf16.gmra.mxu0 %v979
          %v1018 = vpop.f32.mrf.mxu0
          %v1019 = vadd.f32 0.0, %v1018
          %v1020 = vpop.f32.mrf.mxu0
          %v1021 = vpop.f32.mrf.mxu0
          %v1022 = vadd.f32 0.0, %v1021
          %v1023 = vpop.f32.mrf.mxu0
          %1024 = vdwg.mxu0
          %v1025 = vsel %vm687, %v968, -inf
          %1026 = vmax.xlane.f32.xlu0 %v1025
          %v1027 = vpop.xlane.xlu0 %1026
          %v1028 = vsel %vm687, %v971, -inf
          %1029 = vmax.xlane.f32.xlu0 %v1028
          %v1030 = vpop.xlane.xlu0 %1029
          %v1031 = vsel %vm687, %v1019, -inf
          %1032 = vmax.xlane.f32.xlu0 %v1031
          %v1033 = vpop.xlane.xlu0 %1032
          %v1034 = vsel %vm687, %v1022, -inf
          %1035 = vmax.xlane.f32.xlu0 %v1034
          %v1036 = vpop.xlane.xlu0 %1035
          %v1037 = vsub.f32 %v968, %v1027
          %v1038 = vsub.f32 %v971, %v1030
          %v1039 = vsub.f32 %v1019, %v1033
          %v1040 = vsub.f32 %v1022, %v1036
          %v1041 = vmul.f32 %v1037, 1.442695
          %v1042 = vpow.pop %v1041
          %v1043 = vmul.f32 %v1038, 1.442695
          %v1044 = vpow.pop %v1043
          %v1045 = vmul.f32 %v1039, 1.442695
          %v1046 = vpow.pop %v1045
          %v1047 = vmul.f32 %v1040, 1.442695
          %v1048 = vpow.pop %v1047
          %v1049 = vsel %vm687, %v1042, 0.0
          %1050 = vadd.xlane.f32.xlu0 %v1049
          %v1051 = vpop.xlane.xlu0 %1050
          %v1052 = vsel %vm687, %v1044, 0.0
          %1053 = vadd.xlane.f32.xlu0 %v1052
          %v1054 = vpop.xlane.xlu0 %1053
          %v1055 = vsel %vm687, %v1046, 0.0
          %1056 = vadd.xlane.f32.xlu0 %v1055
          %v1057 = vpop.xlane.xlu0 %1056
          %v1058 = vsel %vm687, %v1048, 0.0
          %1059 = vadd.xlane.f32.xlu0 %v1058
          %v1060 = vpop.xlane.xlu0 %1059
          %v1061 = vrcp.pop %v1051
          %v1062 = vrcp.pop %v1054
          %v1063 = vrcp.pop %v1057
          %v1064 = vrcp.pop %v1060
          %v1065 = vmul.f32 %v1042, %v1061
          %v1066 = vmul.f32 %v1044, %v1062
          %v1067 = vmul.f32 %v1046, %v1063
          %v1068 = vmul.f32 %v1048, %v1064
          %v1069 = vpack.c.bf16 %v1066, %v1065
          %v1070 = vpack.c.bf16 %v1068, %v1067
          %1072 = vrot.lane.b32.xlu0 %v681, 112
          %v1073 = vpop.permute.xlu0 %1072
          %v1076 = vsel %vm687, %v1069, 0
          %1078 = vmatprep.subr.bf16.mxu0 0
          %1079 = vmatpush1.bf16.msra.mxu0 0
          %1080 = vmatprep.subr.bf16.mxu0 0
          %1081 = vmatpush1.bf16.msra.mxu0 0
          %1082 = vmatprep.subr.bf16.mxu0 0
          %1083 = vmatpush1.bf16.msra.mxu0 0
          %1084 = vmatprep.subr.bf16.mxu0 0
          %1085 = vmatpush1.bf16.msra.mxu0 0
          %1086 = vmatprep.subr.bf16.mxu0 0
          %1087 = vmatpush1.bf16.msra.mxu0 0
          %1088 = vmatprep.subr.bf16.mxu0 0
          %1089 = vmatpush1.bf16.msra.mxu0 0
          %1090 = vmatprep.subr.bf16.mxu0 0
          %1091 = vmatpush1.bf16.msra.mxu0 0
          %1092 = vmatprep.subr.bf16.mxu0 0
          %1093 = vmatpush1.bf16.msra.mxu0 %v1073
          %1094 = vmatprep.subr.bf16.mxu0 0
          %1095 = vmatpush2.bf16.msra.mxu0 0
          %1096 = vmatprep.subr.bf16.mxu0 0
          %1097 = vmatpush2.bf16.msra.mxu0 0
          %1098 = vmatprep.subr.bf16.mxu0 0
          %1099 = vmatpush2.bf16.msra.mxu0 0
          %1100 = vmatprep.subr.bf16.mxu0 0
          %1101 = vmatpush2.bf16.msra.mxu0 0
          %1102 = vmatprep.subr.bf16.mxu0 0
          %1103 = vmatpush2.bf16.msra.mxu0 0
          %1104 = vmatprep.subr.bf16.mxu0 0
          %1105 = vmatpush2.bf16.msra.mxu0 0
          %1106 = vmatprep.subr.bf16.mxu0 0
          %1107 = vmatpush2.bf16.msra.mxu0 0
          %1108 = vmatprep.subr.bf16.mxu0 0
          %1109 = vmatpush2.bf16.msra.mxu0 0
          %1110 = vmatprep.mubr.bf16.mxu0 0
          %1111 = vmatmul.mubr.bf16.gmra.mxu0 %v1076
          %v1112 = vpop.f32.mrf.mxu0
          %v1113 = vadd.f32 0.0, %v1112
          %v1114 = vpop.f32.mrf.mxu0
          %v1115 = vpop.f32.mrf.mxu0
          %v1116 = vadd.f32 0.0, %v1115
          %v1117 = vpop.f32.mrf.mxu0
          %1118 = vdwg.mxu0
          %1120 = vrot.lane.b32.xlu0 %v683, 112
          %v1121 = vpop.permute.xlu0 %1120
          %v1124 = vsel %vm687, %v1070, 0
          %1126 = vmatprep.subr.bf16.mxu0 0
          %1127 = vmatpush1.bf16.msra.mxu0 0
          %1128 = vmatprep.subr.bf16.mxu0 0
          %1129 = vmatpush1.bf16.msra.mxu0 0
          %1130 = vmatprep.subr.bf16.mxu0 0
          %1131 = vmatpush1.bf16.msra.mxu0 0
          %1132 = vmatprep.subr.bf16.mxu0 0
          %1133 = vmatpush1.bf16.msra.mxu0 0
          %1134 = vmatprep.subr.bf16.mxu0 0
          %1135 = vmatpush1.bf16.msra.mxu0 0
          %1136 = vmatprep.subr.bf16.mxu0 0
          %1137 = vmatpush1.bf16.msra.mxu0 0
          %1138 = vmatprep.subr.bf16.mxu0 0
          %1139 = vmatpush1.bf16.msra.mxu0 0
          %1140 = vmatprep.subr.bf16.mxu0 0
          %1141 = vmatpush1.bf16.msra.mxu0 %v1121
          %1142 = vmatprep.subr.bf16.mxu0 0
          %1143 = vmatpush2.bf16.msra.mxu0 0
          %1144 = vmatprep.subr.bf16.mxu0 0
          %1145 = vmatpush2.bf16.msra.mxu0 0
          %1146 = vmatprep.subr.bf16.mxu0 0
          %1147 = vmatpush2.bf16.msra.mxu0 0
          %1148 = vmatprep.subr.bf16.mxu0 0
          %1149 = vmatpush2.bf16.msra.mxu0 0
          %1150 = vmatprep.subr.bf16.mxu0 0
          %1151 = vmatpush2.bf16.msra.mxu0 0
          %1152 = vmatprep.subr.bf16.mxu0 0
          %1153 = vmatpush2.bf16.msra.mxu0 0
          %1154 = vmatprep.subr.bf16.mxu0 0
          %1155 = vmatpush2.bf16.msra.mxu0 0
          %1156 = vmatprep.subr.bf16.mxu0 0
          %1157 = vmatpush2.bf16.msra.mxu0 0
          %1158 = vmatprep.mubr.bf16.mxu0 0
          %1159 = vmatmul.mubr.bf16.gmra.mxu0 %v1124
          %v1160 = vpop.f32.mrf.mxu0
          %v1161 = vadd.f32 0.0, %v1160
          %v1162 = vpop.f32.mrf.mxu0
          %v1163 = vpop.f32.mrf.mxu0
          %v1164 = vadd.f32 0.0, %v1163
          %v1165 = vpop.f32.mrf.mxu0
          %1166 = vdwg.mxu0
          %1171 = vrot.lane.b32.xlu0 %v1113, 16
          %v1172 = vpop.permute.xlu0 %1171
          %1173 = vrot.lane.b32.xlu0 %v1116, 16
          %v1174 = vpop.permute.xlu0 %1173
          %1175 = vrot.lane.b32.xlu0 %v1161, 16
          %v1176 = vpop.permute.xlu0 %1175
          %1177 = vrot.lane.b32.xlu0 %v1164, 16
          %v1178 = vpop.permute.xlu0 %1177
          %vm1183 = vcmask 261248
          %1184 = vst.msk [vmem:[#allocation5] sm:$0xff] %vm1183, %v1172
          %1185 = vst.msk [vmem:[#allocation5 + $0x8] sm:$0xff] %vm1183, %v1174
          %1186 = vst.msk [vmem:[#allocation5 + $0x10] sm:$0xff] %vm1183, %v1176
          %1187 = vst.msk [vmem:[#allocation5 + $0x18] sm:$0xff] %vm1183, %v1178
          %1188 = vrot.lane.b32.xlu0 %v680, 96
          %v1189 = vpop.permute.xlu0 %1188
          %1190 = vrot.lane.b32.xlu0 %v680, 32
          %v1191 = vpop.permute.xlu0 %1190
          %v1193 = vsel %vm687, %v1189, 0
          %v1196 = vsel %vm687, %v1191, 0
          %1198 = vmatprep.subr.bf16.mxu0 0
          %1199 = vmatpush1.bf16.xpose.msra.mxu0 0
          %1200 = vmatprep.subr.bf16.mxu0 0
          %1201 = vmatpush1.bf16.xpose.msra.mxu0 0
          %1202 = vmatprep.subr.bf16.mxu0 0
          %1203 = vmatpush1.bf16.xpose.msra.mxu0 0
          %1204 = vmatprep.subr.bf16.mxu0 0
          %1205 = vmatpush1.bf16.xpose.msra.mxu0 0
          %1206 = vmatprep.subr.bf16.mxu0 0
          %1207 = vmatpush1.bf16.xpose.msra.mxu0 0
          %1208 = vmatprep.subr.bf16.mxu0 0
          %1209 = vmatpush1.bf16.xpose.msra.mxu0 0
          %1210 = vmatprep.subr.bf16.mxu0 0
          %1211 = vmatpush1.bf16.xpose.msra.mxu0 0
          %1212 = vmatprep.subr.bf16.mxu0 0
          %1213 = vmatpush1.bf16.xpose.msra.mxu0 %v1196
          %1214 = vmatprep.subr.bf16.mxu0 0
          %1215 = vmatpush2.bf16.xpose.msra.mxu0 0
          %1216 = vmatprep.subr.bf16.mxu0 0
          %1217 = vmatpush2.bf16.xpose.msra.mxu0 0
          %1218 = vmatprep.subr.bf16.mxu0 0
          %1219 = vmatpush2.bf16.xpose.msra.mxu0 0
          %1220 = vmatprep.subr.bf16.mxu0 0
          %1221 = vmatpush2.bf16.xpose.msra.mxu0 0
          %1222 = vmatprep.subr.bf16.mxu0 0
          %1223 = vmatpush2.bf16.xpose.msra.mxu0 0
          %1224 = vmatprep.subr.bf16.mxu0 0
          %1225 = vmatpush2.bf16.xpose.msra.mxu0 0
          %1226 = vmatprep.subr.bf16.mxu0 0
          %1227 = vmatpush2.bf16.xpose.msra.mxu0 0
          %1228 = vmatprep.subr.bf16.mxu0 0
          %1229 = vmatpush2.bf16.xpose.msra.mxu0 0
          %1230 = vmatprep.mubr.bf16.mxu0 0
          %1231 = vmatmul.mubr.bf16.gmra.mxu0 %v1193
          %v1232 = vpop.f32.mrf.mxu0
          %v1233 = vadd.f32 0.0, %v1232
          %v1234 = vpop.f32.mrf.mxu0
          %v1235 = vpop.f32.mrf.mxu0
          %v1236 = vadd.f32 0.0, %v1235
          %v1237 = vpop.f32.mrf.mxu0
          %1238 = vdwg.mxu0
          %1239 = vrot.lane.b32.xlu0 %v682, 96
          %v1240 = vpop.permute.xlu0 %1239
          %1241 = vrot.lane.b32.xlu0 %v682, 32
          %v1242 = vpop.permute.xlu0 %1241
          %v1244 = vsel %vm687, %v1240, 0
          %v1247 = vsel %vm687, %v1242, 0
          %1249 = vmatprep.subr.bf16.mxu0 0
          %1250 = vmatpush1.bf16.xpose.msra.mxu0 0
          %1251 = vmatprep.subr.bf16.mxu0 0
          %1252 = vmatpush1.bf16.xpose.msra.mxu0 0
          %1253 = vmatprep.subr.bf16.mxu0 0
          %1254 = vmatpush1.bf16.xpose.msra.mxu0 0
          %1255 = vmatprep.subr.bf16.mxu0 0
          %1256 = vmatpush1.bf16.xpose.msra.mxu0 0
          %1257 = vmatprep.subr.bf16.mxu0 0
          %1258 = vmatpush1.bf16.xpose.msra.mxu0 0
          %1259 = vmatprep.subr.bf16.mxu0 0
          %1260 = vmatpush1.bf16.xpose.msra.mxu0 0
          %1261 = vmatprep.subr.bf16.mxu0 0
          %1262 = vmatpush1.bf16.xpose.msra.mxu0 0
          %1263 = vmatprep.subr.bf16.mxu0 0
          %1264 = vmatpush1.bf16.xpose.msra.mxu0 %v1247
          %1265 = vmatprep.subr.bf16.mxu0 0
          %1266 = vmatpush2.bf16.xpose.msra.mxu0 0
          %1267 = vmatprep.subr.bf16.mxu0 0
          %1268 = vmatpush2.bf16.xpose.msra.mxu0 0
          %1269 = vmatprep.subr.bf16.mxu0 0
          %1270 = vmatpush2.bf16.xpose.msra.mxu0 0
          %1271 = vmatprep.subr.bf16.mxu0 0
          %1272 = vmatpush2.bf16.xpose.msra.mxu0 0
          %1273 = vmatprep.subr.bf16.mxu0 0
          %1274 = vmatpush2.bf16.xpose.msra.mxu0 0
          %1275 = vmatprep.subr.bf16.mxu0 0
          %1276 = vmatpush2.bf16.xpose.msra.mxu0 0
          %1277 = vmatprep.subr.bf16.mxu0 0
          %1278 = vmatpush2.bf16.xpose.msra.mxu0 0
          %1279 = vmatprep.subr.bf16.mxu0 0
          %1280 = vmatpush2.bf16.xpose.msra.mxu0 0
          %1281 = vmatprep.mubr.bf16.mxu0 0
          %1282 = vmatmul.mubr.bf16.gmra.mxu0 %v1244
          %v1283 = vpop.f32.mrf.mxu0
          %v1284 = vadd.f32 0.0, %v1283
          %v1285 = vpop.f32.mrf.mxu0
          %v1286 = vpop.f32.mrf.mxu0
          %v1287 = vadd.f32 0.0, %v1286
          %v1288 = vpop.f32.mrf.mxu0
          %1289 = vdwg.mxu0
          %v1290 = vsel %vm687, %v1233, -inf
          %1291 = vmax.xlane.f32.xlu0 %v1290
          %v1292 = vpop.xlane.xlu0 %1291
          %v1293 = vsel %vm687, %v1236, -inf
          %1294 = vmax.xlane.f32.xlu0 %v1293
          %v1295 = vpop.xlane.xlu0 %1294
          %v1296 = vsel %vm687, %v1284, -inf
          %1297 = vmax.xlane.f32.xlu0 %v1296
          %v1298 = vpop.xlane.xlu0 %1297
          %v1299 = vsel %vm687, %v1287, -inf
          %1300 = vmax.xlane.f32.xlu0 %v1299
          %v1301 = vpop.xlane.xlu0 %1300
          %v1302 = vsub.f32 %v1233, %v1292
          %v1303 = vsub.f32 %v1236, %v1295
          %v1304 = vsub.f32 %v1284, %v1298
          %v1305 = vsub.f32 %v1287, %v1301
          %v1306 = vmul.f32 %v1302, 1.442695
          %v1307 = vpow.pop %v1306
          %v1308 = vmul.f32 %v1303, 1.442695
          %v1309 = vpow.pop %v1308
          %v1310 = vmul.f32 %v1304, 1.442695
          %v1311 = vpow.pop %v1310
          %v1312 = vmul.f32 %v1305, 1.442695
          %v1313 = vpow.pop %v1312
          %v1314 = vsel %vm687, %v1307, 0.0
          %1315 = vadd.xlane.f32.xlu0 %v1314
          %v1316 = vpop.xlane.xlu0 %1315
          %v1317 = vsel %vm687, %v1309, 0.0
          %1318 = vadd.xlane.f32.xlu0 %v1317
          %v1319 = vpop.xlane.xlu0 %1318
          %v1320 = vsel %vm687, %v1311, 0.0
          %1321 = vadd.xlane.f32.xlu0 %v1320
          %v1322 = vpop.xlane.xlu0 %1321
          %v1323 = vsel %vm687, %v1313, 0.0
          %1324 = vadd.xlane.f32.xlu0 %v1323
          %v1325 = vpop.xlane.xlu0 %1324
          %v1326 = vrcp.pop %v1316
          %v1327 = vrcp.pop %v1319
          %v1328 = vrcp.pop %v1322
          %v1329 = vrcp.pop %v1325
          %v1330 = vmul.f32 %v1307, %v1326
          %v1331 = vmul.f32 %v1309, %v1327
          %v1332 = vmul.f32 %v1311, %v1328
          %v1333 = vmul.f32 %v1313, %v1329
          %v1334 = vpack.c.bf16 %v1331, %v1330
          %v1335 = vpack.c.bf16 %v1333, %v1332
          %1336 = vrot.lane.b32.xlu0 %v681, 96
          %v1337 = vpop.permute.xlu0 %1336
          %v1340 = vsel %vm687, %v1334, 0
          %1342 = vmatprep.subr.bf16.mxu0 0
          %1343 = vmatpush1.bf16.msra.mxu0 0
          %1344 = vmatprep.subr.bf16.mxu0 0
          %1345 = vmatpush1.bf16.msra.mxu0 0
          %1346 = vmatprep.subr.bf16.mxu0 0
          %1347 = vmatpush1.bf16.msra.mxu0 0
          %1348 = vmatprep.subr.bf16.mxu0 0
          %1349 = vmatpush1.bf16.msra.mxu0 0
          %1350 = vmatprep.subr.bf16.mxu0 0
          %1351 = vmatpush1.bf16.msra.mxu0 0
          %1352 = vmatprep.subr.bf16.mxu0 0
          %1353 = vmatpush1.bf16.msra.mxu0 0
          %1354 = vmatprep.subr.bf16.mxu0 0
          %1355 = vmatpush1.bf16.msra.mxu0 0
          %1356 = vmatprep.subr.bf16.mxu0 0
          %1357 = vmatpush1.bf16.msra.mxu0 %v1337
          %1358 = vmatprep.subr.bf16.mxu0 0
          %1359 = vmatpush2.bf16.msra.mxu0 0
          %1360 = vmatprep.subr.bf16.mxu0 0
          %1361 = vmatpush2.bf16.msra.mxu0 0
          %1362 = vmatprep.subr.bf16.mxu0 0
          %1363 = vmatpush2.bf16.msra.mxu0 0
          %1364 = vmatprep.subr.bf16.mxu0 0
          %1365 = vmatpush2.bf16.msra.mxu0 0
          %1366 = vmatprep.subr.bf16.mxu0 0
          %1367 = vmatpush2.bf16.msra.mxu0 0
          %1368 = vmatprep.subr.bf16.mxu0 0
          %1369 = vmatpush2.bf16.msra.mxu0 0
          %1370 = vmatprep.subr.bf16.mxu0 0
          %1371 = vmatpush2.bf16.msra.mxu0 0
          %1372 = vmatprep.subr.bf16.mxu0 0
          %1373 = vmatpush2.bf16.msra.mxu0 0
          %1374 = vmatprep.mubr.bf16.mxu0 0
          %1375 = vmatmul.mubr.bf16.gmra.mxu0 %v1340
          %v1376 = vpop.f32.mrf.mxu0
          %v1377 = vadd.f32 0.0, %v1376
          %v1378 = vpop.f32.mrf.mxu0
          %v1379 = vpop.f32.mrf.mxu0
          %v1380 = vadd.f32 0.0, %v1379
          %v1381 = vpop.f32.mrf.mxu0
          %1382 = vdwg.mxu0
          %1383 = vrot.lane.b32.xlu0 %v683, 96
          %v1384 = vpop.permute.xlu0 %1383
          %v1387 = vsel %vm687, %v1335, 0
          %1389 = vmatprep.subr.bf16.mxu0 0
          %1390 = vmatpush1.bf16.msra.mxu0 0
          %1391 = vmatprep.subr.bf16.mxu0 0
          %1392 = vmatpush1.bf16.msra.mxu0 0
          %1393 = vmatprep.subr.bf16.mxu0 0
          %1394 = vmatpush1.bf16.msra.mxu0 0
          %1395 = vmatprep.subr.bf16.mxu0 0
          %1396 = vmatpush1.bf16.msra.mxu0 0
          %1397 = vmatprep.subr.bf16.mxu0 0
          %1398 = vmatpush1.bf16.msra.mxu0 0
          %1399 = vmatprep.subr.bf16.mxu0 0
          %1400 = vmatpush1.bf16.msra.mxu0 0
          %1401 = vmatprep.subr.bf16.mxu0 0
          %1402 = vmatpush1.bf16.msra.mxu0 0
          %1403 = vmatprep.subr.bf16.mxu0 0
          %1404 = vmatpush1.bf16.msra.mxu0 %v1384
          %1405 = vmatprep.subr.bf16.mxu0 0
          %1406 = vmatpush2.bf16.msra.mxu0 0
          %1407 = vmatprep.subr.bf16.mxu0 0
          %1408 = vmatpush2.bf16.msra.mxu0 0
          %1409 = vmatprep.subr.bf16.mxu0 0
          %1410 = vmatpush2.bf16.msra.mxu0 0
          %1411 = vmatprep.subr.bf16.mxu0 0
          %1412 = vmatpush2.bf16.msra.mxu0 0
          %1413 = vmatprep.subr.bf16.mxu0 0
          %1414 = vmatpush2.bf16.msra.mxu0 0
          %1415 = vmatprep.subr.bf16.mxu0 0
          %1416 = vmatpush2.bf16.msra.mxu0 0
          %1417 = vmatprep.subr.bf16.mxu0 0
          %1418 = vmatpush2.bf16.msra.mxu0 0
          %1419 = vmatprep.subr.bf16.mxu0 0
          %1420 = vmatpush2.bf16.msra.mxu0 0
          %1421 = vmatprep.mubr.bf16.mxu0 0
          %1422 = vmatmul.mubr.bf16.gmra.mxu0 %v1387
          %v1423 = vpop.f32.mrf.mxu0
          %v1424 = vadd.f32 0.0, %v1423
          %v1425 = vpop.f32.mrf.mxu0
          %v1426 = vpop.f32.mrf.mxu0
          %v1427 = vadd.f32 0.0, %v1426
          %v1428 = vpop.f32.mrf.mxu0
          %1429 = vdwg.mxu0
          %1434 = vrot.lane.b32.xlu0 %v1377, 32
          %v1435 = vpop.permute.xlu0 %1434
          %1436 = vrot.lane.b32.xlu0 %v1380, 32
          %v1437 = vpop.permute.xlu0 %1436
          %1438 = vrot.lane.b32.xlu0 %v1424, 32
          %v1439 = vpop.permute.xlu0 %1438
          %1440 = vrot.lane.b32.xlu0 %v1427, 32
          %v1441 = vpop.permute.xlu0 %1440
          %vm1446 = vcmask 392448
          %1447 = vst.msk [vmem:[#allocation5] sm:$0xff] %vm1446, %v1435
          %1448 = vst.msk [vmem:[#allocation5 + $0x8] sm:$0xff] %vm1446, %v1437
          %1449 = vst.msk [vmem:[#allocation5 + $0x10] sm:$0xff] %vm1446, %v1439
          %1450 = vst.msk [vmem:[#allocation5 + $0x18] sm:$0xff] %vm1446, %v1441
          %1451 = vrot.lane.b32.xlu0 %v680, 80
          %v1452 = vpop.permute.xlu0 %1451
          %1453 = vrot.lane.b32.xlu0 %v680, 16
          %v1454 = vpop.permute.xlu0 %1453
          %v1456 = vsel %vm687, %v1452, 0
          %v1459 = vsel %vm687, %v1454, 0
          %1461 = vmatprep.subr.bf16.mxu0 0
          %1462 = vmatpush1.bf16.xpose.msra.mxu0 0
          %1463 = vmatprep.subr.bf16.mxu0 0
          %1464 = vmatpush1.bf16.xpose.msra.mxu0 0
          %1465 = vmatprep.subr.bf16.mxu0 0
          %1466 = vmatpush1.bf16.xpose.msra.mxu0 0
          %1467 = vmatprep.subr.bf16.mxu0 0
          %1468 = vmatpush1.bf16.xpose.msra.mxu0 0
          %1469 = vmatprep.subr.bf16.mxu0 0
          %1470 = vmatpush1.bf16.xpose.msra.mxu0 0
          %1471 = vmatprep.subr.bf16.mxu0 0
          %1472 = vmatpush1.bf16.xpose.msra.mxu0 0
          %1473 = vmatprep.subr.bf16.mxu0 0
          %1474 = vmatpush1.bf16.xpose.msra.mxu0 0
          %1475 = vmatprep.subr.bf16.mxu0 0
          %1476 = vmatpush1.bf16.xpose.msra.mxu0 %v1459
          %1477 = vmatprep.subr.bf16.mxu0 0
          %1478 = vmatpush2.bf16.xpose.msra.mxu0 0
          %1479 = vmatprep.subr.bf16.mxu0 0
          %1480 = vmatpush2.bf16.xpose.msra.mxu0 0
          %1481 = vmatprep.subr.bf16.mxu0 0
          %1482 = vmatpush2.bf16.xpose.msra.mxu0 0
          %1483 = vmatprep.subr.bf16.mxu0 0
          %1484 = vmatpush2.bf16.xpose.msra.mxu0 0
          %1485 = vmatprep.subr.bf16.mxu0 0
          %1486 = vmatpush2.bf16.xpose.msra.mxu0 0
          %1487 = vmatprep.subr.bf16.mxu0 0
          %1488 = vmatpush2.bf16.xpose.msra.mxu0 0
          %1489 = vmatprep.subr.bf16.mxu0 0
          %1490 = vmatpush2.bf16.xpose.msra.mxu0 0
          %1491 = vmatprep.subr.bf16.mxu0 0
          %1492 = vmatpush2.bf16.xpose.msra.mxu0 0
          %1493 = vmatprep.mubr.bf16.mxu0 0
          %1494 = vmatmul.mubr.bf16.gmra.mxu0 %v1456
          %v1495 = vpop.f32.mrf.mxu0
          %v1496 = vadd.f32 0.0, %v1495
          %v1497 = vpop.f32.mrf.mxu0
          %v1498 = vpop.f32.mrf.mxu0
          %v1499 = vadd.f32 0.0, %v1498
          %v1500 = vpop.f32.mrf.mxu0
          %1501 = vdwg.mxu0
          %1502 = vrot.lane.b32.xlu0 %v682, 80
          %v1503 = vpop.permute.xlu0 %1502
          %1504 = vrot.lane.b32.xlu0 %v682, 16
          %v1505 = vpop.permute.xlu0 %1504
          %v1507 = vsel %vm687, %v1503, 0
          %v1510 = vsel %vm687, %v1505, 0
          %1512 = vmatprep.subr.bf16.mxu0 0
          %1513 = vmatpush1.bf16.xpose.msra.mxu0 0
          %1514 = vmatprep.subr.bf16.mxu0 0
          %1515 = vmatpush1.bf16.xpose.msra.mxu0 0
          %1516 = vmatprep.subr.bf16.mxu0 0
          %1517 = vmatpush1.bf16.xpose.msra.mxu0 0
          %1518 = vmatprep.subr.bf16.mxu0 0
          %1519 = vmatpush1.bf16.xpose.msra.mxu0 0
          %1520 = vmatprep.subr.bf16.mxu0 0
          %1521 = vmatpush1.bf16.xpose.msra.mxu0 0
          %1522 = vmatprep.subr.bf16.mxu0 0
          %1523 = vmatpush1.bf16.xpose.msra.mxu0 0
          %1524 = vmatprep.subr.bf16.mxu0 0
          %1525 = vmatpush1.bf16.xpose.msra.mxu0 0
          %1526 = vmatprep.subr.bf16.mxu0 0
          %1527 = vmatpush1.bf16.xpose.msra.mxu0 %v1510
          %1528 = vmatprep.subr.bf16.mxu0 0
          %1529 = vmatpush2.bf16.xpose.msra.mxu0 0
          %1530 = vmatprep.subr.bf16.mxu0 0
          %1531 = vmatpush2.bf16.xpose.msra.mxu0 0
          %1532 = vmatprep.subr.bf16.mxu0 0
          %1533 = vmatpush2.bf16.xpose.msra.mxu0 0
          %1534 = vmatprep.subr.bf16.mxu0 0
          %1535 = vmatpush2.bf16.xpose.msra.mxu0 0
          %1536 = vmatprep.subr.bf16.mxu0 0
          %1537 = vmatpush2.bf16.xpose.msra.mxu0 0
          %1538 = vmatprep.subr.bf16.mxu0 0
          %1539 = vmatpush2.bf16.xpose.msra.mxu0 0
          %1540 = vmatprep.subr.bf16.mxu0 0
          %1541 = vmatpush2.bf16.xpose.msra.mxu0 0
          %1542 = vmatprep.subr.bf16.mxu0 0
          %1543 = vmatpush2.bf16.xpose.msra.mxu0 0
          %1544 = vmatprep.mubr.bf16.mxu0 0
          %1545 = vmatmul.mubr.bf16.gmra.mxu0 %v1507
          %v1546 = vpop.f32.mrf.mxu0
          %v1547 = vadd.f32 0.0, %v1546
          %v1548 = vpop.f32.mrf.mxu0
          %v1549 = vpop.f32.mrf.mxu0
          %v1550 = vadd.f32 0.0, %v1549
          %v1551 = vpop.f32.mrf.mxu0
          %1552 = vdwg.mxu0
          %v1553 = vsel %vm687, %v1496, -inf
          %1554 = vmax.xlane.f32.xlu0 %v1553
          %v1555 = vpop.xlane.xlu0 %1554
          %v1556 = vsel %vm687, %v1499, -inf
          %1557 = vmax.xlane.f32.xlu0 %v1556
          %v1558 = vpop.xlane.xlu0 %1557
          %v1559 = vsel %vm687, %v1547, -inf
          %1560 = vmax.xlane.f32.xlu0 %v1559
          %v1561 = vpop.xlane.xlu0 %1560
          %v1562 = vsel %vm687, %v1550, -inf
          %1563 = vmax.xlane.f32.xlu0 %v1562
          %v1564 = vpop.xlane.xlu0 %1563
          %v1565 = vsub.f32 %v1496, %v1555
          %v1566 = vsub.f32 %v1499, %v1558
          %v1567 = vsub.f32 %v1547, %v1561
          %v1568 = vsub.f32 %v1550, %v1564
          %v1569 = vmul.f32 %v1565, 1.442695
          %v1570 = vpow.pop %v1569
          %v1571 = vmul.f32 %v1566, 1.442695
          %v1572 = vpow.pop %v1571
          %v1573 = vmul.f32 %v1567, 1.442695
          %v1574 = vpow.pop %v1573
          %v1575 = vmul.f32 %v1568, 1.442695
          %v1576 = vpow.pop %v1575
          %v1577 = vsel %vm687, %v1570, 0.0
          %1578 = vadd.xlane.f32.xlu0 %v1577
          %v1579 = vpop.xlane.xlu0 %1578
          %v1580 = vsel %vm687, %v1572, 0.0
          %1581 = vadd.xlane.f32.xlu0 %v1580
          %v1582 = vpop.xlane.xlu0 %1581
          %v1583 = vsel %vm687, %v1574, 0.0
          %1584 = vadd.xlane.f32.xlu0 %v1583
          %v1585 = vpop.xlane.xlu0 %1584
          %v1586 = vsel %vm687, %v1576, 0.0
          %1587 = vadd.xlane.f32.xlu0 %v1586
          %v1588 = vpop.xlane.xlu0 %1587
          %v1589 = vrcp.pop %v1579
          %v1590 = vrcp.pop %v1582
          %v1591 = vrcp.pop %v1585
          %v1592 = vrcp.pop %v1588
          %v1593 = vmul.f32 %v1570, %v1589
          %v1594 = vmul.f32 %v1572, %v1590
          %v1595 = vmul.f32 %v1574, %v1591
          %v1596 = vmul.f32 %v1576, %v1592
          %v1597 = vpack.c.bf16 %v1594, %v1593
          %v1598 = vpack.c.bf16 %v1596, %v1595
          %1599 = vrot.lane.b32.xlu0 %v681, 80
          %v1600 = vpop.permute.xlu0 %1599
          %v1603 = vsel %vm687, %v1597, 0
          %1605 = vmatprep.subr.bf16.mxu0 0
          %1606 = vmatpush1.bf16.msra.mxu0 0
          %1607 = vmatprep.subr.bf16.mxu0 0
          %1608 = vmatpush1.bf16.msra.mxu0 0
          %1609 = vmatprep.subr.bf16.mxu0 0
          %1610 = vmatpush1.bf16.msra.mxu0 0
          %1611 = vmatprep.subr.bf16.mxu0 0
          %1612 = vmatpush1.bf16.msra.mxu0 0
          %1613 = vmatprep.subr.bf16.mxu0 0
          %1614 = vmatpush1.bf16.msra.mxu0 0
          %1615 = vmatprep.subr.bf16.mxu0 0
          %1616 = vmatpush1.bf16.msra.mxu0 0
          %1617 = vmatprep.subr.bf16.mxu0 0
          %1618 = vmatpush1.bf16.msra.mxu0 0
          %1619 = vmatprep.subr.bf16.mxu0 0
          %1620 = vmatpush1.bf16.msra.mxu0 %v1600
          %1621 = vmatprep.subr.bf16.mxu0 0
          %1622 = vmatpush2.bf16.msra.mxu0 0
          %1623 = vmatprep.subr.bf16.mxu0 0
          %1624 = vmatpush2.bf16.msra.mxu0 0
          %1625 = vmatprep.subr.bf16.mxu0 0
          %1626 = vmatpush2.bf16.msra.mxu0 0
          %1627 = vmatprep.subr.bf16.mxu0 0
          %1628 = vmatpush2.bf16.msra.mxu0 0
          %1629 = vmatprep.subr.bf16.mxu0 0
          %1630 = vmatpush2.bf16.msra.mxu0 0
          %1631 = vmatprep.subr.bf16.mxu0 0
          %1632 = vmatpush2.bf16.msra.mxu0 0
          %1633 = vmatprep.subr.bf16.mxu0 0
          %1634 = vmatpush2.bf16.msra.mxu0 0
          %1635 = vmatprep.subr.bf16.mxu0 0
          %1636 = vmatpush2.bf16.msra.mxu0 0
          %1637 = vmatprep.mubr.bf16.mxu0 0
          %1638 = vmatmul.mubr.bf16.gmra.mxu0 %v1603
          %v1639 = vpop.f32.mrf.mxu0
          %v1640 = vadd.f32 0.0, %v1639
          %v1641 = vpop.f32.mrf.mxu0
          %v1642 = vpop.f32.mrf.mxu0
          %v1643 = vadd.f32 0.0, %v1642
          %v1644 = vpop.f32.mrf.mxu0
          %1645 = vdwg.mxu0
          %1646 = vrot.lane.b32.xlu0 %v683, 80
          %v1647 = vpop.permute.xlu0 %1646
          %v1650 = vsel %vm687, %v1598, 0
          %1652 = vmatprep.subr.bf16.mxu0 0
          %1653 = vmatpush1.bf16.msra.mxu0 0
          %1654 = vmatprep.subr.bf16.mxu0 0
          %1655 = vmatpush1.bf16.msra.mxu0 0
          %1656 = vmatprep.subr.bf16.mxu0 0
          %1657 = vmatpush1.bf16.msra.mxu0 0
          %1658 = vmatprep.subr.bf16.mxu0 0
          %1659 = vmatpush1.bf16.msra.mxu0 0
          %1660 = vmatprep.subr.bf16.mxu0 0
          %1661 = vmatpush1.bf16.msra.mxu0 0
          %1662 = vmatprep.subr.bf16.mxu0 0
          %1663 = vmatpush1.bf16.msra.mxu0 0
          %1664 = vmatprep.subr.bf16.mxu0 0
          %1665 = vmatpush1.bf16.msra.mxu0 0
          %1666 = vmatprep.subr.bf16.mxu0 0
          %1667 = vmatpush1.bf16.msra.mxu0 %v1647
          %1668 = vmatprep.subr.bf16.mxu0 0
          %1669 = vmatpush2.bf16.msra.mxu0 0
          %1670 = vmatprep.subr.bf16.mxu0 0
          %1671 = vmatpush2.bf16.msra.mxu0 0
          %1672 = vmatprep.subr.bf16.mxu0 0
          %1673 = vmatpush2.bf16.msra.mxu0 0
          %1674 = vmatprep.subr.bf16.mxu0 0
          %1675 = vmatpush2.bf16.msra.mxu0 0
          %1676 = vmatprep.subr.bf16.mxu0 0
          %1677 = vmatpush2.bf16.msra.mxu0 0
          %1678 = vmatprep.subr.bf16.mxu0 0
          %1679 = vmatpush2.bf16.msra.mxu0 0
          %1680 = vmatprep.subr.bf16.mxu0 0
          %1681 = vmatpush2.bf16.msra.mxu0 0
          %1682 = vmatprep.subr.bf16.mxu0 0
          %1683 = vmatpush2.bf16.msra.mxu0 0
          %1684 = vmatprep.mubr.bf16.mxu0 0
          %1685 = vmatmul.mubr.bf16.gmra.mxu0 %v1650
          %v1686 = vpop.f32.mrf.mxu0
          %v1687 = vadd.f32 0.0, %v1686
          %v1688 = vpop.f32.mrf.mxu0
          %v1689 = vpop.f32.mrf.mxu0
          %v1690 = vadd.f32 0.0, %v1689
          %v1691 = vpop.f32.mrf.mxu0
          %1692 = vdwg.mxu0
          %1697 = vrot.lane.b32.xlu0 %v1640, 48
          %v1698 = vpop.permute.xlu0 %1697
          %1699 = vrot.lane.b32.xlu0 %v1643, 48
          %v1700 = vpop.permute.xlu0 %1699
          %1701 = vrot.lane.b32.xlu0 %v1687, 48
          %v1702 = vpop.permute.xlu0 %1701
          %1703 = vrot.lane.b32.xlu0 %v1690, 48
          %v1704 = vpop.permute.xlu0 %1703
          %vm1709 = vcmask 523648
          %1710 = vst.msk [vmem:[#allocation5] sm:$0xff] %vm1709, %v1698
          %1711 = vst.msk [vmem:[#allocation5 + $0x8] sm:$0xff] %vm1709, %v1700
          %1712 = vst.msk [vmem:[#allocation5 + $0x10] sm:$0xff] %vm1709, %v1702
          %1713 = vst.msk [vmem:[#allocation5 + $0x18] sm:$0xff] %vm1709, %v1704
          %v1714 = vld [vmem:[#allocation5] sm:$0xff]
          %v1715 = vld [vmem:[#allocation5 + $0x8] sm:$0xff]
          %v1716 = vld [vmem:[#allocation5 + $0x10] sm:$0xff]
          %v1717 = vld [vmem:[#allocation5 + $0x18] sm:$0xff]
          %v1718 = vpack.c.bf16 %v1715, %v1714
          %v1719 = vpack.c.bf16 %v1717, %v1716
          %v1720 = vld [vmem:[%s4] sm:$0xf]
          %v1721 = vld [vmem:[%s4 + $0x4] sm:$0xf]
          %v1722 = vld [vmem:[%s4 + $0x8] sm:$0xf]
          %v1723 = vld [vmem:[%s4 + $0xc] sm:$0xf]
          %v1724 = vld [vmem:[%s4 + $0x10] sm:$0xf]
          %v1725 = vld [vmem:[%s4 + $0x14] sm:$0xf]
          %v1726 = vld [vmem:[%s4 + $0x18] sm:$0xf]
          %v1727 = vld [vmem:[%s4 + $0x1c] sm:$0xf]
          %v1728 = vld [vmem:[%s5] sm:$0x1]
          %v1730 = vlaneseq
          %v1731 = vshrl.u32 %v1730, 7
          %v1732 = vsub.s32 0, %v1731
          %v1733 = vrot.slane %v1728, %v1732
          %v1743 = vunpack.c.l.b16 %v1720
          %v1744 = vunpack.c.l.b16 %v1721
          %v1745 = vunpack.c.l.b16 %v1722
          %v1746 = vunpack.c.l.b16 %v1723
          %v1747 = vunpack.c.l.b16 %v1724
          %v1748 = vunpack.c.l.b16 %v1725
          %v1749 = vunpack.c.l.b16 %v1726
          %v1750 = vunpack.c.l.b16 %v1727
          %v1751 = vpack.c.b16 %v1744, %v1743
          %v1752 = vpack.c.b16 %v1746, %v1745
          %v1753 = vpack.c.b16 %v1748, %v1747
          %v1754 = vpack.c.b16 %v1750, %v1749
          %v1760 = vsel %vm497, %v1718, 0
          %v1763 = vsel %vm497, %v1719, 0
          %1765 = vmatprep.subr.bf16.mxu0 0
          %1766 = vmatpush1.bf16.msra.mxu0 0
          %1767 = vmatprep.subr.bf16.mxu0 0
          %1768 = vmatpush1.bf16.msra.mxu0 0
          %1769 = vmatprep.subr.bf16.mxu0 0
          %1770 = vmatpush1.bf16.msra.mxu0 0
          %1771 = vmatprep.subr.bf16.mxu0 0
          %1772 = vmatpush1.bf16.msra.mxu0 0
          %1773 = vmatprep.subr.bf16.mxu0 0
          %1774 = vmatpush1.bf16.msra.mxu0 %v1754
          %1775 = vmatprep.subr.bf16.mxu0 0
          %1776 = vmatpush1.bf16.msra.mxu0 %v1753
          %1777 = vmatprep.subr.bf16.mxu0 0
          %1778 = vmatpush1.bf16.msra.mxu0 %v1752
          %1779 = vmatprep.subr.bf16.mxu0 0
          %1780 = vmatpush1.bf16.msra.mxu0 %v1751
          %1781 = vmatprep.subr.bf16.mxu0 0
          %1782 = vmatpush2.bf16.msra.mxu0 0
          %1783 = vmatprep.subr.bf16.mxu0 0
          %1784 = vmatpush2.bf16.msra.mxu0 0
          %1785 = vmatprep.subr.bf16.mxu0 0
          %1786 = vmatpush2.bf16.msra.mxu0 0
          %1787 = vmatprep.subr.bf16.mxu0 0
          %1788 = vmatpush2.bf16.msra.mxu0 0
          %1789 = vmatprep.subr.bf16.mxu0 0
          %1790 = vmatpush2.bf16.msra.mxu0 0
          %1791 = vmatprep.subr.bf16.mxu0 0
          %1792 = vmatpush2.bf16.msra.mxu0 0
          %1793 = vmatprep.subr.bf16.mxu0 0
          %1794 = vmatpush2.bf16.msra.mxu0 0
          %1795 = vmatprep.subr.bf16.mxu0 0
          %1796 = vmatpush2.bf16.msra.mxu0 0
          %1797 = vmatprep.mubr.bf16.mxu0 0
          %1798 = vmatmul.mubr.bf16.gmra.mxu0 %v1760
          %v1799 = vpop.f32.mrf.mxu0
          %v1800 = vadd.f32 %v1733, %v1799
          %v1801 = vpop.f32.mrf.mxu0
          %v1802 = vpop.f32.mrf.mxu0
          %v1803 = vadd.f32 %v1733, %v1802
          %v1804 = vpop.f32.mrf.mxu0
          %1805 = vmatprep.mubr.bf16.mxu0 0
          %1806 = vmatmul.mubr.bf16.gmra.mxu0 %v1763
          %v1807 = vpop.f32.mrf.mxu0
          %v1808 = vadd.f32 %v1733, %v1807
          %v1809 = vpop.f32.mrf.mxu0
          %v1810 = vpop.f32.mrf.mxu0
          %v1811 = vadd.f32 %v1733, %v1810
          %v1812 = vpop.f32.mrf.mxu0
          %1813 = vdwg.mxu0
          %v1814 = vadd.f32 %v491, %v1800
          %v1815 = vadd.f32 %v492, %v1803
          %v1816 = vadd.f32 %v493, %v1808
          %v1817 = vadd.f32 %v494, %v1811
          %v1818 = vld [vmem:[%s6] sm:$0x1]
          %v1819 = vld [vmem:[%s7] sm:$0x1]
          %v1820 = vsel %vm497, %v1814, 0.0
          %1821 = vadd.xlane.f32.xlu0 %v1820
          %v1822 = vpop.xlane.xlu0 %1821
          %v1823 = vsel %vm497, %v1815, 0.0
          %1824 = vadd.xlane.f32.xlu0 %v1823
          %v1825 = vpop.xlane.xlu0 %1824
          %v1826 = vsel %vm497, %v1816, 0.0
          %1827 = vadd.xlane.f32.xlu0 %v1826
          %v1828 = vpop.xlane.xlu0 %1827
          %v1829 = vsel %vm497, %v1817, 0.0
          %1830 = vadd.xlane.f32.xlu0 %v1829
          %v1831 = vpop.xlane.xlu0 %1830
          %v1832 = vmul.f32 %v1822, %v510
          %v1833 = vmul.f32 %v1825, %v510
          %v1834 = vmul.f32 %v1828, %v510
          %v1835 = vmul.f32 %v1831, %v510
          %v1836 = vsub.f32 %v1814, %v1832
          %v1837 = vsub.f32 %v1815, %v1833
          %v1838 = vsub.f32 %v1816, %v1834
          %v1839 = vsub.f32 %v1817, %v1835
          %v1840 = vmul.f32 %v1836, %v1836
          %v1841 = vmul.f32 %v1837, %v1837
          %v1842 = vmul.f32 %v1838, %v1838
          %v1843 = vmul.f32 %v1839, %v1839
          %v1844 = vsel %vm497, %v1840, 0.0
          %1845 = vadd.xlane.f32.xlu0 %v1844
          %v1846 = vpop.xlane.xlu0 %1845
          %v1847 = vsel %vm497, %v1841, 0.0
          %1848 = vadd.xlane.f32.xlu0 %v1847
          %v1849 = vpop.xlane.xlu0 %1848
          %v1850 = vsel %vm497, %v1842, 0.0
          %1851 = vadd.xlane.f32.xlu0 %v1850
          %v1852 = vpop.xlane.xlu0 %1851
          %v1853 = vsel %vm497, %v1843, 0.0
          %1854 = vadd.xlane.f32.xlu0 %v1853
          %v1855 = vpop.xlane.xlu0 %1854
          %v1856 = vmul.f32 %v1846, %v510
          %v1857 = vmul.f32 %v1849, %v510
          %v1858 = vmul.f32 %v1852, %v510
          %v1859 = vmul.f32 %v1855, %v510
          %v1860 = vadd.f32 %v1856, 1e-05
          %v1861 = vadd.f32 %v1857, 1e-05
          %v1862 = vadd.f32 %v1858, 1e-05
          %v1863 = vadd.f32 %v1859, 1e-05
          %v1864 = vrsqrt.pop %v1860
          %v1865 = vrsqrt.pop %v1861
          %v1866 = vrsqrt.pop %v1862
          %v1867 = vrsqrt.pop %v1863
          %v1868 = vmul.f32 %v1836, %v1864
          %v1869 = vmul.f32 %v1837, %v1865
          %v1870 = vmul.f32 %v1838, %v1866
          %v1871 = vmul.f32 %v1839, %v1867
          %v1873 = vlaneseq
          %v1874 = vshrl.u32 %v1873, 7
          %v1875 = vsub.s32 0, %v1874
          %v1876 = vrot.slane %v1818, %v1875
          %v1878 = vmul.f32 %v1868, %v1876
          %v1879 = vmul.f32 %v1869, %v1876
          %v1880 = vmul.f32 %v1870, %v1876
          %v1881 = vmul.f32 %v1871, %v1876
          %v1883 = vlaneseq
          %v1884 = vshrl.u32 %v1883, 7
          %v1885 = vsub.s32 0, %v1884
          %v1886 = vrot.slane %v1819, %v1885
          %v1888 = vadd.f32 %v1878, %v1886
          %v1889 = vadd.f32 %v1879, %v1886
          %v1890 = vadd.f32 %v1880, %v1886
          %v1891 = vadd.f32 %v1881, %v1886
          %v1892 = vpack.c.bf16 %v1889, %v1888
          %v1893 = vpack.c.bf16 %v1891, %v1890
          %v1896 = vunpack.c.l.b16 %v1892
          %v1897 = vunpack.c.h.b16 %v1892
          %v1898 = vunpack.c.l.b16 %v1893
          %v1899 = vunpack.c.h.b16 %v1893
          %v1900 = vpack.c.b16 %v1896, %v1896
          %v1901 = vpack.c.b16 %v1897, %v1897
          %v1902 = vpack.c.b16 %v1898, %v1898
          %v1903 = vpack.c.b16 %v1899, %v1899
          %vm1908 = vcmask 519168
          %1909 = vst.msk [vmem:[#allocation2] sm:$0xf] %vm1908, %v1900
          %1910 = vst.msk [vmem:[#allocation2 + $0x4] sm:$0xf] %vm1908, %v1901
          %1911 = vst.msk [vmem:[#allocation2 + $0x8] sm:$0xf] %vm1908, %v1902
          %1912 = vst.msk [vmem:[#allocation2 + $0xc] sm:$0xf] %vm1908, %v1903
          %v1913 = vld [vmem:[%s8] sm:$0xf]
          %v1914 = vld [vmem:[%s8 + $0x4] sm:$0xf]
          %v1915 = vld [vmem:[%s8 + $0x8] sm:$0xf]
          %v1916 = vld [vmem:[%s8 + $0xc] sm:$0xf]
          %v1917 = vld [vmem:[%s8 + $0x10] sm:$0xf]
          %v1918 = vld [vmem:[%s8 + $0x14] sm:$0xf]
          %v1919 = vld [vmem:[%s8 + $0x18] sm:$0xf]
          %v1920 = vld [vmem:[%s8 + $0x1c] sm:$0xf]
          %v1929 = vunpack.c.l.b16 %v1913
          %v1930 = vunpack.c.l.b16 %v1914
          %v1931 = vunpack.c.l.b16 %v1915
          %v1932 = vunpack.c.l.b16 %v1916
          %v1933 = vunpack.c.l.b16 %v1917
          %v1934 = vunpack.c.l.b16 %v1918
          %v1935 = vunpack.c.l.b16 %v1919
          %v1936 = vunpack.c.l.b16 %v1920
          %v1937 = vpack.c.b16 %v1930, %v1929
          %v1938 = vpack.c.b16 %v1932, %v1931
          %v1939 = vpack.c.b16 %v1934, %v1933
          %v1940 = vpack.c.b16 %v1936, %v1935
          %v1946 = vsel %vm497, %v1892, 0
          %v1949 = vsel %vm497, %v1893, 0
          %1951 = vmatprep.subr.bf16.mxu0 0
          %1952 = vmatpush1.bf16.msra.mxu0 0
          %1953 = vmatprep.subr.bf16.mxu0 0
          %1954 = vmatpush1.bf16.msra.mxu0 0
          %1955 = vmatprep.subr.bf16.mxu0 0
          %1956 = vmatpush1.bf16.msra.mxu0 0
          %1957 = vmatprep.subr.bf16.mxu0 0
          %1958 = vmatpush1.bf16.msra.mxu0 0
          %1959 = vmatprep.subr.bf16.mxu0 0
          %1960 = vmatpush1.bf16.msra.mxu0 %v1940
          %1961 = vmatprep.subr.bf16.mxu0 0
          %1962 = vmatpush1.bf16.msra.mxu0 %v1939
          %1963 = vmatprep.subr.bf16.mxu0 0
          %1964 = vmatpush1.bf16.msra.mxu0 %v1938
          %1965 = vmatprep.subr.bf16.mxu0 0
          %1966 = vmatpush1.bf16.msra.mxu0 %v1937
          %1967 = vmatprep.subr.bf16.mxu0 0
          %1968 = vmatpush2.bf16.msra.mxu0 0
          %1969 = vmatprep.subr.bf16.mxu0 0
          %1970 = vmatpush2.bf16.msra.mxu0 0
          %1971 = vmatprep.subr.bf16.mxu0 0
          %1972 = vmatpush2.bf16.msra.mxu0 0
          %1973 = vmatprep.subr.bf16.mxu0 0
          %1974 = vmatpush2.bf16.msra.mxu0 0
          %1975 = vmatprep.subr.bf16.mxu0 0
          %1976 = vmatpush2.bf16.msra.mxu0 0
          %1977 = vmatprep.subr.bf16.mxu0 0
          %1978 = vmatpush2.bf16.msra.mxu0 0
          %1979 = vmatprep.subr.bf16.mxu0 0
          %1980 = vmatpush2.bf16.msra.mxu0 0
          %1981 = vmatprep.subr.bf16.mxu0 0
          %1982 = vmatpush2.bf16.msra.mxu0 0
          %1983 = vmatprep.mubr.bf16.mxu0 0
          %1984 = vmatmul.mubr.bf16.gmra.mxu0 %v1946
          %v1985 = vpop.f32.mrf.mxu0
          %v1986 = vadd.f32 0.0, %v1985
          %v1987 = vpop.f32.mrf.mxu0
          %v1988 = vpop.f32.mrf.mxu0
          %v1989 = vadd.f32 0.0, %v1988
          %v1990 = vpop.f32.mrf.mxu0
          %1991 = vmatprep.mubr.bf16.mxu0 0
          %1992 = vmatmul.mubr.bf16.gmra.mxu0 %v1949
          %v1993 = vpop.f32.mrf.mxu0
          %v1994 = vadd.f32 0.0, %v1993
          %v1995 = vpop.f32.mrf.mxu0
          %v1996 = vpop.f32.mrf.mxu0
          %v1997 = vadd.f32 0.0, %v1996
          %v1998 = vpop.f32.mrf.mxu0
          %1999 = vdwg.mxu0
          %2000 = vst [vmem:[#allocation8] sm:$0xff] %v1986
          %2001 = vst [vmem:[#allocation8 + $0x8] sm:$0xff] %v1989
          %2002 = vst [vmem:[#allocation8 + $0x10] sm:$0xff] %v1994
          %2003 = vst [vmem:[#allocation8 + $0x18] sm:$0xff] %v1997
          %v2004 = vlaneseq
          %v2005 = vand.u32 %v2004, 127
          %vm2006 = vcmp.lt.s32.totalorder %v2005, 4
          %v2007 = vsel %vm2006, %v1986, -1e+30
          %v2008 = vsel %vm2006, %v1989, -1e+30
          %v2009 = vsel %vm2006, %v1994, -1e+30
          %v2010 = vsel %vm2006, %v1997, -1e+30
          %2011 = vmax.xlane.f32.xlu0 %v2007
          %v2012 = vpop.xlane.xlu0 %2011
          %2013 = vmax.xlane.f32.xlu0 %v2008
          %v2014 = vpop.xlane.xlu0 %2013
          %2015 = vmax.xlane.f32.xlu0 %v2009
          %v2016 = vpop.xlane.xlu0 %2015
          %2017 = vmax.xlane.f32.xlu0 %v2010
          %v2018 = vpop.xlane.xlu0 %2017
          %v2019 = vsub.f32 %v2007, %v2012
          %v2020 = vsub.f32 %v2008, %v2014
          %v2021 = vsub.f32 %v2009, %v2016
          %v2022 = vsub.f32 %v2010, %v2018
          %v2023 = vmul.f32 %v2019, 1.442695
          %v2024 = vpow.pop %v2023
          %v2025 = vmul.f32 %v2020, 1.442695
          %v2026 = vpow.pop %v2025
          %v2027 = vmul.f32 %v2021, 1.442695
          %v2028 = vpow.pop %v2027
          %v2029 = vmul.f32 %v2022, 1.442695
          %v2030 = vpow.pop %v2029
          %2031 = vadd.xlane.f32.xlu0 %v2024
          %v2032 = vpop.xlane.xlu0 %2031
          %2033 = vadd.xlane.f32.xlu0 %v2026
          %v2034 = vpop.xlane.xlu0 %2033
          %2035 = vadd.xlane.f32.xlu0 %v2028
          %v2036 = vpop.xlane.xlu0 %2035
          %2037 = vadd.xlane.f32.xlu0 %v2030
          %v2038 = vpop.xlane.xlu0 %2037
          %v2039 = vrcp.pop %v2032
          %v2040 = vmul.f32 %v2024, %v2039
          %v2041 = vrcp.pop %v2034
          %v2042 = vmul.f32 %v2026, %v2041
          %v2043 = vrcp.pop %v2036
          %v2044 = vmul.f32 %v2028, %v2043
          %v2045 = vrcp.pop %v2038
          %v2046 = vmul.f32 %v2030, %v2045
          %2047 = vst [vmem:[#allocation3] sm:$0xff] %v2040
          %2048 = vst [vmem:[#allocation3 + $0x8] sm:$0xff] %v2042
          %2049 = vst [vmem:[#allocation3 + $0x10] sm:$0xff] %v2044
          %2050 = vst [vmem:[#allocation3 + $0x18] sm:$0xff] %v2046
          %2051 = vst.msk [vmem:[#allocation4] sm:$0xff] %vm497, 0.0
          %2052 = vst.msk [vmem:[#allocation4 + $0x8] sm:$0xff] %vm497, 0.0
          %2053 = vst.msk [vmem:[#allocation4 + $0x10] sm:$0xff] %vm497, 0.0
          %2054 = vst.msk [vmem:[#allocation4 + $0x18] sm:$0xff] %vm497, 0.0
        $region76: #{tpu_custom_call.1} parent=71 // pred_fallthru
          _
        %v2055 = vld [vmem:[#allocation2] sm:$0xf]
        %v2056 = vld [vmem:[#allocation2 + $0x4] sm:$0xf]
        %v2057 = vld [vmem:[#allocation2 + $0x8] sm:$0xf]
        %v2058 = vld [vmem:[#allocation2 + $0xc] sm:$0xf]
        %s2059 = smul.u32 %s33, 16
        %s2060 = smul.addr %s2059, 4
        %s2061 = scalar_lea.vmem %s9, %s2060
        %v2062 = vld [vmem:[%s2061] sm:$0xff]
        %v2063 = vld [vmem:[%s2061 + $0x8] sm:$0xff]
        %v2064 = vld [vmem:[%s2061 + $0x10] sm:$0xff]
        %v2065 = vld [vmem:[%s2061 + $0x18] sm:$0xff]
        %v2066 = vld [vmem:[%s2061 + $0x20] sm:$0xff]
        %v2067 = vld [vmem:[%s2061 + $0x28] sm:$0xff]
        %v2068 = vld [vmem:[%s2061 + $0x30] sm:$0xff]
        %v2069 = vld [vmem:[%s2061 + $0x38] sm:$0xff]
        %s2070 = smul.u32 %s33, 2
        %s2071 = scalar_lea.vmem %s10, %s2070
        %v2072 = vld [vmem:[%s2071] sm:$0x3]
        %v2074 = vlaneseq
        %v2075 = vshrl.u32 %v2074, 7
        %v2076 = vsub.s32 0, %v2075
        %v2077 = vrot.slane %v2072, %v2076
        %v2078 = vlaneseq
        %v2079 = vshrl.u32 %v2078, 7
        %v2080 = vsub.s32 1, %v2079
        %v2081 = vrot.slane %v2072, %v2080
        %v2088 = vunpack.c.l.b16 %v2055
        %v2089 = vunpack.c.l.b16 %v2056
        %v2090 = vunpack.c.l.b16 %v2057
        %v2091 = vunpack.c.l.b16 %v2058
        %v2092 = vpack.c.b16 %v2089, %v2088
        %v2093 = vpack.c.b16 %v2091, %v2090
        %v2102 = vunpack.c.l.b16 %v2062
        %v2103 = vunpack.c.h.b16 %v2062
        %v2104 = vunpack.c.l.b16 %v2063
        %v2105 = vunpack.c.h.b16 %v2063
        %v2106 = vunpack.c.l.b16 %v2064
        %v2107 = vunpack.c.h.b16 %v2064
        %v2108 = vunpack.c.l.b16 %v2065
        %v2109 = vunpack.c.h.b16 %v2065
        %v2110 = vunpack.c.l.b16 %v2066
        %v2111 = vunpack.c.h.b16 %v2066
        %v2112 = vunpack.c.l.b16 %v2067
        %v2113 = vunpack.c.h.b16 %v2067
        %v2114 = vunpack.c.l.b16 %v2068
        %v2115 = vunpack.c.h.b16 %v2068
        %v2116 = vunpack.c.l.b16 %v2069
        %v2117 = vunpack.c.h.b16 %v2069
        %v2118 = vpack.c.b16 %v2104, %v2102
        %v2119 = vpack.c.b16 %v2105, %v2103
        %v2120 = vpack.c.b16 %v2108, %v2106
        %v2121 = vpack.c.b16 %v2109, %v2107
        %v2122 = vpack.c.b16 %v2112, %v2110
        %v2123 = vpack.c.b16 %v2113, %v2111
        %v2124 = vpack.c.b16 %v2116, %v2114
        %v2125 = vpack.c.b16 %v2117, %v2115
        %vm2134 = vcmask 523264
        %v2136 = vsel %vm2134, %v2092, 0
        %v2139 = vsel %vm2134, %v2093, 0
        %2141 = vmatprep.subr.bf16.mxu0 0
        %2142 = vmatpush1.bf16.msra.mxu0 0
        %2143 = vmatprep.subr.bf16.mxu0 0
        %2144 = vmatpush1.bf16.msra.mxu0 0
        %2145 = vmatprep.subr.bf16.mxu0 0
        %2146 = vmatpush1.bf16.msra.mxu0 0
        %2147 = vmatprep.subr.bf16.mxu0 0
        %2148 = vmatpush1.bf16.msra.mxu0 0
        %2149 = vmatprep.subr.bf16.mxu0 %v2125
        %2150 = vmatpush1.bf16.msra.mxu0 %v2124
        %2151 = vmatprep.subr.bf16.mxu0 %v2123
        %2152 = vmatpush1.bf16.msra.mxu0 %v2122
        %2153 = vmatprep.subr.bf16.mxu0 %v2121
        %2154 = vmatpush1.bf16.msra.mxu0 %v2120
        %2155 = vmatprep.subr.bf16.mxu0 %v2119
        %2156 = vmatpush1.bf16.msra.mxu0 %v2118
        %2157 = vmatprep.subr.bf16.mxu0 0
        %2158 = vmatpush2.bf16.msra.mxu0 0
        %2159 = vmatprep.subr.bf16.mxu0 0
        %2160 = vmatpush2.bf16.msra.mxu0 0
        %2161 = vmatprep.subr.bf16.mxu0 0
        %2162 = vmatpush2.bf16.msra.mxu0 0
        %2163 = vmatprep.subr.bf16.mxu0 0
        %2164 = vmatpush2.bf16.msra.mxu0 0
        %2165 = vmatprep.subr.bf16.mxu0 0
        %2166 = vmatpush2.bf16.msra.mxu0 0
        %2167 = vmatprep.subr.bf16.mxu0 0
        %2168 = vmatpush2.bf16.msra.mxu0 0
        %2169 = vmatprep.subr.bf16.mxu0 0
        %2170 = vmatpush2.bf16.msra.mxu0 0
        %2171 = vmatprep.subr.bf16.mxu0 0
        %2172 = vmatpush2.bf16.msra.mxu0 0
        %2173 = vmatprep.mubr.bf16.mxu0 0
        %2174 = vmatmul.mubr.bf16.gmra.mxu0 %v2136
        %v2175 = vpop.f32.mrf.mxu0
        %v2176 = vadd.f32 %v2077, %v2175
        %v2177 = vpop.f32.mrf.mxu0
        %v2178 = vadd.f32 %v2081, %v2177
        %v2179 = vpop.f32.mrf.mxu0
        %v2180 = vadd.f32 %v2077, %v2179
        %v2181 = vpop.f32.mrf.mxu0
        %v2182 = vadd.f32 %v2081, %v2181
        %2183 = vmatprep.mubr.bf16.mxu0 0
        %2184 = vmatmul.mubr.bf16.gmra.mxu0 %v2139
        %v2185 = vpop.f32.mrf.mxu0
        %v2186 = vadd.f32 %v2077, %v2185
        %v2187 = vpop.f32.mrf.mxu0
        %v2188 = vadd.f32 %v2081, %v2187
        %v2189 = vpop.f32.mrf.mxu0
        %v2190 = vadd.f32 %v2077, %v2189
        %v2191 = vpop.f32.mrf.mxu0
        %v2192 = vadd.f32 %v2081, %v2191
        %2193 = vdwg.mxu0
        %v2194 = vpack.c.bf16 %v2180, %v2176
        %v2195 = vpack.c.bf16 %v2182, %v2178
        %v2196 = vpack.c.bf16 %v2190, %v2186
        %v2197 = vpack.c.bf16 %v2192, %v2188
        %v2198 = vmul.bf16 %v2194, 1056980736
        %v2199 = vmul.bf16 %v2195, 1056980736
        %v2200 = vmul.bf16 %v2196, 1056980736
        %v2201 = vmul.bf16 %v2197, 1056980736
        %v2202 = vmul.bf16 %v2194, 1027030327
        %v2203 = vmul.bf16 %v2195, 1027030327
        %v2204 = vmul.bf16 %v2196, 1027030327
        %v2205 = vmul.bf16 %v2197, 1027030327
        %v2206 = vmul.bf16 %v2202, %v2194
        %v2207 = vmul.bf16 %v2203, %v2195
        %v2208 = vmul.bf16 %v2204, %v2196
        %v2209 = vmul.bf16 %v2205, %v2197
        %v2210 = vmul.bf16 %v2206, %v2194
        %v2211 = vmul.bf16 %v2207, %v2195
        %v2212 = vmul.bf16 %v2208, %v2196
        %v2213 = vmul.bf16 %v2209, %v2197
        %v2214 = vadd.bf16 %v2194, %v2210
        %v2215 = vadd.bf16 %v2195, %v2211
        %v2216 = vadd.bf16 %v2196, %v2212
        %v2217 = vadd.bf16 %v2197, %v2213
        %v2218 = vmul.bf16 %v2214, 1061961548
        %v2219 = vmul.bf16 %v2215, 1061961548
        %v2220 = vmul.bf16 %v2216, 1061961548
        %v2221 = vmul.bf16 %v2217, 1061961548
        %v2222 = vtanh.bf16.pop %v2218
        %v2223 = vtanh.bf16.pop %v2219
        %v2224 = vtanh.bf16.pop %v2220
        %v2225 = vtanh.bf16.pop %v2221
        %v2226 = vadd.bf16 %v2222, 1065369472
        %v2227 = vadd.bf16 %v2223, 1065369472
        %v2228 = vadd.bf16 %v2224, 1065369472
        %v2229 = vadd.bf16 %v2225, 1065369472
        %v2230 = vmul.bf16 %v2198, %v2226
        %v2231 = vmul.bf16 %v2199, %v2227
        %v2232 = vmul.bf16 %v2200, %v2228
        %v2233 = vmul.bf16 %v2201, %v2229
        %s2234 = smul.u32 %s33, 32
        %s2235 = smul.addr %s2234, 4
        %s2236 = scalar_lea.vmem %s11, %s2235
        %v2237 = vld [vmem:[%s2236] sm:$0xf]
        %v2238 = vld [vmem:[%s2236 + $0x4] sm:$0xf]
        %v2239 = vld [vmem:[%s2236 + $0x8] sm:$0xf]
        %v2240 = vld [vmem:[%s2236 + $0xc] sm:$0xf]
        %v2241 = vld [vmem:[%s2236 + $0x10] sm:$0xf]
        %v2242 = vld [vmem:[%s2236 + $0x14] sm:$0xf]
        %v2243 = vld [vmem:[%s2236 + $0x18] sm:$0xf]
        %v2244 = vld [vmem:[%s2236 + $0x1c] sm:$0xf]
        %v2245 = vld [vmem:[%s2236 + $0x20] sm:$0xf]
        %v2246 = vld [vmem:[%s2236 + $0x24] sm:$0xf]
        %v2247 = vld [vmem:[%s2236 + $0x28] sm:$0xf]
        %v2248 = vld [vmem:[%s2236 + $0x2c] sm:$0xf]
        %v2249 = vld [vmem:[%s2236 + $0x30] sm:$0xf]
        %v2250 = vld [vmem:[%s2236 + $0x34] sm:$0xf]
        %v2251 = vld [vmem:[%s2236 + $0x38] sm:$0xf]
        %v2252 = vld [vmem:[%s2236 + $0x3c] sm:$0xf]
        %v2253 = vld [vmem:[%s2236 + $0x40] sm:$0xf]
        %v2254 = vld [vmem:[%s2236 + $0x44] sm:$0xf]
        %v2255 = vld [vmem:[%s2236 + $0x48] sm:$0xf]
        %v2256 = vld [vmem:[%s2236 + $0x4c] sm:$0xf]
        %v2257 = vld [vmem:[%s2236 + $0x50] sm:$0xf]
        %v2258 = vld [vmem:[%s2236 + $0x54] sm:$0xf]
        %v2259 = vld [vmem:[%s2236 + $0x58] sm:$0xf]
        %v2260 = vld [vmem:[%s2236 + $0x5c] sm:$0xf]
        %v2261 = vld [vmem:[%s2236 + $0x60] sm:$0xf]
        %v2262 = vld [vmem:[%s2236 + $0x64] sm:$0xf]
        %v2263 = vld [vmem:[%s2236 + $0x68] sm:$0xf]
        %v2264 = vld [vmem:[%s2236 + $0x6c] sm:$0xf]
        %v2265 = vld [vmem:[%s2236 + $0x70] sm:$0xf]
        %v2266 = vld [vmem:[%s2236 + $0x74] sm:$0xf]
        %v2267 = vld [vmem:[%s2236 + $0x78] sm:$0xf]
        %v2268 = vld [vmem:[%s2236 + $0x7c] sm:$0xf]
        %s2269 = scalar_lea.vmem %s12, %s33
        %v2270 = vld [vmem:[%s2269] sm:$0x1]
        %v2272 = vlaneseq
        %v2273 = vshrl.u32 %v2272, 7
        %v2274 = vsub.s32 0, %v2273
        %v2275 = vrot.slane %v2270, %v2274
        %v2309 = vunpack.c.l.b16 %v2237
        %v2310 = vunpack.c.l.b16 %v2238
        %v2311 = vunpack.c.l.b16 %v2239
        %v2312 = vunpack.c.l.b16 %v2240
        %v2313 = vunpack.c.l.b16 %v2241
        %v2314 = vunpack.c.l.b16 %v2242
        %v2315 = vunpack.c.l.b16 %v2243
        %v2316 = vunpack.c.l.b16 %v2244
        %v2317 = vunpack.c.l.b16 %v2245
        %v2318 = vunpack.c.l.b16 %v2246
        %v2319 = vunpack.c.l.b16 %v2247
        %v2320 = vunpack.c.l.b16 %v2248
        %v2321 = vunpack.c.l.b16 %v2249
        %v2322 = vunpack.c.l.b16 %v2250
        %v2323 = vunpack.c.l.b16 %v2251
        %v2324 = vunpack.c.l.b16 %v2252
        %v2325 = vunpack.c.l.b16 %v2253
        %v2326 = vunpack.c.l.b16 %v2254
        %v2327 = vunpack.c.l.b16 %v2255
        %v2328 = vunpack.c.l.b16 %v2256
        %v2329 = vunpack.c.l.b16 %v2257
        %v2330 = vunpack.c.l.b16 %v2258
        %v2331 = vunpack.c.l.b16 %v2259
        %v2332 = vunpack.c.l.b16 %v2260
        %v2333 = vunpack.c.l.b16 %v2261
        %v2334 = vunpack.c.l.b16 %v2262
        %v2335 = vunpack.c.l.b16 %v2263
        %v2336 = vunpack.c.l.b16 %v2264
        %v2337 = vunpack.c.l.b16 %v2265
        %v2338 = vunpack.c.l.b16 %v2266
        %v2339 = vunpack.c.l.b16 %v2267
        %v2340 = vunpack.c.l.b16 %v2268
        %v2341 = vpack.c.b16 %v2310, %v2309
        %v2342 = vpack.c.b16 %v2312, %v2311
        %v2343 = vpack.c.b16 %v2314, %v2313
        %v2344 = vpack.c.b16 %v2316, %v2315
        %v2345 = vpack.c.b16 %v2318, %v2317
        %v2346 = vpack.c.b16 %v2320, %v2319
        %v2347 = vpack.c.b16 %v2322, %v2321
        %v2348 = vpack.c.b16 %v2324, %v2323
        %v2349 = vpack.c.b16 %v2326, %v2325
        %v2350 = vpack.c.b16 %v2328, %v2327
        %v2351 = vpack.c.b16 %v2330, %v2329
        %v2352 = vpack.c.b16 %v2332, %v2331
        %v2353 = vpack.c.b16 %v2334, %v2333
        %v2354 = vpack.c.b16 %v2336, %v2335
        %v2355 = vpack.c.b16 %v2338, %v2337
        %v2356 = vpack.c.b16 %v2340, %v2339
        %2373 = vmatprep.subr.bf16.mxu0 0
        %2374 = vmatpush1.bf16.msra.mxu0 %v2348
        %2375 = vmatprep.subr.bf16.mxu0 0
        %2376 = vmatpush1.bf16.msra.mxu0 %v2347
        %2377 = vmatprep.subr.bf16.mxu0 0
        %2378 = vmatpush1.bf16.msra.mxu0 %v2346
        %2379 = vmatprep.subr.bf16.mxu0 0
        %2380 = vmatpush1.bf16.msra.mxu0 %v2345
        %2381 = vmatprep.subr.bf16.mxu0 0
        %2382 = vmatpush1.bf16.msra.mxu0 %v2344
        %2383 = vmatprep.subr.bf16.mxu0 0
        %2384 = vmatpush1.bf16.msra.mxu0 %v2343
        %2385 = vmatprep.subr.bf16.mxu0 0
        %2386 = vmatpush1.bf16.msra.mxu0 %v2342
        %2387 = vmatprep.subr.bf16.mxu0 0
        %2388 = vmatpush1.bf16.msra.mxu0 %v2341
        %2389 = vmatprep.subr.bf16.mxu0 0
        %2390 = vmatpush2.bf16.msra.mxu0 %v2356
        %2391 = vmatprep.subr.bf16.mxu0 0
        %2392 = vmatpush2.bf16.msra.mxu0 %v2355
        %2393 = vmatprep.subr.bf16.mxu0 0
        %2394 = vmatpush2.bf16.msra.mxu0 %v2354
        %2395 = vmatprep.subr.bf16.mxu0 0
        %2396 = vmatpush2.bf16.msra.mxu0 %v2353
        %2397 = vmatprep.subr.bf16.mxu0 0
        %2398 = vmatpush2.bf16.msra.mxu0 %v2352
        %2399 = vmatprep.subr.bf16.mxu0 0
        %2400 = vmatpush2.bf16.msra.mxu0 %v2351
        %2401 = vmatprep.subr.bf16.mxu0 0
        %2402 = vmatpush2.bf16.msra.mxu0 %v2350
        %2403 = vmatprep.subr.bf16.mxu0 0
        %2404 = vmatpush2.bf16.msra.mxu0 %v2349
        %2405 = vmatprep.mubr.bf16.mxu0 %v2231
        %2406 = vmatmul.mubr.bf16.gmra.mxu0 %v2230
        %v2407 = vpop.f32.mrf.mxu0
        %v2408 = vadd.f32 %v2275, %v2407
        %v2409 = vpop.f32.mrf.mxu0
        %v2410 = vpop.f32.mrf.mxu0
        %v2411 = vadd.f32 %v2275, %v2410
        %v2412 = vpop.f32.mrf.mxu0
        %2413 = vmatprep.mubr.bf16.mxu0 %v2233
        %2414 = vmatmul.mubr.bf16.gmra.mxu0 %v2232
        %v2415 = vpop.f32.mrf.mxu0
        %v2416 = vadd.f32 %v2275, %v2415
        %v2417 = vpop.f32.mrf.mxu0
        %v2418 = vpop.f32.mrf.mxu0
        %v2419 = vadd.f32 %v2275, %v2418
        %v2420 = vpop.f32.mrf.mxu0
        %2421 = vdwg.mxu0
        %v2422 = vlaneseq
        %v2423 = vand.u32 %v2422, 127
        %v2424 = vstv %s33
        %vm2425 = vcmp.eq.s32.totalorder %v2423, %v2424
        %v2426 = vld [vmem:[#allocation3] sm:$0xff]
        %v2427 = vld [vmem:[#allocation3 + $0x8] sm:$0xff]
        %v2428 = vld [vmem:[#allocation3 + $0x10] sm:$0xff]
        %v2429 = vld [vmem:[#allocation3 + $0x18] sm:$0xff]
        %v2430 = vsel %vm2425, %v2426, 0.0
        %v2431 = vsel %vm2425, %v2427, 0.0
        %v2432 = vsel %vm2425, %v2428, 0.0
        %v2433 = vsel %vm2425, %v2429, 0.0
        %2434 = vadd.xlane.f32.xlu0 %v2430
        %v2435 = vpop.xlane.xlu0 %2434
        %2436 = vadd.xlane.f32.xlu0 %v2431
        %v2437 = vpop.xlane.xlu0 %2436
        %2438 = vadd.xlane.f32.xlu0 %v2432
        %v2439 = vpop.xlane.xlu0 %2438
        %2440 = vadd.xlane.f32.xlu0 %v2433
        %v2441 = vpop.xlane.xlu0 %2440
        %v2442 = vld [vmem:[#allocation4] sm:$0xff]
        %v2443 = vld [vmem:[#allocation4 + $0x8] sm:$0xff]
        %v2444 = vld [vmem:[#allocation4 + $0x10] sm:$0xff]
        %v2445 = vld [vmem:[#allocation4 + $0x18] sm:$0xff]
        %v2446 = vmul.f32 %v2435, %v2408
        %v2447 = vmul.f32 %v2437, %v2411
        %v2448 = vmul.f32 %v2439, %v2416
        %v2449 = vmul.f32 %v2441, %v2419
        %v2450 = vadd.f32 %v2442, %v2446
        %v2451 = vadd.f32 %v2443, %v2447
        %v2452 = vadd.f32 %v2444, %v2448
        %v2453 = vadd.f32 %v2445, %v2449
        %2454 = vst.msk [vmem:[#allocation4] sm:$0xff] %vm2134, %v2450
        %2455 = vst.msk [vmem:[#allocation4 + $0x8] sm:$0xff] %vm2134, %v2451
        %2456 = vst.msk [vmem:[#allocation4 + $0x10] sm:$0xff] %vm2134, %v2452
        %2457 = vst.msk [vmem:[#allocation4 + $0x18] sm:$0xff] %vm2134, %v2453
        %p2458 = scmp.eq.s32.totalorder %s33, 3
        // Predicated region
        $region77: #{tpu_custom_call.1} parent=71 // pred_check
          %p2459 = pneg %p2458
        $region78: #{tpu_custom_call.1} parent=71 // pred_check_branch
          %2461 = sbr.rel (%p2459) target = $region80
        $region79: #{tpu_custom_call.1} parent=71 // pred_region
          %v2462 = vld [vmem:[#allocation4] sm:$0xff]
          %v2463 = vld [vmem:[#allocation4 + $0x8] sm:$0xff]
          %v2464 = vld [vmem:[#allocation4 + $0x10] sm:$0xff]
          %v2465 = vld [vmem:[#allocation4 + $0x18] sm:$0xff]
          %v2466 = vmul.f32 %v2462, 2.0
          %v2467 = vmul.f32 %v2463, 2.0
          %v2468 = vmul.f32 %v2464, 2.0
          %v2469 = vmul.f32 %v2465, 2.0
          %2470 = vst.msk [vmem:[#allocation6] sm:$0xff] %vm2134, %v2466
          %2471 = vst.msk [vmem:[#allocation6 + $0x8] sm:$0xff] %vm2134, %v2467
          %2472 = vst.msk [vmem:[#allocation6 + $0x10] sm:$0xff] %vm2134, %v2468
          %2473 = vst.msk [vmem:[#allocation6 + $0x18] sm:$0xff] %vm2134, %v2469
        $region80: #{tpu_custom_call.1} parent=71 // pred_fallthru
          _
        // Predicated region
        $region81: #{tpu_custom_call.1} parent=71 // pred_check
          %p2474 = pneg %p336
        $region82: #{tpu_custom_call.1} parent=71 // pred_check_branch
          %2476 = sbr.rel (%p2474) target = $region84
        $region83: #{tpu_custom_call.1} parent=71 // pred_region
          %s2477 = smul.u32 2, %s32
          %s2479 = ssub.s32 512, 512
          %2480 = vsyncadd [#allocation7], %s2479
          %s2481 = smul.addr %s2477, 2
          %s2482 = smul.addr %s2481, 128
          %s2483 = scalar_lea.hbm %s13, %s2482
          %s2484 = sshll.u32 [#allocation6], 4
          %s2485 = int_to_ptr.vmem [resolvable:$true] %s2484
          %2490 = dma.vmem_to_hbm [thread:$0]  %s2485, 512, %s2483, [#allocation7], 128, 128, 8
        $region84: #{tpu_custom_call.1} parent=71 // pred_fallthru
          _
        // Predicated region
        $region85: #{tpu_custom_call.1} parent=71 // pred_check
          %p2491 = pneg %p362
        $region86: #{tpu_custom_call.1} parent=71 // pred_check_branch
          %2493 = sbr.rel (%p2491) target = $region88
        $region87: #{tpu_custom_call.1} parent=71 // pred_region
          %s2494 = smul.u32 2, %s32
          %s2496 = ssub.s32 512, 512
          %2497 = vsyncadd [#allocation9], %s2496
          %s2498 = smul.addr %s2494, 2
          %s2499 = smul.addr %s2498, 128
          %s2500 = scalar_lea.hbm %s14, %s2499
          %s2501 = sshll.u32 [#allocation8], 4
          %s2502 = int_to_ptr.vmem [resolvable:$true] %s2501
          %2507 = dma.vmem_to_hbm [thread:$0]  %s2502, 512, %s2500, [#allocation9], 128, 128, 8
        $region88: #{tpu_custom_call.1} parent=71 // pred_fallthru
          _
        // Predicated region
        $region89: #{tpu_custom_call.1} parent=71 // pred_check
          %p2508 = pneg %p336
        $region90: #{tpu_custom_call.1} parent=71 // pred_check_branch
          %2510 = sbr.rel (%p2508) target = $region92
        $region91: #{tpu_custom_call.1} parent=71 // pred_region
          %2511 = dma.done [#allocation7], 512
        $region92: #{tpu_custom_call.1} parent=71 // pred_fallthru
          _
        // Predicated region
        $region93: #{tpu_custom_call.1} parent=71 // pred_check
          %p2512 = pneg %p362
        $region94: #{tpu_custom_call.1} parent=71 // pred_check_branch
          %2514 = sbr.rel (%p2512) target = $region96
        $region95: #{tpu_custom_call.1} parent=71 // pred_region
          %2515 = dma.done [#allocation9], 512
        $region96: #{tpu_custom_call.1} parent=71 // pred_fallthru
          _
      $region72: #{tpu_custom_call.1} parent=5 // pred_fallthru
        _
      %p2516 = scmp.le.s32.totalorder 2, %s23
      // Predicated region
      $region97: #{tpu_custom_call.1} parent=5 // pred_check
        %p2517 = pneg %p2516
      $region98: #{tpu_custom_call.1} parent=5 // pred_check_branch
        %2519 = sbr.rel (%p2517) target = $region100
      $region99: #{tpu_custom_call.1} parent=5 // pred_region
        %s2520 = ssub.s32 %s23, 2
      $region100: #{tpu_custom_call.1} parent=5 // pred_fallthru
        _
    $region6: #{tpu_custom_call.1} parent=1 // loop_footer
      %s27 = sadd.s32 1, %s23
    $region7: #{tpu_custom_call.1} parent=1 // loop_footer_branch
      %22 = sbr.rel target = $region3
    $region8: #{tpu_custom_call.1} parent=1 // loop_exit
      _
    %2521 = vsyncpa [#allocation7], 1
    %s2522 = scalar_lea.sflag [#allocation7], 1
    %2523 = vsyncpa %s2522, 1
    %2524 = vsyncpa [#allocation9], 1

// kernel: tpu_custom_call.1
$region0: #{tpu_custom_call.1}
  #allocation0 [shape = 'u32[]', space=smem, size = 0x4, offset = 0x4, fixed_abs, tag = 'smem constant byte address 0x4 - core index']
  #allocation1 [shape = 'u32[144,128]{1,0:T(1,128)}', space=vmem, size = 0x12000, scoped, tag = 'internal scratch']
  #allocation2 [shape = 'bf16[32,64]{1,0:T(8,128)(2,1)}', space=vmem, size = 0x2000, scoped, tag = 'scratch operand']
  #allocation3 [shape = 'f32[32,128]{1,0:T(8,128)}', space=vmem, size = 0x4000, scoped, tag = 'scratch operand']
  #allocation4 [shape = 'f32[32,64]{1,0:T(8,128)}', space=vmem, size = 0x4000, scoped, tag = 'scratch operand']
  #allocation5 [shape = 'f32[32,64]{1,0:T(8,128)}', space=vmem, size = 0x4000, scoped, tag = 'scratch operand']
  %s0 = inlined_call_operand.vmem [shape: f32[2,16,64], index: 0, kind: input, shape index: {}]
  %s1 = inlined_call_operand.vmem [shape: f32[1,64], index: 1, kind: input, shape index: {}]
  %s2 = inlined_call_operand.vmem [shape: f32[1,64], index: 2, kind: input, shape index: {}]
  %s3 = inlined_call_operand.vmem [shape: bf16[64,192], index: 3, kind: input, shape index: {}]
  %s4 = inlined_call_operand.vmem [shape: bf16[64,64], index: 4, kind: input, shape index: {}]
  %s5 = inlined_call_operand.vmem [shape: f32[1,64], index: 5, kind: input, shape index: {}]
  %s6 = inlined_call_operand.vmem [shape: f32[1,64], index: 6, kind: input, shape index: {}]
  %s7 = inlined_call_operand.vmem [shape: f32[1,64], index: 7, kind: input, shape index: {}]
  %s8 = inlined_call_operand.vmem [shape: bf16[64,128], index: 8, kind: input, shape index: {}]
  %s9 = inlined_call_operand.vmem [shape: bf16[4,64,256], index: 9, kind: input, shape index: {}]
  %s10 = inlined_call_operand.vmem [shape: f32[4,1,256], index: 10, kind: input, shape index: {}]
  %s11 = inlined_call_operand.vmem [shape: bf16[4,256,64], index: 11, kind: input, shape index: {}]
  %s12 = inlined_call_operand.vmem [shape: f32[4,1,64], index: 12, kind: input, shape index: {}]
  %s13 = inlined_call_operand.hbm [shape: f32[2,16,64], index: 13, kind: output, shape index: {0}]
  %s14 = inlined_call_operand.hbm [shape: f32[2,16,128], index: 14, kind: output, shape index: {1}]
  %15 = xla_tuple %s13, %s14
  %s16 = sld [smem:[#allocation0]]
  $region101: #{tpu_custom_call.1} parent=0
    _
  %s18 = ssub.s32 1, %s16
  %s19 = scalar_select 0, %s18, %s16
  $region1: #{tpu_custom_call.1} parent=0
    #allocation6 [shape = 'u8[16384]{0}', space=vmem, size = 0x4000, scoped, tag = 'output window, operand 0, single buffered']
    #allocation7 [shape = 's32[2]{0}', space=sflag, size = 0x8, scoped, tag = 'scoped memory for tpu_custom_call.1']
    #allocation8 [shape = 'u8[16384]{0}', space=vmem, size = 0x4000, scoped, tag = 'output window, operand 1, single buffered']
    #allocation9 [shape = 's32[1]{0}', space=sflag, size = 0x4, scoped, tag = 'scoped memory for tpu_custom_call.1']
    %20 = vsyncpa [#allocation7], 0
    %21 = vsyncpa [#allocation9], 0
    loop: start=0, step=1, limit=6
    $region2: #{tpu_custom_call.1} parent=1 // loop_pre_header
      _
    $region3: #{tpu_custom_call.1} parent=1 // loop_header
      %s23 = sphi 0, %s27
      %p24 = scmp.ge.s32.totalorder %s23, 6
      %s30 = sphi 0, %s42
      %s31 = sphi 0, %s38
      %s32 = sphi 0, %s30
      %s33 = sphi 0, %s31
      %s34 = sphi 0, %s32
      %s35 = sphi 0, %s33
      %s45 = sphi 0, %s47
      %s48 = sphi 0, %s45
      %s49 = sphi 0, %s48
      %s65 = sphi 0, %s49
      %s69 = sphi 0, %s69
      %s71 = sphi 0, %s69
      %s72 = sphi 0, %s71
      %s86 = sphi 0, %s72
      %s90 = sphi 0, %s90
      %s92 = sphi 0, %s90
      %s93 = sphi 0, %s92
      %s107 = sphi 0, %s93
      %s111 = sphi 0, %s111
      %s113 = sphi 0, %s111
      %s114 = sphi 0, %s113
      %s128 = sphi 0, %s114
      %s132 = sphi 0, %s132
      %s134 = sphi 0, %s132
      %s135 = sphi 0, %s134
      %s149 = sphi 0, %s135
      %s153 = sphi 0, %s153
      %s155 = sphi 0, %s153
      %s156 = sphi 0, %s155
      %s170 = sphi 0, %s156
      %s174 = sphi 0, %s174
      %s176 = sphi 0, %s174
      %s177 = sphi 0, %s176
      %s191 = sphi 0, %s177
      %s195 = sphi 0, %s195
      %s197 = sphi 0, %s195
      %s198 = sphi 0, %s197
      %s212 = sphi 0, %s198
      %s216 = sphi 0, %s216
      %s218 = sphi 0, %s216
      %s219 = sphi 0, %s218
      %s233 = sphi 0, %s219
      %s237 = sphi 0, %s237
      %s239 = sphi 0, %s237
      %s240 = sphi 0, %s239
      %s254 = sphi 0, %s240
      %s258 = sphi 0, %s258
      %s260 = sphi 0, %s258
      %s261 = sphi 0, %s260
      %s275 = sphi 0, %s261
      %s279 = sphi 0, %s279
      %s281 = sphi 0, %s279
      %s282 = sphi 0, %s281
      %s296 = sphi 0, %s282
      %s300 = sphi 0, %s300
      %s302 = sphi 0, %s300
      %s303 = sphi 0, %s302
      %s317 = sphi 0, %s303
      %s323 = sphi 0, %s325
      %s326 = sphi 0, %s323
      %s327 = sphi 0, %s326
      %s343 = sphi 0, %s327
      %s349 = sphi 0, %s351
      %s352 = sphi 0, %s349
      %s353 = sphi 0, %s352
      %s369 = sphi 0, %s353
    $region4: #{tpu_custom_call.1} parent=1 // loop_header_branch
      %26 = sbr.rel (%p24) target = $region8
    $region5: #{tpu_custom_call.1} parent=1 // loop_body
      %s28 = ssub.s32 %s23, 1
      %s29 = ssub.s32 %s23, 2
      %s36 = sadd.s32 1, %s31
      %p37 = scmp.ge.s32.totalorder %s36, 4
      %s38 = scalar_select %p37, 0, %s36
      %s39 = sadd.s32 1, %s30
      %s40 = scalar_select %p37, %s39, %s30
      %p41 = scmp.ge.s32.totalorder %s40, 1
      %s42 = scalar_select %p41, 0, %s40
      %s43 = ssub.s32 %s30, %s42
      %p44 = scmp.eq.s32.totalorder %s43, 0
      %s46 = sadd.s32 %s45, 1
      %s47 = scalar_select %p44, %s45, %s46
      %p50 = pneg %p44
      %p51 = scmp.eq.s32.totalorder %s23, 3
      %p52 = por %p50, %p51
      %p53 = scmp.ne.s32.totalorder %s45, %s48
      %p54 = scmp.eq.s32.totalorder %s23, 0
      %p55 = por %p53, %p54
      %p56 = scmp.ne.s32.totalorder %s45, %s48
      %p57 = scmp.eq.s32.totalorder %s28, 3
      %p58 = por %p56, %p57
      %p59 = scmp.ne.s32.totalorder %s48, %s49
      %p60 = scmp.eq.s32.totalorder %s28, 0
      %p61 = por %p59, %p60
      %p62 = scmp.ne.s32.totalorder %s48, %s49
      %p63 = scmp.eq.s32.totalorder %s29, 3
      %p64 = por %p62, %p63
      %p66 = scmp.ne.s32.totalorder %s49, %s65
      %p67 = scmp.eq.s32.totalorder %s29, 0
      %p68 = por %p66, %p67
      %s70 = sadd.s32 %s69, 1
      %p73 = scmp.eq.s32.totalorder %s23, 3
      %p74 = scmp.ne.s32.totalorder %s69, %s71
      %p75 = scmp.eq.s32.totalorder %s23, 0
      %p76 = por %p74, %p75
      %p77 = scmp.ne.s32.totalorder %s69, %s71
      %p78 = scmp.eq.s32.totalorder %s28, 3
      %p79 = por %p77, %p78
      %p80 = scmp.ne.s32.totalorder %s71, %s72
      %p81 = scmp.eq.s32.totalorder %s28, 0
      %p82 = por %p80, %p81
      %p83 = scmp.ne.s32.totalorder %s71, %s72
      %p84 = scmp.eq.s32.totalorder %s29, 3
      %p85 = por %p83, %p84
      %p87 = scmp.ne.s32.totalorder %s72, %s86
      %p88 = scmp.eq.s32.totalorder %s29, 0
      %p89 = por %p87, %p88
      %s91 = sadd.s32 %s90, 1
      %p94 = scmp.eq.s32.totalorder %s23, 3
      %p95 = scmp.ne.s32.totalorder %s90, %s92
      %p96 = scmp.eq.s32.totalorder %s23, 0
      %p97 = por %p95, %p96
      %p98 = scmp.ne.s32.totalorder %s90, %s92
      %p99 = scmp.eq.s32.totalorder %s28, 3
      %p100 = por %p98, %p99
      %p101 = scmp.ne.s32.totalorder %s92, %s93
      %p102 = scmp.eq.s32.totalorder %s28, 0
      %p103 = por %p101, %p102
      %p104 = scmp.ne.s32.totalorder %s92, %s93
      %p105 = scmp.eq.s32.totalorder %s29, 3
      %p106 = por %p104, %p105
      %p108 = scmp.ne.s32.totalorder %s93, %s107
      %p109 = scmp.eq.s32.totalorder %s29, 0
      %p110 = por %p108, %p109
      %s112 = sadd.s32 %s111, 1
      %p115 = scmp.eq.s32.totalorder %s23, 3
      %p116 = scmp.ne.s32.totalorder %s111, %s113
      %p117 = scmp.eq.s32.totalorder %s23, 0
      %p118 = por %p116, %p117
      %p119 = scmp.ne.s32.totalorder %s111, %s113
      %p120 = scmp.eq.s32.totalorder %s28, 3
      %p121 = por %p119, %p120
      %p122 = scmp.ne.s32.totalorder %s113, %s114
      %p123 = scmp.eq.s32.totalorder %s28, 0
      %p124 = por %p122, %p123
      %p125 = scmp.ne.s32.totalorder %s113, %s114
      %p126 = scmp.eq.s32.totalorder %s29, 3
      %p127 = por %p125, %p126
      %p129 = scmp.ne.s32.totalorder %s114, %s128
      %p130 = scmp.eq.s32.totalorder %s29, 0
      %p131 = por %p129, %p130
      %s133 = sadd.s32 %s132, 1
      %p136 = scmp.eq.s32.totalorder %s23, 3
      %p137 = scmp.ne.s32.totalorder %s132, %s134
      %p138 = scmp.eq.s32.totalorder %s23, 0
      %p139 = por %p137, %p138
      %p140 = scmp.ne.s32.totalorder %s132, %s134
      %p141 = scmp.eq.s32.totalorder %s28, 3
      %p142 = por %p140, %p141
      %p143 = scmp.ne.s32.totalorder %s134, %s135
      %p144 = scmp.eq.s32.totalorder %s28, 0
      %p145 = por %p143, %p144
      %p146 = scmp.ne.s32.totalorder %s134, %s135
      %p147 = scmp.eq.s32.totalorder %s29, 3
      %p148 = por %p146, %p147
      %p150 = scmp.ne.s32.totalorder %s135, %s149
      %p151 = scmp.eq.s32.totalorder %s29, 0
      %p152 = por %p150, %p151
      %s154 = sadd.s32 %s153, 1
      %p157 = scmp.eq.s32.totalorder %s23, 3
      %p158 = scmp.ne.s32.totalorder %s153, %s155
      %p159 = scmp.eq.s32.totalorder %s23, 0
      %p160 = por %p158, %p159
      %p161 = scmp.ne.s32.totalorder %s153, %s155
      %p162 = scmp.eq.s32.totalorder %s28, 3
      %p163 = por %p161, %p162
      %p164 = scmp.ne.s32.totalorder %s155, %s156
      %p165 = scmp.eq.s32.totalorder %s28, 0
      %p166 = por %p164, %p165
      %p167 = scmp.ne.s32.totalorder %s155, %s156
      %p168 = scmp.eq.s32.totalorder %s29, 3
      %p169 = por %p167, %p168
      %p171 = scmp.ne.s32.totalorder %s156, %s170
      %p172 = scmp.eq.s32.totalorder %s29, 0
      %p173 = por %p171, %p172
      %s175 = sadd.s32 %s174, 1
      %p178 = scmp.eq.s32.totalorder %s23, 3
      %p179 = scmp.ne.s32.totalorder %s174, %s176
      %p180 = scmp.eq.s32.totalorder %s23, 0
      %p181 = por %p179, %p180
      %p182 = scmp.ne.s32.totalorder %s174, %s176
      %p183 = scmp.eq.s32.totalorder %s28, 3
      %p184 = por %p182, %p183
      %p185 = scmp.ne.s32.totalorder %s176, %s177
      %p186 = scmp.eq.s32.totalorder %s28, 0
      %p187 = por %p185, %p186
      %p188 = scmp.ne.s32.totalorder %s176, %s177
      %p189 = scmp.eq.s32.totalorder %s29, 3
      %p190 = por %p188, %p189
      %p192 = scmp.ne.s32.totalorder %s177, %s191
      %p193 = scmp.eq.s32.totalorder %s29, 0
      %p194 = por %p192, %p193
      %s196 = sadd.s32 %s195, 1
      %p199 = scmp.eq.s32.totalorder %s23, 3
      %p200 = scmp.ne.s32.totalorder %s195, %s197
      %p201 = scmp.eq.s32.totalorder %s23, 0
      %p202 = por %p200, %p201
      %p203 = scmp.ne.s32.totalorder %s195, %s197
      %p204 = scmp.eq.s32.totalorder %s28, 3
      %p205 = por %p203, %p204
      %p206 = scmp.ne.s32.totalorder %s197, %s198
      %p207 = scmp.eq.s32.totalorder %s28, 0
      %p208 = por %p206, %p207
      %p209 = scmp.ne.s32.totalorder %s197, %s198
      %p210 = scmp.eq.s32.totalorder %s29, 3
      %p211 = por %p209, %p210
      %p213 = scmp.ne.s32.totalorder %s198, %s212
      %p214 = scmp.eq.s32.totalorder %s29, 0
      %p215 = por %p213, %p214
      %s217 = sadd.s32 %s216, 1
      %p220 = scmp.eq.s32.totalorder %s23, 3
      %p221 = scmp.ne.s32.totalorder %s216, %s218
      %p222 = scmp.eq.s32.totalorder %s23, 0
      %p223 = por %p221, %p222
      %p224 = scmp.ne.s32.totalorder %s216, %s218
      %p225 = scmp.eq.s32.totalorder %s28, 3
      %p226 = por %p224, %p225
      %p227 = scmp.ne.s32.totalorder %s218, %s219
      %p228 = scmp.eq.s32.totalorder %s28, 0
      %p229 = por %p227, %p228
      %p230 = scmp.ne.s32.totalorder %s218, %s219
      %p231 = scmp.eq.s32.totalorder %s29, 3
      %p232 = por %p230, %p231
      %p234 = scmp.ne.s32.totalorder %s219, %s233
      %p235 = scmp.eq.s32.totalorder %s29, 0
      %p236 = por %p234, %p235
      %s238 = sadd.s32 %s237, 1
      %p241 = scmp.eq.s32.totalorder %s23, 3
      %p242 = scmp.ne.s32.totalorder %s237, %s239
      %p243 = scmp.eq.s32.totalorder %s23, 0
      %p244 = por %p242, %p243
      %p245 = scmp.ne.s32.totalorder %s237, %s239
      %p246 = scmp.eq.s32.totalorder %s28, 3
      %p247 = por %p245, %p246
      %p248 = scmp.ne.s32.totalorder %s239, %s240
      %p249 = scmp.eq.s32.totalorder %s28, 0
      %p250 = por %p248, %p249
      %p251 = scmp.ne.s32.totalorder %s239, %s240
      %p252 = scmp.eq.s32.totalorder %s29, 3
      %p253 = por %p251, %p252
      %p255 = scmp.ne.s32.totalorder %s240, %s254
      %p256 = scmp.eq.s32.totalorder %s29, 0
      %p257 = por %p255, %p256
      %s259 = sadd.s32 %s258, 1
      %p262 = scmp.eq.s32.totalorder %s23, 3
      %p263 = scmp.ne.s32.totalorder %s258, %s260
      %p264 = scmp.eq.s32.totalorder %s23, 0
      %p265 = por %p263, %p264
      %p266 = scmp.ne.s32.totalorder %s258, %s260
      %p267 = scmp.eq.s32.totalorder %s28, 3
      %p268 = por %p266, %p267
      %p269 = scmp.ne.s32.totalorder %s260, %s261
      %p270 = scmp.eq.s32.totalorder %s28, 0
      %p271 = por %p269, %p270
      %p272 = scmp.ne.s32.totalorder %s260, %s261
      %p273 = scmp.eq.s32.totalorder %s29, 3
      %p274 = por %p272, %p273
      %p276 = scmp.ne.s32.totalorder %s261, %s275
      %p277 = scmp.eq.s32.totalorder %s29, 0
      %p278 = por %p276, %p277
      %s280 = sadd.s32 %s279, 1
      %p283 = scmp.eq.s32.totalorder %s23, 3
      %p284 = scmp.ne.s32.totalorder %s279, %s281
      %p285 = scmp.eq.s32.totalorder %s23, 0
      %p286 = por %p284, %p285
      %p287 = scmp.ne.s32.totalorder %s279, %s281
      %p288 = scmp.eq.s32.totalorder %s28, 3
      %p289 = por %p287, %p288
      %p290 = scmp.ne.s32.totalorder %s281, %s282
      %p291 = scmp.eq.s32.totalorder %s28, 0
      %p292 = por %p290, %p291
      %p293 = scmp.ne.s32.totalorder %s281, %s282
      %p294 = scmp.eq.s32.totalorder %s29, 3
      %p295 = por %p293, %p294
      %p297 = scmp.ne.s32.totalorder %s282, %s296
      %p298 = scmp.eq.s32.totalorder %s29, 0
      %p299 = por %p297, %p298
      %s301 = sadd.s32 %s300, 1
      %p304 = scmp.eq.s32.totalorder %s23, 3
      %p305 = scmp.ne.s32.totalorder %s300, %s302
      %p306 = scmp.eq.s32.totalorder %s23, 0
      %p307 = por %p305, %p306
      %p308 = scmp.ne.s32.totalorder %s300, %s302
      %p309 = scmp.eq.s32.totalorder %s28, 3
      %p310 = por %p308, %p309
      %p311 = scmp.ne.s32.totalorder %s302, %s303
      %p312 = scmp.eq.s32.totalorder %s28, 0
      %p313 = por %p311, %p312
      %p314 = scmp.ne.s32.totalorder %s302, %s303
      %p315 = scmp.eq.s32.totalorder %s29, 3
      %p316 = por %p314, %p315
      %p318 = scmp.ne.s32.totalorder %s303, %s317
      %p319 = scmp.eq.s32.totalorder %s29, 0
      %p320 = por %p318, %p319
      %s321 = ssub.s32 %s30, %s42
      %p322 = scmp.eq.s32.totalorder %s321, 0
      %s324 = sadd.s32 %s323, 1
      %s325 = scalar_select %p322, %s323, %s324
      %p328 = pneg %p322
      %p329 = scmp.eq.s32.totalorder %s23, 3
      %p330 = por %p328, %p329
      %p331 = scmp.ne.s32.totalorder %s323, %s326
      %p332 = scmp.eq.s32.totalorder %s23, 0
      %p333 = por %p331, %p332
      %p334 = scmp.ne.s32.totalorder %s323, %s326
      %p335 = scmp.eq.s32.totalorder %s28, 3
      %p336 = por %p334, %p335
      %p337 = scmp.ne.s32.totalorder %s326, %s327
      %p338 = scmp.eq.s32.totalorder %s28, 0
      %p339 = por %p337, %p338
      %p340 = scmp.ne.s32.totalorder %s326, %s327
      %p341 = scmp.eq.s32.totalorder %s29, 3
      %p342 = por %p340, %p341
      %p344 = scmp.ne.s32.totalorder %s327, %s343
      %p345 = scmp.eq.s32.totalorder %s29, 0
      %p346 = por %p344, %p345
      %s347 = ssub.s32 %s30, %s42
      %p348 = scmp.eq.s32.totalorder %s347, 0
      %s350 = sadd.s32 %s349, 1
      %s351 = scalar_select %p348, %s349, %s350
      %p354 = pneg %p348
      %p355 = scmp.eq.s32.totalorder %s23, 3
      %p356 = por %p354, %p355
      %p357 = scmp.ne.s32.totalorder %s349, %s352
      %p358 = scmp.eq.s32.totalorder %s23, 0
      %p359 = por %p357, %p358
      %p360 = scmp.ne.s32.totalorder %s349, %s352
      %p361 = scmp.eq.s32.totalorder %s28, 3
      %p362 = por %p360, %p361
      %p363 = scmp.ne.s32.totalorder %s352, %s353
      %p364 = scmp.eq.s32.totalorder %s28, 0
      %p365 = por %p363, %p364
      %p366 = scmp.ne.s32.totalorder %s352, %s353
      %p367 = scmp.eq.s32.totalorder %s29, 3
      %p368 = por %p366, %p367
      %p370 = scmp.ne.s32.totalorder %s353, %s369
      %p371 = scmp.eq.s32.totalorder %s29, 0
      %p372 = por %p370, %p371
      %p373 = scmp.le.s32.totalorder 1, %s23
      %p374 = scmp.lt.s32.totalorder %s23, 5
      %p375 = pnand %p373, %p374
      %p376 = pneg %p375
      // Predicated region
      $region9: #{tpu_custom_call.1} parent=5 // pred_check
        _
      $region10: #{tpu_custom_call.1} parent=5 // pred_check_branch
        %378 = sbr.rel (%p375) target = $region12
      $region11: #{tpu_custom_call.1} parent=5 // pred_region
        %s379 = ssub.s32 %s23, 1
        // Predicated region
        $region13: #{tpu_custom_call.1} parent=11 // pred_check
          %p380 = pneg %p61
        $region14: #{tpu_custom_call.1} parent=11 // pred_check_branch
          %382 = sbr.rel (%p380) target = $region16
        $region15: #{tpu_custom_call.1} parent=11 // pred_region
          %s383 = smul.u32 2, %s32
          %p384 = scmp.lt.s32.totalorder %s383, 1
          %s385 = scalar_select %p384, %s383, 1
          %s386 = smul.addr %s385, 2
          %s387 = smul.addr %s386, 8
          %s388 = scalar_lea.vmem %s0, %s387
          %s389 = smul.u32 2, %s32
        $region16: #{tpu_custom_call.1} parent=11 // pred_fallthru
          _
        // Predicated region
        $region17: #{tpu_custom_call.1} parent=11 // pred_check
          %p390 = pneg %p82
        $region18: #{tpu_custom_call.1} parent=11 // pred_check_branch
          %392 = sbr.rel (%p390) target = $region20
        $region19: #{tpu_custom_call.1} parent=11 // pred_region
          _
        $region20: #{tpu_custom_call.1} parent=11 // pred_fallthru
          _
        // Predicated region
        $region21: #{tpu_custom_call.1} parent=11 // pred_check
          %p393 = pneg %p103
        $region22: #{tpu_custom_call.1} parent=11 // pred_check_branch
          %395 = sbr.rel (%p393) target = $region24
        $region23: #{tpu_custom_call.1} parent=11 // pred_region
          _
        $region24: #{tpu_custom_call.1} parent=11 // pred_fallthru
          _
        // Predicated region
        $region25: #{tpu_custom_call.1} parent=11 // pred_check
          %p396 = pneg %p124
        $region26: #{tpu_custom_call.1} parent=11 // pred_check_branch
          %398 = sbr.rel (%p396) target = $region28
        $region27: #{tpu_custom_call.1} parent=11 // pred_region
          _
        $region28: #{tpu_custom_call.1} parent=11 // pred_fallthru
          _
        // Predicated region
        $region29: #{tpu_custom_call.1} parent=11 // pred_check
          %p399 = pneg %p145
        $region30: #{tpu_custom_call.1} parent=11 // pred_check_branch
          %401 = sbr.rel (%p399) target = $region32
        $region31: #{tpu_custom_call.1} parent=11 // pred_region
          _
        $region32: #{tpu_custom_call.1} parent=11 // pred_fallthru
          _
        // Predicated region
        $region33: #{tpu_custom_call.1} parent=11 // pred_check
          %p402 = pneg %p166
        $region34: #{tpu_custom_call.1} parent=11 // pred_check_branch
          %404 = sbr.rel (%p402) target = $region36
        $region35: #{tpu_custom_call.1} parent=11 // pred_region
          _
        $region36: #{tpu_custom_call.1} parent=11 // pred_fallthru
          _
        // Predicated region
        $region37: #{tpu_custom_call.1} parent=11 // pred_check
          %p405 = pneg %p187
        $region38: #{tpu_custom_call.1} parent=11 // pred_check_branch
          %407 = sbr.rel (%p405) target = $region40
        $region39: #{tpu_custom_call.1} parent=11 // pred_region
          _
        $region40: #{tpu_custom_call.1} parent=11 // pred_fallthru
          _
        // Predicated region
        $region41: #{tpu_custom_call.1} parent=11 // pred_check
          %p408 = pneg %p208
        $region42: #{tpu_custom_call.1} parent=11 // pred_check_branch
          %410 = sbr.rel (%p408) target = $region44
        $region43: #{tpu_custom_call.1} parent=11 // pred_region
          _
        $region44: #{tpu_custom_call.1} parent=11 // pred_fallthru
          _
        // Predicated region
        $region45: #{tpu_custom_call.1} parent=11 // pred_check
          %p411 = pneg %p229
        $region46: #{tpu_custom_call.1} parent=11 // pred_check_branch
          %413 = sbr.rel (%p411) target = $region48
        $region47: #{tpu_custom_call.1} parent=11 // pred_region
          _
        $region48: #{tpu_custom_call.1} parent=11 // pred_fallthru
          _
        // Predicated region
        $region49: #{tpu_custom_call.1} parent=11 // pred_check
          %p414 = pneg %p250
        $region50: #{tpu_custom_call.1} parent=11 // pred_check_branch
          %416 = sbr.rel (%p414) target = $region52
        $region51: #{tpu_custom_call.1} parent=11 // pred_region
          _
        $region52: #{tpu_custom_call.1} parent=11 // pred_fallthru
          _
        // Predicated region
        $region53: #{tpu_custom_call.1} parent=11 // pred_check
          %p417 = pneg %p271
        $region54: #{tpu_custom_call.1} parent=11 // pred_check_branch
          %419 = sbr.rel (%p417) target = $region56
        $region55: #{tpu_custom_call.1} parent=11 // pred_region
          _
        $region56: #{tpu_custom_call.1} parent=11 // pred_fallthru
          _
        // Predicated region
        $region57: #{tpu_custom_call.1} parent=11 // pred_check
          %p420 = pneg %p292
        $region58: #{tpu_custom_call.1} parent=11 // pred_check_branch
          %422 = sbr.rel (%p420) target = $region60
        $region59: #{tpu_custom_call.1} parent=11 // pred_region
          _
        $region60: #{tpu_custom_call.1} parent=11 // pred_fallthru
          _
        // Predicated region
        $region61: #{tpu_custom_call.1} parent=11 // pred_check
          %p423 = pneg %p313
        $region62: #{tpu_custom_call.1} parent=11 // pred_check_branch
          %425 = sbr.rel (%p423) target = $region64
        $region63: #{tpu_custom_call.1} parent=11 // pred_region
          _
        $region64: #{tpu_custom_call.1} parent=11 // pred_fallthru
          _
      $region12: #{tpu_custom_call.1} parent=5 // pred_fallthru
        _
      %p426 = scmp.lt.s32.totalorder %s23, 4
      // Predicated region
      $region65: #{tpu_custom_call.1} parent=5 // pred_check
        %p427 = pneg %p426
      $region66: #{tpu_custom_call.1} parent=5 // pred_check_branch
        %429 = sbr.rel (%p427) target = $region68
      $region67: #{tpu_custom_call.1} parent=5 // pred_region
        _
      $region68: #{tpu_custom_call.1} parent=5 // pred_fallthru
        _
      %p430 = scmp.le.s32.totalorder 1, %s23
      %p431 = scmp.lt.s32.totalorder %s23, 5
      %p432 = pnand %p430, %p431
      %p433 = pneg %p432
      // Predicated region
      $region69: #{tpu_custom_call.1} parent=5 // pred_check
        _
      $region70: #{tpu_custom_call.1} parent=5 // pred_check_branch
        %435 = sbr.rel (%p432) target = $region72
      $region71: #{tpu_custom_call.1} parent=5 // pred_region
        %s436 = ssub.s32 %s23, 1
        %s437 = smul.u32 2, %s32
        %p438 = scmp.lt.s32.totalorder %s437, 1
        %s439 = scalar_select %p438, %s437, 1
        %s440 = smul.addr %s439, 2
        %s441 = smul.addr %s440, 8
        %s442 = scalar_lea.vmem %s0, %s441
        %p443 = pneg %p61
        %p444 = pneg %p58
        %p445 = pneg %p82
        %p446 = pneg %p79
        %p447 = pneg %p103
        %p448 = pneg %p100
        %p449 = pneg %p124
        %p450 = pneg %p121
        %p451 = pneg %p145
        %p452 = pneg %p142
        %p453 = pneg %p166
        %p454 = pneg %p163
        %p455 = pneg %p187
        %p456 = pneg %p184
        %p457 = pneg %p208
        %p458 = pneg %p205
        %p459 = pneg %p229
        %p460 = pneg %p226
        %p461 = pneg %p250
        %p462 = pneg %p247
        %p463 = pneg %p271
        %p464 = pneg %p268
        %p465 = pneg %p292
        %p466 = pneg %p289
        %p467 = pneg %p313
        %p468 = pneg %p310
        %p469 = pneg %p339
        %p470 = pneg %p336
        %p471 = pneg %p365
        %p472 = pneg %p362
        %s473 = smul.u32 2, %s32
        %p474 = scmp.lt.s32.totalorder %s473, 1
        %s475 = scalar_select %p474, %s473, 1
        %s476 = smul.addr %s475, 2
        %s477 = smul.addr %s476, 8
        %s478 = scalar_lea.vmem %s0, %s477
        %s479 = smul.u32 2, %s32
        %s480 = smul.u32 2, %s32
        %s481 = smul.u32 2, %s32
        %p487 = scmp.eq.s32.totalorder %s33, 0
        // Predicated region
        $region73: #{tpu_custom_call.1} parent=71 // pred_check
          %p488 = pneg %p487
        $region74: #{tpu_custom_call.1} parent=71 // pred_check_branch
          %490 = sbr.rel (%p488) target = $region76
        $region75: #{tpu_custom_call.1} parent=71 // pred_region
          %v491 = vld [vmem:[%s478] sm:$0xff]
          %v492 = vld [vmem:[%s478 + $0x8] sm:$0xff]
          %v493 = vld [vmem:[%s478 + $0x10] sm:$0xff]
          %v494 = vld [vmem:[%s478 + $0x18] sm:$0xff]
          %v495 = vld [vmem:[%s1] sm:$0x1]
          %v496 = vld [vmem:[%s2] sm:$0x1]
          %vm497 = vcmask 523264
          %v498 = vsel %vm497, %v491, 0.0
          %499 = vadd.xlane.f32.xlu0 %v498
          %v500 = vpop.xlane.xlu0 %499
          %v501 = vsel %vm497, %v492, 0.0
          %502 = vadd.xlane.f32.xlu0 %v501
          %v503 = vpop.xlane.xlu0 %502
          %v504 = vsel %vm497, %v493, 0.0
          %505 = vadd.xlane.f32.xlu0 %v504
          %v506 = vpop.xlane.xlu0 %505
          %v507 = vsel %vm497, %v494, 0.0
          %508 = vadd.xlane.f32.xlu0 %v507
          %v509 = vpop.xlane.xlu0 %508
          %v510 = vrcp.pop 64.0
          %v511 = vmul.f32 %v500, %v510
          %v512 = vmul.f32 %v503, %v510
          %v513 = vmul.f32 %v506, %v510
          %v514 = vmul.f32 %v509, %v510
          %v515 = vsub.f32 %v491, %v511
          %v516 = vsub.f32 %v492, %v512
          %v517 = vsub.f32 %v493, %v513
          %v518 = vsub.f32 %v494, %v514
          %v519 = vmul.f32 %v515, %v515
          %v520 = vmul.f32 %v516, %v516
          %v521 = vmul.f32 %v517, %v517
          %v522 = vmul.f32 %v518, %v518
          %v523 = vsel %vm497, %v519, 0.0
          %524 = vadd.xlane.f32.xlu0 %v523
          %v525 = vpop.xlane.xlu0 %524
          %v526 = vsel %vm497, %v520, 0.0
          %527 = vadd.xlane.f32.xlu0 %v526
          %v528 = vpop.xlane.xlu0 %527
          %v529 = vsel %vm497, %v521, 0.0
          %530 = vadd.xlane.f32.xlu0 %v529
          %v531 = vpop.xlane.xlu0 %530
          %v532 = vsel %vm497, %v522, 0.0
          %533 = vadd.xlane.f32.xlu0 %v532
          %v534 = vpop.xlane.xlu0 %533
          %v535 = vmul.f32 %v525, %v510
          %v536 = vmul.f32 %v528, %v510
          %v537 = vmul.f32 %v531, %v510
          %v538 = vmul.f32 %v534, %v510
          %v539 = vadd.f32 %v535, 1e-05
          %v540 = vadd.f32 %v536, 1e-05
          %v541 = vadd.f32 %v537, 1e-05
          %v542 = vadd.f32 %v538, 1e-05
          %v543 = vrsqrt.pop %v539
          %v544 = vrsqrt.pop %v540
          %v545 = vrsqrt.pop %v541
          %v546 = vrsqrt.pop %v542
          %v547 = vmul.f32 %v515, %v543
          %v548 = vmul.f32 %v516, %v544
          %v549 = vmul.f32 %v517, %v545
          %v550 = vmul.f32 %v518, %v546
          %v552 = vlaneseq
          %v553 = vshrl.u32 %v552, 7
          %v554 = vsub.s32 0, %v553
          %v555 = vrot.slane %v495, %v554
          %v557 = vmul.f32 %v547, %v555
          %v558 = vmul.f32 %v548, %v555
          %v559 = vmul.f32 %v549, %v555
          %v560 = vmul.f32 %v550, %v555
          %v562 = vlaneseq
          %v563 = vshrl.u32 %v562, 7
          %v564 = vsub.s32 0, %v563
          %v565 = vrot.slane %v496, %v564
          %v567 = vadd.f32 %v557, %v565
          %v568 = vadd.f32 %v558, %v565
          %v569 = vadd.f32 %v559, %v565
          %v570 = vadd.f32 %v560, %v565
          %v571 = vpack.c.bf16 %v568, %v567
          %v572 = vpack.c.bf16 %v570, %v569
          %v573 = vld [vmem:[%s3] sm:$0xff]
          %v574 = vld [vmem:[%s3 + $0x8] sm:$0xff]
          %v575 = vld [vmem:[%s3 + $0x10] sm:$0xff]
          %v576 = vld [vmem:[%s3 + $0x18] sm:$0xff]
          %v577 = vld [vmem:[%s3 + $0x20] sm:$0xff]
          %v578 = vld [vmem:[%s3 + $0x28] sm:$0xff]
          %v579 = vld [vmem:[%s3 + $0x30] sm:$0xff]
          %v580 = vld [vmem:[%s3 + $0x38] sm:$0xff]
          %v589 = vunpack.c.l.b16 %v573
          %v590 = vunpack.c.h.b16 %v573
          %v591 = vunpack.c.l.b16 %v574
          %v592 = vunpack.c.h.b16 %v574
          %v593 = vunpack.c.l.b16 %v575
          %v594 = vunpack.c.h.b16 %v575
          %v595 = vunpack.c.l.b16 %v576
          %v596 = vunpack.c.h.b16 %v576
          %v597 = vunpack.c.l.b16 %v577
          %v598 = vunpack.c.h.b16 %v577
          %v599 = vunpack.c.l.b16 %v578
          %v600 = vunpack.c.h.b16 %v578
          %v601 = vunpack.c.l.b16 %v579
          %v602 = vunpack.c.h.b16 %v579
          %v603 = vunpack.c.l.b16 %v580
          %v604 = vunpack.c.h.b16 %v580
          %v605 = vpack.c.b16 %v591, %v589
          %v606 = vpack.c.b16 %v592, %v590
          %v607 = vpack.c.b16 %v595, %v593
          %v608 = vpack.c.b16 %v596, %v594
          %v609 = vpack.c.b16 %v599, %v597
          %v610 = vpack.c.b16 %v600, %v598
          %v611 = vpack.c.b16 %v603, %v601
          %v612 = vpack.c.b16 %v604, %v602
          %v622 = vsel %vm497, %v571, 0
          %v625 = vsel %vm497, %v572, 0
          %627 = vmatprep.subr.bf16.mxu0 0
          %628 = vmatpush1.bf16.msra.mxu0 0
          %629 = vmatprep.subr.bf16.mxu0 0
          %630 = vmatpush1.bf16.msra.mxu0 0
          %631 = vmatprep.subr.bf16.mxu0 0
          %632 = vmatpush1.bf16.msra.mxu0 0
          %633 = vmatprep.subr.bf16.mxu0 0
          %634 = vmatpush1.bf16.msra.mxu0 0
          %635 = vmatprep.subr.bf16.mxu0 %v612
          %636 = vmatpush1.bf16.msra.mxu0 %v611
          %637 = vmatprep.subr.bf16.mxu0 %v610
          %638 = vmatpush1.bf16.msra.mxu0 %v609
          %639 = vmatprep.subr.bf16.mxu0 %v608
          %640 = vmatpush1.bf16.msra.mxu0 %v607
          %641 = vmatprep.subr.bf16.mxu0 %v606
          %642 = vmatpush1.bf16.msra.mxu0 %v605
          %643 = vmatprep.subr.bf16.mxu0 0
          %644 = vmatpush2.bf16.msra.mxu0 0
          %645 = vmatprep.subr.bf16.mxu0 0
          %646 = vmatpush2.bf16.msra.mxu0 0
          %647 = vmatprep.subr.bf16.mxu0 0
          %648 = vmatpush2.bf16.msra.mxu0 0
          %649 = vmatprep.subr.bf16.mxu0 0
          %650 = vmatpush2.bf16.msra.mxu0 0
          %651 = vmatprep.subr.bf16.mxu0 0
          %652 = vmatpush2.bf16.msra.mxu0 0
          %653 = vmatprep.subr.bf16.mxu0 0
          %654 = vmatpush2.bf16.msra.mxu0 0
          %655 = vmatprep.subr.bf16.mxu0 0
          %656 = vmatpush2.bf16.msra.mxu0 0
          %657 = vmatprep.subr.bf16.mxu0 0
          %658 = vmatpush2.bf16.msra.mxu0 0
          %659 = vmatprep.mubr.bf16.mxu0 0
          %660 = vmatmul.mubr.bf16.gmra.mxu0 %v622
          %v661 = vpop.f32.mrf.mxu0
          %v662 = vadd.f32 0.0, %v661
          %v663 = vpop.f32.mrf.mxu0
          %v664 = vadd.f32 0.0, %v663
          %v665 = vpop.f32.mrf.mxu0
          %v666 = vadd.f32 0.0, %v665
          %v667 = vpop.f32.mrf.mxu0
          %v668 = vadd.f32 0.0, %v667
          %669 = vmatprep.mubr.bf16.mxu0 0
          %670 = vmatmul.mubr.bf16.gmra.mxu0 %v625
          %v671 = vpop.f32.mrf.mxu0
          %v672 = vadd.f32 0.0, %v671
          %v673 = vpop.f32.mrf.mxu0
          %v674 = vadd.f32 0.0, %v673
          %v675 = vpop.f32.mrf.mxu0
          %v676 = vadd.f32 0.0, %v675
          %v677 = vpop.f32.mrf.mxu0
          %v678 = vadd.f32 0.0, %v677
          %679 = vdwg.mxu0
          %v680 = vpack.c.bf16 %v666, %v662
          %v681 = vpack.c.bf16 %v668, %v664
          %v682 = vpack.c.bf16 %v676, %v672
          %v683 = vpack.c.bf16 %v678, %v674
          %685 = vrot.lane.b32.xlu0 %v680, 64
          %v686 = vpop.permute.xlu0 %685
          %vm687 = vcmask 130048
          %v689 = vsel %vm687, %v680, 0
          %v692 = vsel %vm687, %v686, 0
          %694 = vmatprep.subr.bf16.mxu0 0
          %695 = vmatpush1.bf16.xpose.msra.mxu0 0
          %696 = vmatprep.subr.bf16.mxu0 0
          %697 = vmatpush1.bf16.xpose.msra.mxu0 0
          %698 = vmatprep.subr.bf16.mxu0 0
          %699 = vmatpush1.bf16.xpose.msra.mxu0 0
          %700 = vmatprep.subr.bf16.mxu0 0
          %701 = vmatpush1.bf16.xpose.msra.mxu0 0
          %702 = vmatprep.subr.bf16.mxu0 0
          %703 = vmatpush1.bf16.xpose.msra.mxu0 0
          %704 = vmatprep.subr.bf16.mxu0 0
          %705 = vmatpush1.bf16.xpose.msra.mxu0 0
          %706 = vmatprep.subr.bf16.mxu0 0
          %707 = vmatpush1.bf16.xpose.msra.mxu0 0
          %708 = vmatprep.subr.bf16.mxu0 0
          %709 = vmatpush1.bf16.xpose.msra.mxu0 %v692
          %710 = vmatprep.subr.bf16.mxu0 0
          %711 = vmatpush2.bf16.xpose.msra.mxu0 0
          %712 = vmatprep.subr.bf16.mxu0 0
          %713 = vmatpush2.bf16.xpose.msra.mxu0 0
          %714 = vmatprep.subr.bf16.mxu0 0
          %715 = vmatpush2.bf16.xpose.msra.mxu0 0
          %716 = vmatprep.subr.bf16.mxu0 0
          %717 = vmatpush2.bf16.xpose.msra.mxu0 0
          %718 = vmatprep.subr.bf16.mxu0 0
          %719 = vmatpush2.bf16.xpose.msra.mxu0 0
          %720 = vmatprep.subr.bf16.mxu0 0
          %721 = vmatpush2.bf16.xpose.msra.mxu0 0
          %722 = vmatprep.subr.bf16.mxu0 0
          %723 = vmatpush2.bf16.xpose.msra.mxu0 0
          %724 = vmatprep.subr.bf16.mxu0 0
          %725 = vmatpush2.bf16.xpose.msra.mxu0 0
          %726 = vmatprep.mubr.bf16.mxu0 0
          %727 = vmatmul.mubr.bf16.gmra.mxu0 %v689
          %v728 = vpop.f32.mrf.mxu0
          %v729 = vadd.f32 0.0, %v728
          %v730 = vpop.f32.mrf.mxu0
          %v731 = vpop.f32.mrf.mxu0
          %v732 = vadd.f32 0.0, %v731
          %v733 = vpop.f32.mrf.mxu0
          %734 = vdwg.mxu0
          %736 = vrot.lane.b32.xlu0 %v682, 64
          %v737 = vpop.permute.xlu0 %736
          %v739 = vsel %vm687, %v682, 0
          %v742 = vsel %vm687, %v737, 0
          %744 = vmatprep.subr.bf16.mxu0 0
          %745 = vmatpush1.bf16.xpose.msra.mxu0 0
          %746 = vmatprep.subr.bf16.mxu0 0
          %747 = vmatpush1.bf16.xpose.msra.mxu0 0
          %748 = vmatprep.subr.bf16.mxu0 0
          %749 = vmatpush1.bf16.xpose.msra.mxu0 0
          %750 = vmatprep.subr.bf16.mxu0 0
          %751 = vmatpush1.bf16.xpose.msra.mxu0 0
          %752 = vmatprep.subr.bf16.mxu0 0
          %753 = vmatpush1.bf16.xpose.msra.mxu0 0
          %754 = vmatprep.subr.bf16.mxu0 0
          %755 = vmatpush1.bf16.xpose.msra.mxu0 0
          %756 = vmatprep.subr.bf16.mxu0 0
          %757 = vmatpush1.bf16.xpose.msra.mxu0 0
          %758 = vmatprep.subr.bf16.mxu0 0
          %759 = vmatpush1.bf16.xpose.msra.mxu0 %v742
          %760 = vmatprep.subr.bf16.mxu0 0
          %761 = vmatpush2.bf16.xpose.msra.mxu0 0
          %762 = vmatprep.subr.bf16.mxu0 0
          %763 = vmatpush2.bf16.xpose.msra.mxu0 0
          %764 = vmatprep.subr.bf16.mxu0 0
          %765 = vmatpush2.bf16.xpose.msra.mxu0 0
          %766 = vmatprep.subr.bf16.mxu0 0
          %767 = vmatpush2.bf16.xpose.msra.mxu0 0
          %768 = vmatprep.subr.bf16.mxu0 0
          %769 = vmatpush2.bf16.xpose.msra.mxu0 0
          %770 = vmatprep.subr.bf16.mxu0 0
          %771 = vmatpush2.bf16.xpose.msra.mxu0 0
          %772 = vmatprep.subr.bf16.mxu0 0
          %773 = vmatpush2.bf16.xpose.msra.mxu0 0
          %774 = vmatprep.subr.bf16.mxu0 0
          %775 = vmatpush2.bf16.xpose.msra.mxu0 0
          %776 = vmatprep.mubr.bf16.mxu0 0
          %777 = vmatmul.mubr.bf16.gmra.mxu0 %v739
          %v778 = vpop.f32.mrf.mxu0
          %v779 = vadd.f32 0.0, %v778
          %v780 = vpop.f32.mrf.mxu0
          %v781 = vpop.f32.mrf.mxu0
          %v782 = vadd.f32 0.0, %v781
          %v783 = vpop.f32.mrf.mxu0
          %784 = vdwg.mxu0
          %v785 = vsel %vm687, %v729, -inf
          %786 = vmax.xlane.f32.xlu0 %v785
          %v787 = vpop.xlane.xlu0 %786
          %v788 = vsel %vm687, %v732, -inf
          %789 = vmax.xlane.f32.xlu0 %v788
          %v790 = vpop.xlane.xlu0 %789
          %v791 = vsel %vm687, %v779, -inf
          %792 = vmax.xlane.f32.xlu0 %v791
          %v793 = vpop.xlane.xlu0 %792
          %v794 = vsel %vm687, %v782, -inf
          %795 = vmax.xlane.f32.xlu0 %v794
          %v796 = vpop.xlane.xlu0 %795
          %v797 = vsub.f32 %v729, %v787
          %v798 = vsub.f32 %v732, %v790
          %v799 = vsub.f32 %v779, %v793
          %v800 = vsub.f32 %v782, %v796
          %v801 = vmul.f32 %v797, 1.442695
          %v802 = vpow.pop %v801
          %v803 = vmul.f32 %v798, 1.442695
          %v804 = vpow.pop %v803
          %v805 = vmul.f32 %v799, 1.442695
          %v806 = vpow.pop %v805
          %v807 = vmul.f32 %v800, 1.442695
          %v808 = vpow.pop %v807
          %v809 = vsel %vm687, %v802, 0.0
          %810 = vadd.xlane.f32.xlu0 %v809
          %v811 = vpop.xlane.xlu0 %810
          %v812 = vsel %vm687, %v804, 0.0
          %813 = vadd.xlane.f32.xlu0 %v812
          %v814 = vpop.xlane.xlu0 %813
          %v815 = vsel %vm687, %v806, 0.0
          %816 = vadd.xlane.f32.xlu0 %v815
          %v817 = vpop.xlane.xlu0 %816
          %v818 = vsel %vm687, %v808, 0.0
          %819 = vadd.xlane.f32.xlu0 %v818
          %v820 = vpop.xlane.xlu0 %819
          %v821 = vrcp.pop %v811
          %v822 = vrcp.pop %v814
          %v823 = vrcp.pop %v817
          %v824 = vrcp.pop %v820
          %v825 = vmul.f32 %v802, %v821
          %v826 = vmul.f32 %v804, %v822
          %v827 = vmul.f32 %v806, %v823
          %v828 = vmul.f32 %v808, %v824
          %v829 = vpack.c.bf16 %v826, %v825
          %v830 = vpack.c.bf16 %v828, %v827
          %v832 = vsel %vm687, %v829, 0
          %834 = vmatprep.subr.bf16.mxu0 0
          %835 = vmatpush1.bf16.msra.mxu0 0
          %836 = vmatprep.subr.bf16.mxu0 0
          %837 = vmatpush1.bf16.msra.mxu0 0
          %838 = vmatprep.subr.bf16.mxu0 0
          %839 = vmatpush1.bf16.msra.mxu0 0
          %840 = vmatprep.subr.bf16.mxu0 0
          %841 = vmatpush1.bf16.msra.mxu0 0
          %842 = vmatprep.subr.bf16.mxu0 0
          %843 = vmatpush1.bf16.msra.mxu0 0
          %844 = vmatprep.subr.bf16.mxu0 0
          %845 = vmatpush1.bf16.msra.mxu0 0
          %846 = vmatprep.subr.bf16.mxu0 0
          %847 = vmatpush1.bf16.msra.mxu0 0
          %848 = vmatprep.subr.bf16.mxu0 0
          %849 = vmatpush1.bf16.msra.mxu0 %v681
          %850 = vmatprep.subr.bf16.mxu0 0
          %851 = vmatpush2.bf16.msra.mxu0 0
          %852 = vmatprep.subr.bf16.mxu0 0
          %853 = vmatpush2.bf16.msra.mxu0 0
          %854 = vmatprep.subr.bf16.mxu0 0
          %855 = vmatpush2.bf16.msra.mxu0 0
          %856 = vmatprep.subr.bf16.mxu0 0
          %857 = vmatpush2.bf16.msra.mxu0 0
          %858 = vmatprep.subr.bf16.mxu0 0
          %859 = vmatpush2.bf16.msra.mxu0 0
          %860 = vmatprep.subr.bf16.mxu0 0
          %861 = vmatpush2.bf16.msra.mxu0 0
          %862 = vmatprep.subr.bf16.mxu0 0
          %863 = vmatpush2.bf16.msra.mxu0 0
          %864 = vmatprep.subr.bf16.mxu0 0
          %865 = vmatpush2.bf16.msra.mxu0 0
          %866 = vmatprep.mubr.bf16.mxu0 0
          %867 = vmatmul.mubr.bf16.gmra.mxu0 %v832
          %v868 = vpop.f32.mrf.mxu0
          %v869 = vadd.f32 0.0, %v868
          %v870 = vpop.f32.mrf.mxu0
          %v871 = vpop.f32.mrf.mxu0
          %v872 = vadd.f32 0.0, %v871
          %v873 = vpop.f32.mrf.mxu0
          %874 = vdwg.mxu0
          %v876 = vsel %vm687, %v830, 0
          %878 = vmatprep.subr.bf16.mxu0 0
          %879 = vmatpush1.bf16.msra.mxu0 0
          %880 = vmatprep.subr.bf16.mxu0 0
          %881 = vmatpush1.bf16.msra.mxu0 0
          %882 = vmatprep.subr.bf16.mxu0 0
          %883 = vmatpush1.bf16.msra.mxu0 0
          %884 = vmatprep.subr.bf16.mxu0 0
          %885 = vmatpush1.bf16.msra.mxu0 0
          %886 = vmatprep.subr.bf16.mxu0 0
          %887 = vmatpush1.bf16.msra.mxu0 0
          %888 = vmatprep.subr.bf16.mxu0 0
          %889 = vmatpush1.bf16.msra.mxu0 0
          %890 = vmatprep.subr.bf16.mxu0 0
          %891 = vmatpush1.bf16.msra.mxu0 0
          %892 = vmatprep.subr.bf16.mxu0 0
          %893 = vmatpush1.bf16.msra.mxu0 %v683
          %894 = vmatprep.subr.bf16.mxu0 0
          %895 = vmatpush2.bf16.msra.mxu0 0
          %896 = vmatprep.subr.bf16.mxu0 0
          %897 = vmatpush2.bf16.msra.mxu0 0
          %898 = vmatprep.subr.bf16.mxu0 0
          %899 = vmatpush2.bf16.msra.mxu0 0
          %900 = vmatprep.subr.bf16.mxu0 0
          %901 = vmatpush2.bf16.msra.mxu0 0
          %902 = vmatprep.subr.bf16.mxu0 0
          %903 = vmatpush2.bf16.msra.mxu0 0
          %904 = vmatprep.subr.bf16.mxu0 0
          %905 = vmatpush2.bf16.msra.mxu0 0
          %906 = vmatprep.subr.bf16.mxu0 0
          %907 = vmatpush2.bf16.msra.mxu0 0
          %908 = vmatprep.subr.bf16.mxu0 0
          %909 = vmatpush2.bf16.msra.mxu0 0
          %910 = vmatprep.mubr.bf16.mxu0 0
          %911 = vmatmul.mubr.bf16.gmra.mxu0 %v876
          %v912 = vpop.f32.mrf.mxu0
          %v913 = vadd.f32 0.0, %v912
          %v914 = vpop.f32.mrf.mxu0
          %v915 = vpop.f32.mrf.mxu0
          %v916 = vadd.f32 0.0, %v915
          %v917 = vpop.f32.mrf.mxu0
          %918 = vdwg.mxu0
          %919 = vst.msk [vmem:[#allocation5] sm:$0xff] %vm687, %v869
          %920 = vst.msk [vmem:[#allocation5 + $0x8] sm:$0xff] %vm687, %v872
          %921 = vst.msk [vmem:[#allocation5 + $0x10] sm:$0xff] %vm687, %v913
          %922 = vst.msk [vmem:[#allocation5 + $0x18] sm:$0xff] %vm687, %v916
          %923 = vrot.lane.b32.xlu0 %v680, 112
          %v924 = vpop.permute.xlu0 %923
          %925 = vrot.lane.b32.xlu0 %v680, 48
          %v926 = vpop.permute.xlu0 %925
          %v928 = vsel %vm687, %v924, 0
          %v931 = vsel %vm687, %v926, 0
          %933 = vmatprep.subr.bf16.mxu0 0
          %934 = vmatpush1.bf16.xpose.msra.mxu0 0
          %935 = vmatprep.subr.bf16.mxu0 0
          %936 = vmatpush1.bf16.xpose.msra.mxu0 0
          %937 = vmatprep.subr.bf16.mxu0 0
          %938 = vmatpush1.bf16.xpose.msra.mxu0 0
          %939 = vmatprep.subr.bf16.mxu0 0
          %940 = vmatpush1.bf16.xpose.msra.mxu0 0
          %941 = vmatprep.subr.bf16.mxu0 0
          %942 = vmatpush1.bf16.xpose.msra.mxu0 0
          %943 = vmatprep.subr.bf16.mxu0 0
          %944 = vmatpush1.bf16.xpose.msra.mxu0 0
          %945 = vmatprep.subr.bf16.mxu0 0
          %946 = vmatpush1.bf16.xpose.msra.mxu0 0
          %947 = vmatprep.subr.bf16.mxu0 0
          %948 = vmatpush1.bf16.xpose.msra.mxu0 %v931
          %949 = vmatprep.subr.bf16.mxu0 0
          %950 = vmatpush2.bf16.xpose.msra.mxu0 0
          %951 = vmatprep.subr.bf16.mxu0 0
          %952 = vmatpush2.bf16.xpose.msra.mxu0 0
          %953 = vmatprep.subr.bf16.mxu0 0
          %954 = vmatpush2.bf16.xpose.msra.mxu0 0
          %955 = vmatprep.subr.bf16.mxu0 0
          %956 = vmatpush2.bf16.xpose.msra.mxu0 0
          %957 = vmatprep.subr.bf16.mxu0 0
          %958 = vmatpush2.bf16.xpose.msra.mxu0 0
          %959 = vmatprep.subr.bf16.mxu0 0
          %960 = vmatpush2.bf16.xpose.msra.mxu0 0
          %961 = vmatprep.subr.bf16.mxu0 0
          %962 = vmatpush2.bf16.xpose.msra.mxu0 0
          %963 = vmatprep.subr.bf16.mxu0 0
          %964 = vmatpush2.bf16.xpose.msra.mxu0 0
          %965 = vmatprep.mubr.bf16.mxu0 0
          %966 = vmatmul.mubr.bf16.gmra.mxu0 %v928
          %v967 = vpop.f32.mrf.mxu0
          %v968 = vadd.f32 0.0, %v967
          %v969 = vpop.f32.mrf.mxu0
          %v970 = vpop.f32.mrf.mxu0
          %v971 = vadd.f32 0.0, %v970
          %v972 = vpop.f32.mrf.mxu0
          %973 = vdwg.mxu0
          %974 = vrot.lane.b32.xlu0 %v682, 112
          %v975 = vpop.permute.xlu0 %974
          %976 = vrot.lane.b32.xlu0 %v682, 48
          %v977 = vpop.permute.xlu0 %976
          %v979 = vsel %vm687, %v975, 0
          %v982 = vsel %vm687, %v977, 0
          %984 = vmatprep.subr.bf16.mxu0 0
          %985 = vmatpush1.bf16.xpose.msra.mxu0 0
          %986 = vmatprep.subr.bf16.mxu0 0
          %987 = vmatpush1.bf16.xpose.msra.mxu0 0
          %988 = vmatprep.subr.bf16.mxu0 0
          %989 = vmatpush1.bf16.xpose.msra.mxu0 0
          %990 = vmatprep.subr.bf16.mxu0 0
          %991 = vmatpush1.bf16.xpose.msra.mxu0 0
          %992 = vmatprep.subr.bf16.mxu0 0
          %993 = vmatpush1.bf16.xpose.msra.mxu0 0
          %994 = vmatprep.subr.bf16.mxu0 0
          %995 = vmatpush1.bf16.xpose.msra.mxu0 0
          %996 = vmatprep.subr.bf16.mxu0 0
          %997 = vmatpush1.bf16.xpose.msra.mxu0 0
          %998 = vmatprep.subr.bf16.mxu0 0
          %999 = vmatpush1.bf16.xpose.msra.mxu0 %v982
          %1000 = vmatprep.subr.bf16.mxu0 0
          %1001 = vmatpush2.bf16.xpose.msra.mxu0 0
          %1002 = vmatprep.subr.bf16.mxu0 0
          %1003 = vmatpush2.bf16.xpose.msra.mxu0 0
          %1004 = vmatprep.subr.bf16.mxu0 0
          %1005 = vmatpush2.bf16.xpose.msra.mxu0 0
          %1006 = vmatprep.subr.bf16.mxu0 0
          %1007 = vmatpush2.bf16.xpose.msra.mxu0 0
          %1008 = vmatprep.subr.bf16.mxu0 0
          %1009 = vmatpush2.bf16.xpose.msra.mxu0 0
          %1010 = vmatprep.subr.bf16.mxu0 0
          %1011 = vmatpush2.bf16.xpose.msra.mxu0 0
          %1012 = vmatprep.subr.bf16.mxu0 0
          %1013 = vmatpush2.bf16.xpose.msra.mxu0 0
          %1014 = vmatprep.subr.bf16.mxu0 0
          %1015 = vmatpush2.bf16.xpose.msra.mxu0 0
          %1016 = vmatprep.mubr.bf16.mxu0 0
          %1017 = vmatmul.mubr.bf16.gmra.mxu0 %v979
          %v1018 = vpop.f32.mrf.mxu0
          %v1019 = vadd.f32 0.0, %v1018
          %v1020 = vpop.f32.mrf.mxu0
          %v1021 = vpop.f32.mrf.mxu0
          %v1022 = vadd.f32 0.0, %v1021
          %v1023 = vpop.f32.mrf.mxu0
          %1024 = vdwg.mxu0
          %v1025 = vsel %vm687, %v968, -inf
          %1026 = vmax.xlane.f32.xlu0 %v1025
          %v1027 = vpop.xlane.xlu0 %1026
          %v1028 = vsel %vm687, %v971, -inf
          %1029 = vmax.xlane.f32.xlu0 %v1028
          %v1030 = vpop.xlane.xlu0 %1029
          %v1031 = vsel %vm687, %v1019, -inf
          %1032 = vmax.xlane.f32.xlu0 %v1031
          %v1033 = vpop.xlane.xlu0 %1032
          %v1034 = vsel %vm687, %v1022, -inf
          %1035 = vmax.xlane.f32.xlu0 %v1034
          %v1036 = vpop.xlane.xlu0 %1035
          %v1037 = vsub.f32 %v968, %v1027
          %v1038 = vsub.f32 %v971, %v1030
          %v1039 = vsub.f32 %v1019, %v1033
          %v1040 = vsub.f32 %v1022, %v1036
          %v1041 = vmul.f32 %v1037, 1.442695
          %v1042 = vpow.pop %v1041
          %v1043 = vmul.f32 %v1038, 1.442695
          %v1044 = vpow.pop %v1043
          %v1045 = vmul.f32 %v1039, 1.442695
          %v1046 = vpow.pop %v1045
          %v1047 = vmul.f32 %v1040, 1.442695
          %v1048 = vpow.pop %v1047
          %v1049 = vsel %vm687, %v1042, 0.0
          %1050 = vadd.xlane.f32.xlu0 %v1049
          %v1051 = vpop.xlane.xlu0 %1050
          %v1052 = vsel %vm687, %v1044, 0.0
          %1053 = vadd.xlane.f32.xlu0 %v1052
          %v1054 = vpop.xlane.xlu0 %1053
          %v1055 = vsel %vm687, %v1046, 0.0
          %1056 = vadd.xlane.f32.xlu0 %v1055
          %v1057 = vpop.xlane.xlu0 %1056
          %v1058 = vsel %vm687, %v1048, 0.0
          %1059 = vadd.xlane.f32.xlu0 %v1058
          %v1060 = vpop.xlane.xlu0 %1059
          %v1061 = vrcp.pop %v1051
          %v1062 = vrcp.pop %v1054
          %v1063 = vrcp.pop %v1057
          %v1064 = vrcp.pop %v1060
          %v1065 = vmul.f32 %v1042, %v1061
          %v1066 = vmul.f32 %v1044, %v1062
          %v1067 = vmul.f32 %v1046, %v1063
          %v1068 = vmul.f32 %v1048, %v1064
          %v1069 = vpack.c.bf16 %v1066, %v1065
          %v1070 = vpack.c.bf16 %v1068, %v1067
          %1072 = vrot.lane.b32.xlu0 %v681, 112
          %v1073 = vpop.permute.xlu0 %1072
          %v1076 = vsel %vm687, %v1069, 0
          %1078 = vmatprep.subr.bf16.mxu0 0
          %1079 = vmatpush1.bf16.msra.mxu0 0
          %1080 = vmatprep.subr.bf16.mxu0 0
          %1081 = vmatpush1.bf16.msra.mxu0 0
          %1082 = vmatprep.subr.bf16.mxu0 0
          %1083 = vmatpush1.bf16.msra.mxu0 0
          %1084 = vmatprep.subr.bf16.mxu0 0
          %1085 = vmatpush1.bf16.msra.mxu0 0
          %1086 = vmatprep.subr.bf16.mxu0 0
          %1087 = vmatpush1.bf16.msra.mxu0 0
          %1088 = vmatprep.subr.bf16.mxu0 0
          %1089 = vmatpush1.bf16.msra.mxu0 0
          %1090 = vmatprep.subr.bf16.mxu0 0
          %1091 = vmatpush1.bf16.msra.mxu0 0
          %1092 = vmatprep.subr.bf16.mxu0 0
          %1093 = vmatpush1.bf16.msra.mxu0 %v1073
          %1094 = vmatprep.subr.bf16.mxu0 0
          %1095 = vmatpush2.bf16.msra.mxu0 0
          %1096 = vmatprep.subr.bf16.mxu0 0
          %1097 = vmatpush2.bf16.msra.mxu0 0
          %1098 = vmatprep.subr.bf16.mxu0 0
          %1099 = vmatpush2.bf16.msra.mxu0 0
          %1100 = vmatprep.subr.bf16.mxu0 0
          %1101 = vmatpush2.bf16.msra.mxu0 0
          %1102 = vmatprep.subr.bf16.mxu0 0
          %1103 = vmatpush2.bf16.msra.mxu0 0
          %1104 = vmatprep.subr.bf16.mxu0 0
          %1105 = vmatpush2.bf16.msra.mxu0 0
          %1106 = vmatprep.subr.bf16.mxu0 0
          %1107 = vmatpush2.bf16.msra.mxu0 0
          %1108 = vmatprep.subr.bf16.mxu0 0
          %1109 = vmatpush2.bf16.msra.mxu0 0
          %1110 = vmatprep.mubr.bf16.mxu0 0
          %1111 = vmatmul.mubr.bf16.gmra.mxu0 %v1076
          %v1112 = vpop.f32.mrf.mxu0
          %v1113 = vadd.f32 0.0, %v1112
          %v1114 = vpop.f32.mrf.mxu0
          %v1115 = vpop.f32.mrf.mxu0
          %v1116 = vadd.f32 0.0, %v1115
          %v1117 = vpop.f32.mrf.mxu0
          %1118 = vdwg.mxu0
          %1120 = vrot.lane.b32.xlu0 %v683, 112
          %v1121 = vpop.permute.xlu0 %1120
          %v1124 = vsel %vm687, %v1070, 0
          %1126 = vmatprep.subr.bf16.mxu0 0
          %1127 = vmatpush1.bf16.msra.mxu0 0
          %1128 = vmatprep.subr.bf16.mxu0 0
          %1129 = vmatpush1.bf16.msra.mxu0 0
          %1130 = vmatprep.subr.bf16.mxu0 0
          %1131 = vmatpush1.bf16.msra.mxu0 0
          %1132 = vmatprep.subr.bf16.mxu0 0
          %1133 = vmatpush1.bf16.msra.mxu0 0
          %1134 = vmatprep.subr.bf16.mxu0 0
          %1135 = vmatpush1.bf16.msra.mxu0 0
          %1136 = vmatprep.subr.bf16.mxu0 0
          %1137 = vmatpush1.bf16.msra.mxu0 0
          %1138 = vmatprep.subr.bf16.mxu0 0
          %1139 = vmatpush1.bf16.msra.mxu0 0
          %1140 = vmatprep.subr.bf16.mxu0 0
          %1141 = vmatpush1.bf16.msra.mxu0 %v1121
          %1142 = vmatprep.subr.bf16.mxu0 0
          %1143 = vmatpush2.bf16.msra.mxu0 0
          %1144 = vmatprep.subr.bf16.mxu0 0
          %1145 = vmatpush2.bf16.msra.mxu0 0
          %1146 = vmatprep.subr.bf16.mxu0 0
          %1147 = vmatpush2.bf16.msra.mxu0 0
          %1148 = vmatprep.subr.bf16.mxu0 0
          %1149 = vmatpush2.bf16.msra.mxu0 0
          %1150 = vmatprep.subr.bf16.mxu0 0
          %1151 = vmatpush2.bf16.msra.mxu0 0
          %1152 = vmatprep.subr.bf16.mxu0 0
          %1153 = vmatpush2.bf16.msra.mxu0 0
          %1154 = vmatprep.subr.bf16.mxu0 0
          %1155 = vmatpush2.bf16.msra.mxu0 0
          %1156 = vmatprep.subr.bf16.mxu0 0
          %1157 = vmatpush2.bf16.msra.mxu0 0
          %1158 = vmatprep.mubr.bf16.mxu0 0
          %1159 = vmatmul.mubr.bf16.gmra.mxu0 %v1124
          %v1160 = vpop.f32.mrf.mxu0
          %v1161 = vadd.f32 0.0, %v1160
          %v1162 = vpop.f32.mrf.mxu0
          %v1163 = vpop.f32.mrf.mxu0
          %v1164 = vadd.f32 0.0, %v1163
          %v1165 = vpop.f32.mrf.mxu0
          %1166 = vdwg.mxu0
          %1171 = vrot.lane.b32.xlu0 %v1113, 16
          %v1172 = vpop.permute.xlu0 %1171
          %1173 = vrot.lane.b32.xlu0 %v1116, 16
          %v1174 = vpop.permute.xlu0 %1173
          %1175 = vrot.lane.b32.xlu0 %v1161, 16
          %v1176 = vpop.permute.xlu0 %1175
          %1177 = vrot.lane.b32.xlu0 %v1164, 16
          %v1178 = vpop.permute.xlu0 %1177
          %vm1183 = vcmask 261248
          %1184 = vst.msk [vmem:[#allocation5] sm:$0xff] %vm1183, %v1172
          %1185 = vst.msk [vmem:[#allocation5 + $0x8] sm:$0xff] %vm1183, %v1174
          %1186 = vst.msk [vmem:[#allocation5 + $0x10] sm:$0xff] %vm1183, %v1176
          %1187 = vst.msk [vmem:[#allocation5 + $0x18] sm:$0xff] %vm1183, %v1178
          %1188 = vrot.lane.b32.xlu0 %v680, 96
          %v1189 = vpop.permute.xlu0 %1188
          %1190 = vrot.lane.b32.xlu0 %v680, 32
          %v1191 = vpop.permute.xlu0 %1190
          %v1193 = vsel %vm687, %v1189, 0
          %v1196 = vsel %vm687, %v1191, 0
          %1198 = vmatprep.subr.bf16.mxu0 0
          %1199 = vmatpush1.bf16.xpose.msra.mxu0 0
          %1200 = vmatprep.subr.bf16.mxu0 0
          %1201 = vmatpush1.bf16.xpose.msra.mxu0 0
          %1202 = vmatprep.subr.bf16.mxu0 0
          %1203 = vmatpush1.bf16.xpose.msra.mxu0 0
          %1204 = vmatprep.subr.bf16.mxu0 0
          %1205 = vmatpush1.bf16.xpose.msra.mxu0 0
          %1206 = vmatprep.subr.bf16.mxu0 0
          %1207 = vmatpush1.bf16.xpose.msra.mxu0 0
          %1208 = vmatprep.subr.bf16.mxu0 0
          %1209 = vmatpush1.bf16.xpose.msra.mxu0 0
          %1210 = vmatprep.subr.bf16.mxu0 0
          %1211 = vmatpush1.bf16.xpose.msra.mxu0 0
          %1212 = vmatprep.subr.bf16.mxu0 0
          %1213 = vmatpush1.bf16.xpose.msra.mxu0 %v1196
          %1214 = vmatprep.subr.bf16.mxu0 0
          %1215 = vmatpush2.bf16.xpose.msra.mxu0 0
          %1216 = vmatprep.subr.bf16.mxu0 0
          %1217 = vmatpush2.bf16.xpose.msra.mxu0 0
          %1218 = vmatprep.subr.bf16.mxu0 0
          %1219 = vmatpush2.bf16.xpose.msra.mxu0 0
          %1220 = vmatprep.subr.bf16.mxu0 0
          %1221 = vmatpush2.bf16.xpose.msra.mxu0 0
          %1222 = vmatprep.subr.bf16.mxu0 0
          %1223 = vmatpush2.bf16.xpose.msra.mxu0 0
          %1224 = vmatprep.subr.bf16.mxu0 0
          %1225 = vmatpush2.bf16.xpose.msra.mxu0 0
          %1226 = vmatprep.subr.bf16.mxu0 0
          %1227 = vmatpush2.bf16.xpose.msra.mxu0 0
          %1228 = vmatprep.subr.bf16.mxu0 0
          %1229 = vmatpush2.bf16.xpose.msra.mxu0 0
          %1230 = vmatprep.mubr.bf16.mxu0 0
          %1231 = vmatmul.mubr.bf16.gmra.mxu0 %v1193
          %v1232 = vpop.f32.mrf.mxu0
          %v1233 = vadd.f32 0.0, %v1232
          %v1234 = vpop.f32.mrf.mxu0
          %v1235 = vpop.f32.mrf.mxu0
          %v1236 = vadd.f32 0.0, %v1235
          %v1237 = vpop.f32.mrf.mxu0
          %1238 = vdwg.mxu0
          %1239 = vrot.lane.b32.xlu0 %v682, 96
          %v1240 = vpop.permute.xlu0 %1239
          %1241 = vrot.lane.b32.xlu0 %v682, 32
          %v1242 = vpop.permute.xlu0 %1241
          %v1244 = vsel %vm687, %v1240, 0
          %v1247 = vsel %vm687, %v1242, 0
          %1249 = vmatprep.subr.bf16.mxu0 0
          %1250 = vmatpush1.bf16.xpose.msra.mxu0 0
          %1251 = vmatprep.subr.bf16.mxu0 0
          %1252 = vmatpush1.bf16.xpose.msra.mxu0 0
          %1253 = vmatprep.subr.bf16.mxu0 0
          %1254 = vmatpush1.bf16.xpose.msra.mxu0 0
          %1255 = vmatprep.subr.bf16.mxu0 0
          %1256 = vmatpush1.bf16.xpose.msra.mxu0 0
          %1257 = vmatprep.subr.bf16.mxu0 0
          %1258 = vmatpush1.bf16.xpose.msra.mxu0 0
          %1259 = vmatprep.subr.bf16.mxu0 0
          %1260 = vmatpush1.bf16.xpose.msra.mxu0 0
          %1261 = vmatprep.subr.bf16.mxu0 0
          %1262 = vmatpush1.bf16.xpose.msra.mxu0 0
          %1263 = vmatprep.subr.bf16.mxu0 0
          %1264 = vmatpush1.bf16.xpose.msra.mxu0 %v1247
          %1265 = vmatprep.subr.bf16.mxu0 0
          %1266 = vmatpush2.bf16.xpose.msra.mxu0 0
          %1267 = vmatprep.subr.bf16.mxu0 0
          %1268 = vmatpush2.bf16.xpose.msra.mxu0 0
          %1269 = vmatprep.subr.bf16.mxu0 0
          %1270 = vmatpush2.bf16.xpose.msra.mxu0 0
          %1271 = vmatprep.subr.bf16.mxu0 0
          %1272 = vmatpush2.bf16.xpose.msra.mxu0 0
          %1273 = vmatprep.subr.bf16.mxu0 0
          %1274 = vmatpush2.bf16.xpose.msra.mxu0 0
          %1275 = vmatprep.subr.bf16.mxu0 0
          %1276 = vmatpush2.bf16.xpose.msra.mxu0 0
          %1277 = vmatprep.subr.bf16.mxu0 0
          %1278 = vmatpush2.bf16.xpose.msra.mxu0 0
          %1279 = vmatprep.subr.bf16.mxu0 0
          %1280 = vmatpush2.bf16.xpose.msra.mxu0 0
          %1281 = vmatprep.mubr.bf16.mxu0 0
          %1282 = vmatmul.mubr.bf16.gmra.mxu0 %v1244
          %v1283 = vpop.f32.mrf.mxu0
          %v1284 = vadd.f32 0.0, %v1283
          %v1285 = vpop.f32.mrf.mxu0
          %v1286 = vpop.f32.mrf.mxu0
          %v1287 = vadd.f32 0.0, %v1286
          %v1288 = vpop.f32.mrf.mxu0
          %1289 = vdwg.mxu0
          %v1290 = vsel %vm687, %v1233, -inf
          %1291 = vmax.xlane.f32.xlu0 %v1290
          %v1292 = vpop.xlane.xlu0 %1291
          %v1293 = vsel %vm687, %v1236, -inf
          %1294 = vmax.xlane.f32.xlu0 %v1293
          %v1295 = vpop.xlane.xlu0 %1294
          %v1296 = vsel %vm687, %v1284, -inf
          %1297 = vmax.xlane.f32.xlu0 %v1296
          %v1298 = vpop.xlane.xlu0 %1297
          %v1299 = vsel %vm687, %v1287, -inf
          %1300 = vmax.xlane.f32.xlu0 %v1299
          %v1301 = vpop.xlane.xlu0 %1300
          %v1302 = vsub.f32 %v1233, %v1292
          %v1303 = vsub.f32 %v1236, %v1295
          %v1304 = vsub.f32 %v1284, %v1298
          %v1305 = vsub.f32 %v1287, %v1301
          %v1306 = vmul.f32 %v1302, 1.442695
          %v1307 = vpow.pop %v1306
          %v1308 = vmul.f32 %v1303, 1.442695
          %v1309 = vpow.pop %v1308
          %v1310 = vmul.f32 %v1304, 1.442695
          %v1311 = vpow.pop %v1310
          %v1312 = vmul.f32 %v1305, 1.442695
          %v1313 = vpow.pop %v1312
          %v1314 = vsel %vm687, %v1307, 0.0
          %1315 = vadd.xlane.f32.xlu0 %v1314
          %v1316 = vpop.xlane.xlu0 %1315
          %v1317 = vsel %vm687, %v1309, 0.0
          %1318 = vadd.xlane.f32.xlu0 %v1317
          %v1319 = vpop.xlane.xlu0 %1318
          %v1320 = vsel %vm687, %v1311, 0.0
          %1321 = vadd.xlane.f32.xlu0 %v1320
          %v1322 = vpop.xlane.xlu0 %1321
          %v1323 = vsel %vm687, %v1313, 0.0
          %1324 = vadd.xlane.f32.xlu0 %v1323
          %v1325 = vpop.xlane.xlu0 %1324
          %v1326 = vrcp.pop %v1316
          %v1327 = vrcp.pop %v1319
          %v1328 = vrcp.pop %v1322
          %v1329 = vrcp.pop %v1325
          %v1330 = vmul.f32 %v1307, %v1326
          %v1331 = vmul.f32 %v1309, %v1327
          %v1332 = vmul.f32 %v1311, %v1328
          %v1333 = vmul.f32 %v1313, %v1329
          %v1334 = vpack.c.bf16 %v1331, %v1330
          %v1335 = vpack.c.bf16 %v1333, %v1332
          %1336 = vrot.lane.b32.xlu0 %v681, 96
          %v1337 = vpop.permute.xlu0 %1336
          %v1340 = vsel %vm687, %v1334, 0
          %1342 = vmatprep.subr.bf16.mxu0 0
          %1343 = vmatpush1.bf16.msra.mxu0 0
          %1344 = vmatprep.subr.bf16.mxu0 0
          %1345 = vmatpush1.bf16.msra.mxu0 0
          %1346 = vmatprep.subr.bf16.mxu0 0
          %1347 = vmatpush1.bf16.msra.mxu0 0
          %1348 = vmatprep.subr.bf16.mxu0 0
          %1349 = vmatpush1.bf16.msra.mxu0 0
          %1350 = vmatprep.subr.bf16.mxu0 0
          %1351 = vmatpush1.bf16.msra.mxu0 0
          %1352 = vmatprep.subr.bf16.mxu0 0
          %1353 = vmatpush1.bf16.msra.mxu0 0
          %1354 = vmatprep.subr.bf16.mxu0 0
          %1355 = vmatpush1.bf16.msra.mxu0 0
          %1356 = vmatprep.subr.bf16.mxu0 0
          %1357 = vmatpush1.bf16.msra.mxu0 %v1337
          %1358 = vmatprep.subr.bf16.mxu0 0
          %1359 = vmatpush2.bf16.msra.mxu0 0
          %1360 = vmatprep.subr.bf16.mxu0 0
          %1361 = vmatpush2.bf16.msra.mxu0 0
          %1362 = vmatprep.subr.bf16.mxu0 0
          %1363 = vmatpush2.bf16.msra.mxu0 0
          %1364 = vmatprep.subr.bf16.mxu0 0
          %1365 = vmatpush2.bf16.msra.mxu0 0
          %1366 = vmatprep.subr.bf16.mxu0 0
          %1367 = vmatpush2.bf16.msra.mxu0 0
          %1368 = vmatprep.subr.bf16.mxu0 0
          %1369 = vmatpush2.bf16.msra.mxu0 0
          %1370 = vmatprep.subr.bf16.mxu0 0
          %1371 = vmatpush2.bf16.msra.mxu0 0
          %1372 = vmatprep.subr.bf16.mxu0 0
          %1373 = vmatpush2.bf16.msra.mxu0 0
          %1374 = vmatprep.mubr.bf16.mxu0 0
          %1375 = vmatmul.mubr.bf16.gmra.mxu0 %v1340
          %v1376 = vpop.f32.mrf.mxu0
          %v1377 = vadd.f32 0.0, %v1376
          %v1378 = vpop.f32.mrf.mxu0
          %v1379 = vpop.f32.mrf.mxu0
          %v1380 = vadd.f32 0.0, %v1379
          %v1381 = vpop.f32.mrf.mxu0
          %1382 = vdwg.mxu0
          %1383 = vrot.lane.b32.xlu0 %v683, 96
          %v1384 = vpop.permute.xlu0 %1383
          %v1387 = vsel %vm687, %v1335, 0
          %1389 = vmatprep.subr.bf16.mxu0 0
          %1390 = vmatpush1.bf16.msra.mxu0 0
          %1391 = vmatprep.subr.bf16.mxu0 0
          %1392 = vmatpush1.bf16.msra.mxu0 0
          %1393 = vmatprep.subr.bf16.mxu0 0
          %1394 = vmatpush1.bf16.msra.mxu0 0
          %1395 = vmatprep.subr.bf16.mxu0 0
          %1396 = vmatpush1.bf16.msra.mxu0 0
          %1397 = vmatprep.subr.bf16.mxu0 0
          %1398 = vmatpush1.bf16.msra.mxu0 0
          %1399 = vmatprep.subr.bf16.mxu0 0
          %1400 = vmatpush1.bf16.msra.mxu0 0
          %1401 = vmatprep.subr.bf16.mxu0 0
          %1402 = vmatpush1.bf16.msra.mxu0 0
          %1403 = vmatprep.subr.bf16.mxu0 0
          %1404 = vmatpush1.bf16.msra.mxu0 %v1384
          %1405 = vmatprep.subr.bf16.mxu0 0
          %1406 = vmatpush2.bf16.msra.mxu0 0
          %1407 = vmatprep.subr.bf16.mxu0 0
          %1408 = vmatpush2.bf16.msra.mxu0 0
          %1409 = vmatprep.subr.bf16.mxu0 0
          %1410 = vmatpush2.bf16.msra.mxu0 0
          %1411 = vmatprep.subr.bf16.mxu0 0
          %1412 = vmatpush2.bf16.msra.mxu0 0
          %1413 = vmatprep.subr.bf16.mxu0 0
          %1414 = vmatpush2.bf16.msra.mxu0 0
          %1415 = vmatprep.subr.bf16.mxu0 0
          %1416 = vmatpush2.bf16.msra.mxu0 0
          %1417 = vmatprep.subr.bf16.mxu0 0
          %1418 = vmatpush2.bf16.msra.mxu0 0
          %1419 = vmatprep.subr.bf16.mxu0 0
          %1420 = vmatpush2.bf16.msra.mxu0 0
          %1421 = vmatprep.mubr.bf16.mxu0 0
          %1422 = vmatmul.mubr.bf16.gmra.mxu0 %v1387
          %v1423 = vpop.f32.mrf.mxu0
          %v1424 = vadd.f32 0.0, %v1423
          %v1425 = vpop.f32.mrf.mxu0
          %v1426 = vpop.f32.mrf.mxu0
          %v1427 = vadd.f32 0.0, %v1426
          %v1428 = vpop.f32.mrf.mxu0
          %1429 = vdwg.mxu0
          %1434 = vrot.lane.b32.xlu0 %v1377, 32
          %v1435 = vpop.permute.xlu0 %1434
          %1436 = vrot.lane.b32.xlu0 %v1380, 32
          %v1437 = vpop.permute.xlu0 %1436
          %1438 = vrot.lane.b32.xlu0 %v1424, 32
          %v1439 = vpop.permute.xlu0 %1438
          %1440 = vrot.lane.b32.xlu0 %v1427, 32
          %v1441 = vpop.permute.xlu0 %1440
          %vm1446 = vcmask 392448
          %1447 = vst.msk [vmem:[#allocation5] sm:$0xff] %vm1446, %v1435
          %1448 = vst.msk [vmem:[#allocation5 + $0x8] sm:$0xff] %vm1446, %v1437
          %1449 = vst.msk [vmem:[#allocation5 + $0x10] sm:$0xff] %vm1446, %v1439
          %1450 = vst.msk [vmem:[#allocation5 + $0x18] sm:$0xff] %vm1446, %v1441
          %1451 = vrot.lane.b32.xlu0 %v680, 80
          %v1452 = vpop.permute.xlu0 %1451
          %1453 = vrot.lane.b32.xlu0 %v680, 16
          %v1454 = vpop.permute.xlu0 %1453
          %v1456 = vsel %vm687, %v1452, 0
          %v1459 = vsel %vm687, %v1454, 0
          %1461 = vmatprep.subr.bf16.mxu0 0
          %1462 = vmatpush1.bf16.xpose.msra.mxu0 0
          %1463 = vmatprep.subr.bf16.mxu0 0
          %1464 = vmatpush1.bf16.xpose.msra.mxu0 0
          %1465 = vmatprep.subr.bf16.mxu0 0
          %1466 = vmatpush1.bf16.xpose.msra.mxu0 0
          %1467 = vmatprep.subr.bf16.mxu0 0
          %1468 = vmatpush1.bf16.xpose.msra.mxu0 0
          %1469 = vmatprep.subr.bf16.mxu0 0
          %1470 = vmatpush1.bf16.xpose.msra.mxu0 0
          %1471 = vmatprep.subr.bf16.mxu0 0
          %1472 = vmatpush1.bf16.xpose.msra.mxu0 0
          %1473 = vmatprep.subr.bf16.mxu0 0
          %1474 = vmatpush1.bf16.xpose.msra.mxu0 0
          %1475 = vmatprep.subr.bf16.mxu0 0
          %1476 = vmatpush1.bf16.xpose.msra.mxu0 %v1459
          %1477 = vmatprep.subr.bf16.mxu0 0
          %1478 = vmatpush2.bf16.xpose.msra.mxu0 0
          %1479 = vmatprep.subr.bf16.mxu0 0
          %1480 = vmatpush2.bf16.xpose.msra.mxu0 0
          %1481 = vmatprep.subr.bf16.mxu0 0
          %1482 = vmatpush2.bf16.xpose.msra.mxu0 0
          %1483 = vmatprep.subr.bf16.mxu0 0
          %1484 = vmatpush2.bf16.xpose.msra.mxu0 0
          %1485 = vmatprep.subr.bf16.mxu0 0
          %1486 = vmatpush2.bf16.xpose.msra.mxu0 0
          %1487 = vmatprep.subr.bf16.mxu0 0
          %1488 = vmatpush2.bf16.xpose.msra.mxu0 0
          %1489 = vmatprep.subr.bf16.mxu0 0
          %1490 = vmatpush2.bf16.xpose.msra.mxu0 0
          %1491 = vmatprep.subr.bf16.mxu0 0
          %1492 = vmatpush2.bf16.xpose.msra.mxu0 0
          %1493 = vmatprep.mubr.bf16.mxu0 0
          %1494 = vmatmul.mubr.bf16.gmra.mxu0 %v1456
          %v1495 = vpop.f32.mrf.mxu0
          %v1496 = vadd.f32 0.0, %v1495
          %v1497 = vpop.f32.mrf.mxu0
          %v1498 = vpop.f32.mrf.mxu0
          %v1499 = vadd.f32 0.0, %v1498
          %v1500 = vpop.f32.mrf.mxu0
          %1501 = vdwg.mxu0
          %1502 = vrot.lane.b32.xlu0 %v682, 80
          %v1503 = vpop.permute.xlu0 %1502
          %1504 = vrot.lane.b32.xlu0 %v682, 16
          %v1505 = vpop.permute.xlu0 %1504
          %v1507 = vsel %vm687, %v1503, 0
          %v1510 = vsel %vm687, %v1505, 0
          %1512 = vmatprep.subr.bf16.mxu0 0
          %1513 = vmatpush1.bf16.xpose.msra.mxu0 0
          %1514 = vmatprep.subr.bf16.mxu0 0
          %1515 = vmatpush1.bf16.xpose.msra.mxu0 0
          %1516 = vmatprep.subr.bf16.mxu0 0
          %1517 = vmatpush1.bf16.xpose.msra.mxu0 0
          %1518 = vmatprep.subr.bf16.mxu0 0
          %1519 = vmatpush1.bf16.xpose.msra.mxu0 0
          %1520 = vmatprep.subr.bf16.mxu0 0
          %1521 = vmatpush1.bf16.xpose.msra.mxu0 0
          %1522 = vmatprep.subr.bf16.mxu0 0
          %1523 = vmatpush1.bf16.xpose.msra.mxu0 0
          %1524 = vmatprep.subr.bf16.mxu0 0
          %1525 = vmatpush1.bf16.xpose.msra.mxu0 0
          %1526 = vmatprep.subr.bf16.mxu0 0
          %1527 = vmatpush1.bf16.xpose.msra.mxu0 %v1510
          %1528 = vmatprep.subr.bf16.mxu0 0
          %1529 = vmatpush2.bf16.xpose.msra.mxu0 0
          %1530 = vmatprep.subr.bf16.mxu0 0
          %1531 = vmatpush2.bf16.xpose.msra.mxu0 0
          %1532 = vmatprep.subr.bf16.mxu0 0
          %1533 = vmatpush2.bf16.xpose.msra.mxu0 0
          %1534 = vmatprep.subr.bf16.mxu0 0
          %1535 = vmatpush2.bf16.xpose.msra.mxu0 0
          %1536 = vmatprep.subr.bf16.mxu0 0
          %1537 = vmatpush2.bf16.xpose.msra.mxu0 0
          %1538 = vmatprep.subr.bf16.mxu0 0
          %1539 = vmatpush2.bf16.xpose.msra.mxu0 0
          %1540 = vmatprep.subr.bf16.mxu0 0
          %1541 = vmatpush2.bf16.xpose.msra.mxu0 0
          %1542 = vmatprep.subr.bf16.mxu0 0
          %1543 = vmatpush2.bf16.xpose.msra.mxu0 0
          %1544 = vmatprep.mubr.bf16.mxu0 0
          %1545 = vmatmul.mubr.bf16.gmra.mxu0 %v1507
          %v1546 = vpop.f32.mrf.mxu0
          %v1547 = vadd.f32 0.0, %v1546
          %v1548 = vpop.f32.mrf.mxu0
          %v1549 = vpop.f32.mrf.mxu0
          %v1550 = vadd.f32 0.0, %v1549
          %v1551 = vpop.f32.mrf.mxu0
          %1552 = vdwg.mxu0
          %v1553 = vsel %vm687, %v1496, -inf
          %1554 = vmax.xlane.f32.xlu0 %v1553
          %v1555 = vpop.xlane.xlu0 %1554
          %v1556 = vsel %vm687, %v1499, -inf
          %1557 = vmax.xlane.f32.xlu0 %v1556
          %v1558 = vpop.xlane.xlu0 %1557
          %v1559 = vsel %vm687, %v1547, -inf
          %1560 = vmax.xlane.f32.xlu0 %v1559
          %v1561 = vpop.xlane.xlu0 %1560
          %v1562 = vsel %vm687, %v1550, -inf
          %1563 = vmax.xlane.f32.xlu0 %v1562
          %v1564 = vpop.xlane.xlu0 %1563
          %v1565 = vsub.f32 %v1496, %v1555
          %v1566 = vsub.f32 %v1499, %v1558
          %v1567 = vsub.f32 %v1547, %v1561
          %v1568 = vsub.f32 %v1550, %v1564
          %v1569 = vmul.f32 %v1565, 1.442695
          %v1570 = vpow.pop %v1569
          %v1571 = vmul.f32 %v1566, 1.442695
          %v1572 = vpow.pop %v1571
          %v1573 = vmul.f32 %v1567, 1.442695
          %v1574 = vpow.pop %v1573
          %v1575 = vmul.f32 %v1568, 1.442695
          %v1576 = vpow.pop %v1575
          %v1577 = vsel %vm687, %v1570, 0.0
          %1578 = vadd.xlane.f32.xlu0 %v1577
          %v1579 = vpop.xlane.xlu0 %1578
          %v1580 = vsel %vm687, %v1572, 0.0
          %1581 = vadd.xlane.f32.xlu0 %v1580
          %v1582 = vpop.xlane.xlu0 %1581
          %v1583 = vsel %vm687, %v1574, 0.0
          %1584 = vadd.xlane.f32.xlu0 %v1583
          %v1585 = vpop.xlane.xlu0 %1584
          %v1586 = vsel %vm687, %v1576, 0.0
          %1587 = vadd.xlane.f32.xlu0 %v1586
          %v1588 = vpop.xlane.xlu0 %1587
          %v1589 = vrcp.pop %v1579
          %v1590 = vrcp.pop %v1582
          %v1591 = vrcp.pop %v1585
          %v1592 = vrcp.pop %v1588
          %v1593 = vmul.f32 %v1570, %v1589
          %v1594 = vmul.f32 %v1572, %v1590
          %v1595 = vmul.f32 %v1574, %v1591
          %v1596 = vmul.f32 %v1576, %v1592
          %v1597 = vpack.c.bf16 %v1594, %v1593
          %v1598 = vpack.c.bf16 %v1596, %v1595
          %1599 = vrot.lane.b32.xlu0 %v681, 80
          %v1600 = vpop.permute.xlu0 %1599
          %v1603 = vsel %vm687, %v1597, 0
          %1605 = vmatprep.subr.bf16.mxu0 0
          %1606 = vmatpush1.bf16.msra.mxu0 0
          %1607 = vmatprep.subr.bf16.mxu0 0
          %1608 = vmatpush1.bf16.msra.mxu0 0
          %1609 = vmatprep.subr.bf16.mxu0 0
          %1610 = vmatpush1.bf16.msra.mxu0 0
          %1611 = vmatprep.subr.bf16.mxu0 0
          %1612 = vmatpush1.bf16.msra.mxu0 0
          %1613 = vmatprep.subr.bf16.mxu0 0
          %1614 = vmatpush1.bf16.msra.mxu0 0
          %1615 = vmatprep.subr.bf16.mxu0 0
          %1616 = vmatpush1.bf16.msra.mxu0 0
          %1617 = vmatprep.subr.bf16.mxu0 0
          %1618 = vmatpush1.bf16.msra.mxu0 0
          %1619 = vmatprep.subr.bf16.mxu0 0
          %1620 = vmatpush1.bf16.msra.mxu0 %v1600
          %1621 = vmatprep.subr.bf16.mxu0 0
          %1622 = vmatpush2.bf16.msra.mxu0 0
          %1623 = vmatprep.subr.bf16.mxu0 0
          %1624 = vmatpush2.bf16.msra.mxu0 0
          %1625 = vmatprep.subr.bf16.mxu0 0
          %1626 = vmatpush2.bf16.msra.mxu0 0
          %1627 = vmatprep.subr.bf16.mxu0 0
          %1628 = vmatpush2.bf16.msra.mxu0 0
          %1629 = vmatprep.subr.bf16.mxu0 0
          %1630 = vmatpush2.bf16.msra.mxu0 0
          %1631 = vmatprep.subr.bf16.mxu0 0
          %1632 = vmatpush2.bf16.msra.mxu0 0
          %1633 = vmatprep.subr.bf16.mxu0 0
          %1634 = vmatpush2.bf16.msra.mxu0 0
          %1635 = vmatprep.subr.bf16.mxu0 0
          %1636 = vmatpush2.bf16.msra.mxu0 0
          %1637 = vmatprep.mubr.bf16.mxu0 0
          %1638 = vmatmul.mubr.bf16.gmra.mxu0 %v1603
          %v1639 = vpop.f32.mrf.mxu0
          %v1640 = vadd.f32 0.0, %v1639
          %v1641 = vpop.f32.mrf.mxu0
          %v1642 = vpop.f32.mrf.mxu0
          %v1643 = vadd.f32 0.0, %v1642
          %v1644 = vpop.f32.mrf.mxu0
          %1645 = vdwg.mxu0
          %1646 = vrot.lane.b32.xlu0 %v683, 80
          %v1647 = vpop.permute.xlu0 %1646
          %v1650 = vsel %vm687, %v1598, 0
          %1652 = vmatprep.subr.bf16.mxu0 0
          %1653 = vmatpush1.bf16.msra.mxu0 0
          %1654 = vmatprep.subr.bf16.mxu0 0
          %1655 = vmatpush1.bf16.msra.mxu0 0
          %1656 = vmatprep.subr.bf16.mxu0 0
          %1657 = vmatpush1.bf16.msra.mxu0 0
          %1658 = vmatprep.subr.bf16.mxu0 0
          %1659 = vmatpush1.bf16.msra.mxu0 0
          %1660 = vmatprep.subr.bf16.mxu0 0
          %1661 = vmatpush1.bf16.msra.mxu0 0
          %1662 = vmatprep.subr.bf16.mxu0 0
          %1663 = vmatpush1.bf16.msra.mxu0 0
          %1664 = vmatprep.subr.bf16.mxu0 0
          %1665 = vmatpush1.bf16.msra.mxu0 0
          %1666 = vmatprep.subr.bf16.mxu0 0
          %1667 = vmatpush1.bf16.msra.mxu0 %v1647
          %1668 = vmatprep.subr.bf16.mxu0 0
          %1669 = vmatpush2.bf16.msra.mxu0 0
          %1670 = vmatprep.subr.bf16.mxu0 0
          %1671 = vmatpush2.bf16.msra.mxu0 0
          %1672 = vmatprep.subr.bf16.mxu0 0
          %1673 = vmatpush2.bf16.msra.mxu0 0
          %1674 = vmatprep.subr.bf16.mxu0 0
          %1675 = vmatpush2.bf16.msra.mxu0 0
          %1676 = vmatprep.subr.bf16.mxu0 0
          %1677 = vmatpush2.bf16.msra.mxu0 0
          %1678 = vmatprep.subr.bf16.mxu0 0
          %1679 = vmatpush2.bf16.msra.mxu0 0
          %1680 = vmatprep.subr.bf16.mxu0 0
          %1681 = vmatpush2.bf16.msra.mxu0 0
          %1682 = vmatprep.subr.bf16.mxu0 0
          %1683 = vmatpush2.bf16.msra.mxu0 0
          %1684 = vmatprep.mubr.bf16.mxu0 0
          %1685 = vmatmul.mubr.bf16.gmra.mxu0 %v1650
          %v1686 = vpop.f32.mrf.mxu0
          %v1687 = vadd.f32 0.0, %v1686
          %v1688 = vpop.f32.mrf.mxu0
          %v1689 = vpop.f32.mrf.mxu0
          %v1690 = vadd.f32 0.0, %v1689
          %v1691 = vpop.f32.mrf.mxu0
          %1692 = vdwg.mxu0
          %1697 = vrot.lane.b32.xlu0 %v1640, 48
          %v1698 = vpop.permute.xlu0 %1697
          %1699 = vrot.lane.b32.xlu0 %v1643, 48
          %v1700 = vpop.permute.xlu0 %1699
          %1701 = vrot.lane.b32.xlu0 %v1687, 48
          %v1702 = vpop.permute.xlu0 %1701
          %1703 = vrot.lane.b32.xlu0 %v1690, 48
          %v1704 = vpop.permute.xlu0 %1703
          %vm1709 = vcmask 523648
          %1710 = vst.msk [vmem:[#allocation5] sm:$0xff] %vm1709, %v1698
          %1711 = vst.msk [vmem:[#allocation5 + $0x8] sm:$0xff] %vm1709, %v1700
          %1712 = vst.msk [vmem:[#allocation5 + $0x10] sm:$0xff] %vm1709, %v1702
          %1713 = vst.msk [vmem:[#allocation5 + $0x18] sm:$0xff] %vm1709, %v1704
          %v1714 = vld [vmem:[#allocation5] sm:$0xff]
          %v1715 = vld [vmem:[#allocation5 + $0x8] sm:$0xff]
          %v1716 = vld [vmem:[#allocation5 + $0x10] sm:$0xff]
          %v1717 = vld [vmem:[#allocation5 + $0x18] sm:$0xff]
          %v1718 = vpack.c.bf16 %v1715, %v1714
          %v1719 = vpack.c.bf16 %v1717, %v1716
          %v1720 = vld [vmem:[%s4] sm:$0xf]
          %v1721 = vld [vmem:[%s4 + $0x4] sm:$0xf]
          %v1722 = vld [vmem:[%s4 + $0x8] sm:$0xf]
          %v1723 = vld [vmem:[%s4 + $0xc] sm:$0xf]
          %v1724 = vld [vmem:[%s4 + $0x10] sm:$0xf]
          %v1725 = vld [vmem:[%s4 + $0x14] sm:$0xf]
          %v1726 = vld [vmem:[%s4 + $0x18] sm:$0xf]
          %v1727 = vld [vmem:[%s4 + $0x1c] sm:$0xf]
          %v1728 = vld [vmem:[%s5] sm:$0x1]
          %v1730 = vlaneseq
          %v1731 = vshrl.u32 %v1730, 7
          %v1732 = vsub.s32 0, %v1731
          %v1733 = vrot.slane %v1728, %v1732
          %v1743 = vunpack.c.l.b16 %v1720
          %v1744 = vunpack.c.l.b16 %v1721
          %v1745 = vunpack.c.l.b16 %v1722
          %v1746 = vunpack.c.l.b16 %v1723
          %v1747 = vunpack.c.l.b16 %v1724
          %v1748 = vunpack.c.l.b16 %v1725
          %v1749 = vunpack.c.l.b16 %v1726
          %v1750 = vunpack.c.l.b16 %v1727
          %v1751 = vpack.c.b16 %v1744, %v1743
          %v1752 = vpack.c.b16 %v1746, %v1745
          %v1753 = vpack.c.b16 %v1748, %v1747
          %v1754 = vpack.c.b16 %v1750, %v1749
          %v1760 = vsel %vm497, %v1718, 0
          %v1763 = vsel %vm497, %v1719, 0
          %1765 = vmatprep.subr.bf16.mxu0 0
          %1766 = vmatpush1.bf16.msra.mxu0 0
          %1767 = vmatprep.subr.bf16.mxu0 0
          %1768 = vmatpush1.bf16.msra.mxu0 0
          %1769 = vmatprep.subr.bf16.mxu0 0
          %1770 = vmatpush1.bf16.msra.mxu0 0
          %1771 = vmatprep.subr.bf16.mxu0 0
          %1772 = vmatpush1.bf16.msra.mxu0 0
          %1773 = vmatprep.subr.bf16.mxu0 0
          %1774 = vmatpush1.bf16.msra.mxu0 %v1754
          %1775 = vmatprep.subr.bf16.mxu0 0
          %1776 = vmatpush1.bf16.msra.mxu0 %v1753
          %1777 = vmatprep.subr.bf16.mxu0 0
          %1778 = vmatpush1.bf16.msra.mxu0 %v1752
          %1779 = vmatprep.subr.bf16.mxu0 0
          %1780 = vmatpush1.bf16.msra.mxu0 %v1751
          %1781 = vmatprep.subr.bf16.mxu0 0
          %1782 = vmatpush2.bf16.msra.mxu0 0
          %1783 = vmatprep.subr.bf16.mxu0 0
          %1784 = vmatpush2.bf16.msra.mxu0 0
          %1785 = vmatprep.subr.bf16.mxu0 0
          %1786 = vmatpush2.bf16.msra.mxu0 0
          %1787 = vmatprep.subr.bf16.mxu0 0
          %1788 = vmatpush2.bf16.msra.mxu0 0
          %1789 = vmatprep.subr.bf16.mxu0 0
          %1790 = vmatpush2.bf16.msra.mxu0 0
          %1791 = vmatprep.subr.bf16.mxu0 0
          %1792 = vmatpush2.bf16.msra.mxu0 0
          %1793 = vmatprep.subr.bf16.mxu0 0
          %1794 = vmatpush2.bf16.msra.mxu0 0
          %1795 = vmatprep.subr.bf16.mxu0 0
          %1796 = vmatpush2.bf16.msra.mxu0 0
          %1797 = vmatprep.mubr.bf16.mxu0 0
          %1798 = vmatmul.mubr.bf16.gmra.mxu0 %v1760
          %v1799 = vpop.f32.mrf.mxu0
          %v1800 = vadd.f32 %v1733, %v1799
          %v1801 = vpop.f32.mrf.mxu0
          %v1802 = vpop.f32.mrf.mxu0
          %v1803 = vadd.f32 %v1733, %v1802
          %v1804 = vpop.f32.mrf.mxu0
          %1805 = vmatprep.mubr.bf16.mxu0 0
          %1806 = vmatmul.mubr.bf16.gmra.mxu0 %v1763
          %v1807 = vpop.f32.mrf.mxu0
          %v1808 = vadd.f32 %v1733, %v1807
          %v1809 = vpop.f32.mrf.mxu0
          %v1810 = vpop.f32.mrf.mxu0
          %v1811 = vadd.f32 %v1733, %v1810
          %v1812 = vpop.f32.mrf.mxu0
          %1813 = vdwg.mxu0
          %v1814 = vadd.f32 %v491, %v1800
          %v1815 = vadd.f32 %v492, %v1803
          %v1816 = vadd.f32 %v493, %v1808
          %v1817 = vadd.f32 %v494, %v1811
          %v1818 = vld [vmem:[%s6] sm:$0x1]
          %v1819 = vld [vmem:[%s7] sm:$0x1]
          %v1820 = vsel %vm497, %v1814, 0.0
          %1821 = vadd.xlane.f32.xlu0 %v1820
          %v1822 = vpop.xlane.xlu0 %1821
          %v1823 = vsel %vm497, %v1815, 0.0
          %1824 = vadd.xlane.f32.xlu0 %v1823
          %v1825 = vpop.xlane.xlu0 %1824
          %v1826 = vsel %vm497, %v1816, 0.0
          %1827 = vadd.xlane.f32.xlu0 %v1826
          %v1828 = vpop.xlane.xlu0 %1827
          %v1829 = vsel %vm497, %v1817, 0.0
          %1830 = vadd.xlane.f32.xlu0 %v1829
          %v1831 = vpop.xlane.xlu0 %1830
          %v1832 = vmul.f32 %v1822, %v510
          %v1833 = vmul.f32 %v1825, %v510
          %v1834 = vmul.f32 %v1828, %v510
          %v1835 = vmul.f32 %v1831, %v510
          %v1836 = vsub.f32 %v1814, %v1832
          %v1837 = vsub.f32 %v1815, %v1833
          %v1838 = vsub.f32 %v1816, %v1834
          %v1839 = vsub.f32 %v1817, %v1835
          %v1840 = vmul.f32 %v1836, %v1836
          %v1841 = vmul.f32 %v1837, %v1837
          %v1842 = vmul.f32 %v1838, %v1838
          %v1843 = vmul.f32 %v1839, %v1839
          %v1844 = vsel %vm497, %v1840, 0.0
          %1845 = vadd.xlane.f32.xlu0 %v1844
          %v1846 = vpop.xlane.xlu0 %1845
          %v1847 = vsel %vm497, %v1841, 0.0
          %1848 = vadd.xlane.f32.xlu0 %v1847
          %v1849 = vpop.xlane.xlu0 %1848
          %v1850 = vsel %vm497, %v1842, 0.0
          %1851 = vadd.xlane.f32.xlu0 %v1850
          %v1852 = vpop.xlane.xlu0 %1851
          %v1853 = vsel %vm497, %v1843, 0.0
          %1854 = vadd.xlane.f32.xlu0 %v1853
          %v1855 = vpop.xlane.xlu0 %1854
          %v1856 = vmul.f32 %v1846, %v510
          %v1857 = vmul.f32 %v1849, %v510
          %v1858 = vmul.f32 %v1852, %v510
          %v1859 = vmul.f32 %v1855, %v510
          %v1860 = vadd.f32 %v1856, 1e-05
          %v1861 = vadd.f32 %v1857, 1e-05
          %v1862 = vadd.f32 %v1858, 1e-05
          %v1863 = vadd.f32 %v1859, 1e-05
          %v1864 = vrsqrt.pop %v1860
          %v1865 = vrsqrt.pop %v1861
          %v1866 = vrsqrt.pop %v1862
          %v1867 = vrsqrt.pop %v1863
          %v1868 = vmul.f32 %v1836, %v1864
          %v1869 = vmul.f32 %v1837, %v1865
          %v1870 = vmul.f32 %v1838, %v1866
          %v1871 = vmul.f32 %v1839, %v1867
          %v1873 = vlaneseq
          %v1874 = vshrl.u32 %v1873, 7
          %v1875 = vsub.s32 0, %v1874
          %v1876 = vrot.slane %v1818, %v1875
          %v1878 = vmul.f32 %v1868, %v1876
          %v1879 = vmul.f32 %v1869, %v1876
          %v1880 = vmul.f32 %v1870, %v1876
          %v1881 = vmul.f32 %v1871, %v1876
          %v1883 = vlaneseq
          %v1884 = vshrl.u32 %v1883, 7
          %v1885 = vsub.s32 0, %v1884
          %v1886 = vrot.slane %v1819, %v1885
          %v1888 = vadd.f32 %v1878, %v1886
          %v1889 = vadd.f32 %v1879, %v1886
          %v1890 = vadd.f32 %v1880, %v1886
          %v1891 = vadd.f32 %v1881, %v1886
          %v1892 = vpack.c.bf16 %v1889, %v1888
          %v1893 = vpack.c.bf16 %v1891, %v1890
          %v1896 = vunpack.c.l.b16 %v1892
          %v1897 = vunpack.c.h.b16 %v1892
          %v1898 = vunpack.c.l.b16 %v1893
          %v1899 = vunpack.c.h.b16 %v1893
          %v1900 = vpack.c.b16 %v1896, %v1896
          %v1901 = vpack.c.b16 %v1897, %v1897
          %v1902 = vpack.c.b16 %v1898, %v1898
          %v1903 = vpack.c.b16 %v1899, %v1899
          %vm1908 = vcmask 519168
          %1909 = vst.msk [vmem:[#allocation2] sm:$0xf] %vm1908, %v1900
          %1910 = vst.msk [vmem:[#allocation2 + $0x4] sm:$0xf] %vm1908, %v1901
          %1911 = vst.msk [vmem:[#allocation2 + $0x8] sm:$0xf] %vm1908, %v1902
          %1912 = vst.msk [vmem:[#allocation2 + $0xc] sm:$0xf] %vm1908, %v1903
          %v1913 = vld [vmem:[%s8] sm:$0xf]
          %v1914 = vld [vmem:[%s8 + $0x4] sm:$0xf]
          %v1915 = vld [vmem:[%s8 + $0x8] sm:$0xf]
          %v1916 = vld [vmem:[%s8 + $0xc] sm:$0xf]
          %v1917 = vld [vmem:[%s8 + $0x10] sm:$0xf]
          %v1918 = vld [vmem:[%s8 + $0x14] sm:$0xf]
          %v1919 = vld [vmem:[%s8 + $0x18] sm:$0xf]
          %v1920 = vld [vmem:[%s8 + $0x1c] sm:$0xf]
          %v1929 = vunpack.c.l.b16 %v1913
          %v1930 = vunpack.c.l.b16 %v1914
          %v1931 = vunpack.c.l.b16 %v1915
          %v1932 = vunpack.c.l.b16 %v1916
          %v1933 = vunpack.c.l.b16 %v1917
          %v1934 = vunpack.c.l.b16 %v1918
          %v1935 = vunpack.c.l.b16 %v1919
          %v1936 = vunpack.c.l.b16 %v1920
          %v1937 = vpack.c.b16 %v1930, %v1929
          %v1938 = vpack.c.b16 %v1932, %v1931
          %v1939 = vpack.c.b16 %v1934, %v1933
          %v1940 = vpack.c.b16 %v1936, %v1935
          %v1946 = vsel %vm497, %v1892, 0
          %v1949 = vsel %vm497, %v1893, 0
          %1951 = vmatprep.subr.bf16.mxu0 0
          %1952 = vmatpush1.bf16.msra.mxu0 0
          %1953 = vmatprep.subr.bf16.mxu0 0
          %1954 = vmatpush1.bf16.msra.mxu0 0
          %1955 = vmatprep.subr.bf16.mxu0 0
          %1956 = vmatpush1.bf16.msra.mxu0 0
          %1957 = vmatprep.subr.bf16.mxu0 0
          %1958 = vmatpush1.bf16.msra.mxu0 0
          %1959 = vmatprep.subr.bf16.mxu0 0
          %1960 = vmatpush1.bf16.msra.mxu0 %v1940
          %1961 = vmatprep.subr.bf16.mxu0 0
          %1962 = vmatpush1.bf16.msra.mxu0 %v1939
          %1963 = vmatprep.subr.bf16.mxu0 0
          %1964 = vmatpush1.bf16.msra.mxu0 %v1938
          %1965 = vmatprep.subr.bf16.mxu0 0
          %1966 = vmatpush1.bf16.msra.mxu0 %v1937
          %1967 = vmatprep.subr.bf16.mxu0 0
          %1968 = vmatpush2.bf16.msra.mxu0 0
          %1969 = vmatprep.subr.bf16.mxu0 0
          %1970 = vmatpush2.bf16.msra.mxu0 0
          %1971 = vmatprep.subr.bf16.mxu0 0
          %1972 = vmatpush2.bf16.msra.mxu0 0
          %1973 = vmatprep.subr.bf16.mxu0 0
          %1974 = vmatpush2.bf16.msra.mxu0 0
          %1975 = vmatprep.subr.bf16.mxu0 0
          %1976 = vmatpush2.bf16.msra.mxu0 0
          %1977 = vmatprep.subr.bf16.mxu0 0
          %1978 = vmatpush2.bf16.msra.mxu0 0
          %1979 = vmatprep.subr.bf16.mxu0 0
          %1980 = vmatpush2.bf16.msra.mxu0 0
          %1981 = vmatprep.subr.bf16.mxu0 0
          %1982 = vmatpush2.bf16.msra.mxu0 0
          %1983 = vmatprep.mubr.bf16.mxu0 0
          %1984 = vmatmul.mubr.bf16.gmra.mxu0 %v1946
          %v1985 = vpop.f32.mrf.mxu0
          %v1986 = vadd.f32 0.0, %v1985
          %v1987 = vpop.f32.mrf.mxu0
          %v1988 = vpop.f32.mrf.mxu0
          %v1989 = vadd.f32 0.0, %v1988
          %v1990 = vpop.f32.mrf.mxu0
          %1991 = vmatprep.mubr.bf16.mxu0 0
          %1992 = vmatmul.mubr.bf16.gmra.mxu0 %v1949
          %v1993 = vpop.f32.mrf.mxu0
          %v1994 = vadd.f32 0.0, %v1993
          %v1995 = vpop.f32.mrf.mxu0
          %v1996 = vpop.f32.mrf.mxu0
          %v1997 = vadd.f32 0.0, %v1996
          %v1998 = vpop.f32.mrf.mxu0
          %1999 = vdwg.mxu0
          %2000 = vst [vmem:[#allocation8] sm:$0xff] %v1986
          %2001 = vst [vmem:[#allocation8 + $0x8] sm:$0xff] %v1989
          %2002 = vst [vmem:[#allocation8 + $0x10] sm:$0xff] %v1994
          %2003 = vst [vmem:[#allocation8 + $0x18] sm:$0xff] %v1997
          %v2004 = vlaneseq
          %v2005 = vand.u32 %v2004, 127
          %vm2006 = vcmp.lt.s32.totalorder %v2005, 4
          %v2007 = vsel %vm2006, %v1986, -1e+30
          %v2008 = vsel %vm2006, %v1989, -1e+30
          %v2009 = vsel %vm2006, %v1994, -1e+30
          %v2010 = vsel %vm2006, %v1997, -1e+30
          %2011 = vmax.xlane.f32.xlu0 %v2007
          %v2012 = vpop.xlane.xlu0 %2011
          %2013 = vmax.xlane.f32.xlu0 %v2008
          %v2014 = vpop.xlane.xlu0 %2013
          %2015 = vmax.xlane.f32.xlu0 %v2009
          %v2016 = vpop.xlane.xlu0 %2015
          %2017 = vmax.xlane.f32.xlu0 %v2010
          %v2018 = vpop.xlane.xlu0 %2017
          %v2019 = vsub.f32 %v2007, %v2012
          %v2020 = vsub.f32 %v2008, %v2014
          %v2021 = vsub.f32 %v2009, %v2016
          %v2022 = vsub.f32 %v2010, %v2018
          %v2023 = vmul.f32 %v2019, 1.442695
          %v2024 = vpow.pop %v2023
          %v2025 = vmul.f32 %v2020, 1.442695
          %v2026 = vpow.pop %v2025
          %v2027 = vmul.f32 %v2021, 1.442695
          %v2028 = vpow.pop %v2027
          %v2029 = vmul.f32 %v2022, 1.442695
          %v2030 = vpow.pop %v2029
          %2031 = vadd.xlane.f32.xlu0 %v2024
          %v2032 = vpop.xlane.xlu0 %2031
          %2033 = vadd.xlane.f32.xlu0 %v2026
          %v2034 = vpop.xlane.xlu0 %2033
          %2035 = vadd.xlane.f32.xlu0 %v2028
          %v2036 = vpop.xlane.xlu0 %2035
          %2037 = vadd.xlane.f32.xlu0 %v2030
          %v2038 = vpop.xlane.xlu0 %2037
          %v2039 = vrcp.pop %v2032
          %v2040 = vmul.f32 %v2024, %v2039
          %v2041 = vrcp.pop %v2034
          %v2042 = vmul.f32 %v2026, %v2041
          %v2043 = vrcp.pop %v2036
          %v2044 = vmul.f32 %v2028, %v2043
          %v2045 = vrcp.pop %v2038
          %v2046 = vmul.f32 %v2030, %v2045
          %2047 = vst [vmem:[#allocation3] sm:$0xff] %v2040
          %2048 = vst [vmem:[#allocation3 + $0x8] sm:$0xff] %v2042
          %2049 = vst [vmem:[#allocation3 + $0x10] sm:$0xff] %v2044
          %2050 = vst [vmem:[#allocation3 + $0x18] sm:$0xff] %v2046
          %2051 = vst.msk [vmem:[#allocation4] sm:$0xff] %vm497, 0.0
          %2052 = vst.msk [vmem:[#allocation4 + $0x8] sm:$0xff] %vm497, 0.0
          %2053 = vst.msk [vmem:[#allocation4 + $0x10] sm:$0xff] %vm497, 0.0
          %2054 = vst.msk [vmem:[#allocation4 + $0x18] sm:$0xff] %vm497, 0.0
        $region76: #{tpu_custom_call.1} parent=71 // pred_fallthru
          _
        %v2055 = vld [vmem:[#allocation2] sm:$0xf]
        %v2056 = vld [vmem:[#allocation2 + $0x4] sm:$0xf]
        %v2057 = vld [vmem:[#allocation2 + $0x8] sm:$0xf]
        %v2058 = vld [vmem:[#allocation2 + $0xc] sm:$0xf]
        %s2059 = smul.u32 %s33, 16
        %s2060 = smul.addr %s2059, 4
        %s2061 = scalar_lea.vmem %s9, %s2060
        %v2062 = vld [vmem:[%s2061] sm:$0xff]
        %v2063 = vld [vmem:[%s2061 + $0x8] sm:$0xff]
        %v2064 = vld [vmem:[%s2061 + $0x10] sm:$0xff]
        %v2065 = vld [vmem:[%s2061 + $0x18] sm:$0xff]
        %v2066 = vld [vmem:[%s2061 + $0x20] sm:$0xff]
        %v2067 = vld [vmem:[%s2061 + $0x28] sm:$0xff]
        %v2068 = vld [vmem:[%s2061 + $0x30] sm:$0xff]
        %v2069 = vld [vmem:[%s2061 + $0x38] sm:$0xff]
        %s2070 = smul.u32 %s33, 2
        %s2071 = scalar_lea.vmem %s10, %s2070
        %v2072 = vld [vmem:[%s2071] sm:$0x3]
        %v2074 = vlaneseq
        %v2075 = vshrl.u32 %v2074, 7
        %v2076 = vsub.s32 0, %v2075
        %v2077 = vrot.slane %v2072, %v2076
        %v2078 = vlaneseq
        %v2079 = vshrl.u32 %v2078, 7
        %v2080 = vsub.s32 1, %v2079
        %v2081 = vrot.slane %v2072, %v2080
        %v2088 = vunpack.c.l.b16 %v2055
        %v2089 = vunpack.c.l.b16 %v2056
        %v2090 = vunpack.c.l.b16 %v2057
        %v2091 = vunpack.c.l.b16 %v2058
        %v2092 = vpack.c.b16 %v2089, %v2088
        %v2093 = vpack.c.b16 %v2091, %v2090
        %v2102 = vunpack.c.l.b16 %v2062
        %v2103 = vunpack.c.h.b16 %v2062
        %v2104 = vunpack.c.l.b16 %v2063
        %v2105 = vunpack.c.h.b16 %v2063
        %v2106 = vunpack.c.l.b16 %v2064
        %v2107 = vunpack.c.h.b16 %v2064
        %v2108 = vunpack.c.l.b16 %v2065
        %v2109 = vunpack.c.h.b16 %v2065
        %v2110 = vunpack.c.l.b16 %v2066
        %v2111 = vunpack.c.h.b16 %v2066
        %v2112 = vunpack.c.l.b16 %v2067
        %v2113 = vunpack.c.h.b16 %v2067
        %v2114 = vunpack.c.l.b16 %v2068
        %v2115 = vunpack.c.h.b16 %v2068
        %v2116 = vunpack.c.l.b16 %v2069
        %v2117 = vunpack.c.h.b16 %v2069
        %v2118 = vpack.c.b16 %v2104, %v2102
        %v2119 = vpack.c.b16 %v2105, %v2103
        %v2120 = vpack.c.b16 %v2108, %v2106
        %v2121 = vpack.c.b16 %v2109, %v2107
        %v2122 = vpack.c.b16 %v2112, %v2110
        %v2123 = vpack.c.b16 %v2113, %v2111
        %v2124 = vpack.c.b16 %v2116, %v2114
        %v2125 = vpack.c.b16 %v2117, %v2115
        %vm2134 = vcmask 523264
        %v2136 = vsel %vm2134, %v2092, 0
        %v2139 = vsel %vm2134, %v2093, 0
        %2141 = vmatprep.subr.bf16.mxu0 0
        %2142 = vmatpush1.bf16.msra.mxu0 0
        %2143 = vmatprep.subr.bf16.mxu0 0
        %2144 = vmatpush1.bf16.msra.mxu0 0
        %2145 = vmatprep.subr.bf16.mxu0 0
        %2146 = vmatpush1.bf16.msra.mxu0 0
        %2147 = vmatprep.subr.bf16.mxu0 0
        %2148 = vmatpush1.bf16.msra.mxu0 0
        %2149 = vmatprep.subr.bf16.mxu0 %v2125
        %2150 = vmatpush1.bf16.msra.mxu0 %v2124
        %2151 = vmatprep.subr.bf16.mxu0 %v2123
        %2152 = vmatpush1.bf16.msra.mxu0 %v2122
        %2153 = vmatprep.subr.bf16.mxu0 %v2121
        %2154 = vmatpush1.bf16.msra.mxu0 %v2120
        %2155 = vmatprep.subr.bf16.mxu0 %v2119
        %2156 = vmatpush1.bf16.msra.mxu0 %v2118
        %2157 = vmatprep.subr.bf16.mxu0 0
        %2158 = vmatpush2.bf16.msra.mxu0 0
        %2159 = vmatprep.subr.bf16.mxu0 0
        %2160 = vmatpush2.bf16.msra.mxu0 0
        %2161 = vmatprep.subr.bf16.mxu0 0
        %2162 = vmatpush2.bf16.msra.mxu0 0
        %2163 = vmatprep.subr.bf16.mxu0 0
        %2164 = vmatpush2.bf16.msra.mxu0 0
        %2165 = vmatprep.subr.bf16.mxu0 0
        %2166 = vmatpush2.bf16.msra.mxu0 0
        %2167 = vmatprep.subr.bf16.mxu0 0
        %2168 = vmatpush2.bf16.msra.mxu0 0
        %2169 = vmatprep.subr.bf16.mxu0 0
        %2170 = vmatpush2.bf16.msra.mxu0 0
        %2171 = vmatprep.subr.bf16.mxu0 0
        %2172 = vmatpush2.bf16.msra.mxu0 0
        %2173 = vmatprep.mubr.bf16.mxu0 0
        %2174 = vmatmul.mubr.bf16.gmra.mxu0 %v2136
        %v2175 = vpop.f32.mrf.mxu0
        %v2176 = vadd.f32 %v2077, %v2175
        %v2177 = vpop.f32.mrf.mxu0
        %v2178 = vadd.f32 %v2081, %v2177
        %v2179 = vpop.f32.mrf.mxu0
        %v2180 = vadd.f32 %v2077, %v2179
        %v2181 = vpop.f32.mrf.mxu0
        %v2182 = vadd.f32 %v2081, %v2181
        %2183 = vmatprep.mubr.bf16.mxu0 0
        %2184 = vmatmul.mubr.bf16.gmra.mxu0 %v2139
        %v2185 = vpop.f32.mrf.mxu0
        %v2186 = vadd.f32 %v2077, %v2185
        %v2187 = vpop.f32.mrf.mxu0
        %v2188 = vadd.f32 %v2081, %v2187
        %v2189 = vpop.f32.mrf.mxu0
        %v2190 = vadd.f32 %v2077, %v2189
        %v2191 = vpop.f32.mrf.mxu0
        %v2192 = vadd.f32 %v2081, %v2191
        %2193 = vdwg.mxu0
        %v2194 = vpack.c.bf16 %v2180, %v2176
        %v2195 = vpack.c.bf16 %v2182, %v2178
        %v2196 = vpack.c.bf16 %v2190, %v2186
        %v2197 = vpack.c.bf16 %v2192, %v2188
        %v2198 = vmul.bf16 %v2194, 1056980736
        %v2199 = vmul.bf16 %v2195, 1056980736
        %v2200 = vmul.bf16 %v2196, 1056980736
        %v2201 = vmul.bf16 %v2197, 1056980736
        %v2202 = vmul.bf16 %v2194, 1027030327
        %v2203 = vmul.bf16 %v2195, 1027030327
        %v2204 = vmul.bf16 %v2196, 1027030327
        %v2205 = vmul.bf16 %v2197, 1027030327
        %v2206 = vmul.bf16 %v2202, %v2194
        %v2207 = vmul.bf16 %v2203, %v2195
        %v2208 = vmul.bf16 %v2204, %v2196
        %v2209 = vmul.bf16 %v2205, %v2197
        %v2210 = vmul.bf16 %v2206, %v2194
        %v2211 = vmul.bf16 %v2207, %v2195
        %v2212 = vmul.bf16 %v2208, %v2196
        %v2213 = vmul.bf16 %v2209, %v2197
        %v2214 = vadd.bf16 %v2194, %v2210
        %v2215 = vadd.bf16 %v2195, %v2211
        %v2216 = vadd.bf16 %v2196, %v2212
        %v2217 = vadd.bf16 %v2197, %v2213
        %v2218 = vmul.bf16 %v2214, 1061961548
        %v2219 = vmul.bf16 %v2215, 1061961548
        %v2220 = vmul.bf16 %v2216, 1061961548
        %v2221 = vmul.bf16 %v2217, 1061961548
        %v2222 = vtanh.bf16.pop %v2218
        %v2223 = vtanh.bf16.pop %v2219
        %v2224 = vtanh.bf16.pop %v2220
        %v2225 = vtanh.bf16.pop %v2221
        %v2226 = vadd.bf16 %v2222, 1065369472
        %v2227 = vadd.bf16 %v2223, 1065369472
        %v2228 = vadd.bf16 %v2224, 1065369472
        %v2229 = vadd.bf16 %v2225, 1065369472
        %v2230 = vmul.bf16 %v2198, %v2226
        %v2231 = vmul.bf16 %v2199, %v2227
        %v2232 = vmul.bf16 %v2200, %v2228
        %v2233 = vmul.bf16 %v2201, %v2229
        %s2234 = smul.u32 %s33, 32
        %s2235 = smul.addr %s2234, 4
        %s2236 = scalar_lea.vmem %s11, %s2235
        %v2237 = vld [vmem:[%s2236] sm:$0xf]
        %v2238 = vld [vmem:[%s2236 + $0x4] sm:$0xf]
        %v2239 = vld [vmem:[%s2236 + $0x8] sm:$0xf]
        %v2240 = vld [vmem:[%s2236 + $0xc] sm:$0xf]
        %v2241 = vld [vmem:[%s2236 + $0x10] sm:$0xf]
        %v2242 = vld [vmem:[%s2236 + $0x14] sm:$0xf]
        %v2243 = vld [vmem:[%s2236 + $0x18] sm:$0xf]
        %v2244 = vld [vmem:[%s2236 + $0x1c] sm:$0xf]
        %v2245 = vld [vmem:[%s2236 + $0x20] sm:$0xf]
        %v2246 = vld [vmem:[%s2236 + $0x24] sm:$0xf]
        %v2247 = vld [vmem:[%s2236 + $0x28] sm:$0xf]
        %v2248 = vld [vmem:[%s2236 + $0x2c] sm:$0xf]
        %v2249 = vld [vmem:[%s2236 + $0x30] sm:$0xf]
        %v2250 = vld [vmem:[%s2236 + $0x34] sm:$0xf]
        %v2251 = vld [vmem:[%s2236 + $0x38] sm:$0xf]
        %v2252 = vld [vmem:[%s2236 + $0x3c] sm:$0xf]
        %v2253 = vld [vmem:[%s2236 + $0x40] sm:$0xf]
        %v2254 = vld [vmem:[%s2236 + $0x44] sm:$0xf]
        %v2255 = vld [vmem:[%s2236 + $0x48] sm:$0xf]
        %v2256 = vld [vmem:[%s2236 + $0x4c] sm:$0xf]
        %v2257 = vld [vmem:[%s2236 + $0x50] sm:$0xf]
        %v2258 = vld [vmem:[%s2236 + $0x54] sm:$0xf]
        %v2259 = vld [vmem:[%s2236 + $0x58] sm:$0xf]
        %v2260 = vld [vmem:[%s2236 + $0x5c] sm:$0xf]
        %v2261 = vld [vmem:[%s2236 + $0x60] sm:$0xf]
        %v2262 = vld [vmem:[%s2236 + $0x64] sm:$0xf]
        %v2263 = vld [vmem:[%s2236 + $0x68] sm:$0xf]
        %v2264 = vld [vmem:[%s2236 + $0x6c] sm:$0xf]
        %v2265 = vld [vmem:[%s2236 + $0x70] sm:$0xf]
        %v2266 = vld [vmem:[%s2236 + $0x74] sm:$0xf]
        %v2267 = vld [vmem:[%s2236 + $0x78] sm:$0xf]
        %v2268 = vld [vmem:[%s2236 + $0x7c] sm:$0xf]
        %s2269 = scalar_lea.vmem %s12, %s33
        %v2270 = vld [vmem:[%s2269] sm:$0x1]
        %v2272 = vlaneseq
        %v2273 = vshrl.u32 %v2272, 7
        %v2274 = vsub.s32 0, %v2273
        %v2275 = vrot.slane %v2270, %v2274
        %v2309 = vunpack.c.l.b16 %v2237
        %v2310 = vunpack.c.l.b16 %v2238
        %v2311 = vunpack.c.l.b16 %v2239
        %v2312 = vunpack.c.l.b16 %v2240
        %v2313 = vunpack.c.l.b16 %v2241
        %v2314 = vunpack.c.l.b16 %v2242
        %v2315 = vunpack.c.l.b16 %v2243
        %v2316 = vunpack.c.l.b16 %v2244
        %v2317 = vunpack.c.l.b16 %v2245
        %v2318 = vunpack.c.l.b16 %v2246
        %v2319 = vunpack.c.l.b16 %v2247
        %v2320 = vunpack.c.l.b16 %v2248
        %v2321 = vunpack.c.l.b16 %v2249
        %v2322 = vunpack.c.l.b16 %v2250
        %v2323 = vunpack.c.l.b16 %v2251
        %v2324 = vunpack.c.l.b16 %v2252
        %v2325 = vunpack.c.l.b16 %v2253
        %v2326 = vunpack.c.l.b16 %v2254
        %v2327 = vunpack.c.l.b16 %v2255
        %v2328 = vunpack.c.l.b16 %v2256
        %v2329 = vunpack.c.l.b16 %v2257
        %v2330 = vunpack.c.l.b16 %v2258
        %v2331 = vunpack.c.l.b16 %v2259
        %v2332 = vunpack.c.l.b16 %v2260
        %v2333 = vunpack.c.l.b16 %v2261
        %v2334 = vunpack.c.l.b16 %v2262
        %v2335 = vunpack.c.l.b16 %v2263
        %v2336 = vunpack.c.l.b16 %v2264
        %v2337 = vunpack.c.l.b16 %v2265
        %v2338 = vunpack.c.l.b16 %v2266
        %v2339 = vunpack.c.l.b16 %v2267
        %v2340 = vunpack.c.l.b16 %v2268
        %v2341 = vpack.c.b16 %v2310, %v2309
        %v2342 = vpack.c.b16 %v2312, %v2311
        %v2343 = vpack.c.b16 %v2314, %v2313
        %v2344 = vpack.c.b16 %v2316, %v2315
        %v2345 = vpack.c.b16 %v2318, %v2317
        %v2346 = vpack.c.b16 %v2320, %v2319
        %v2347 = vpack.c.b16 %v2322, %v2321
        %v2348 = vpack.c.b16 %v2324, %v2323
        %v2349 = vpack.c.b16 %v2326, %v2325
        %v2350 = vpack.c.b16 %v2328, %v2327
        %v2351 = vpack.c.b16 %v2330, %v2329
        %v2352 = vpack.c.b16 %v2332, %v2331
        %v2353 = vpack.c.b16 %v2334, %v2333
        %v2354 = vpack.c.b16 %v2336, %v2335
        %v2355 = vpack.c.b16 %v2338, %v2337
        %v2356 = vpack.c.b16 %v2340, %v2339
        %2373 = vmatprep.subr.bf16.mxu0 0
        %2374 = vmatpush1.bf16.msra.mxu0 %v2348
        %2375 = vmatprep.subr.bf16.mxu0 0
        %2376 = vmatpush1.bf16.msra.mxu0 %v2347
        %2377 = vmatprep.subr.bf16.mxu0 0
        %2378 = vmatpush1.bf16.msra.mxu0 %v2346
        %2379 = vmatprep.subr.bf16.mxu0 0
        %2380 = vmatpush1.bf16.msra.mxu0 %v2345
        %2381 = vmatprep.subr.bf16.mxu0 0
        %2382 = vmatpush1.bf16.msra.mxu0 %v2344
        %2383 = vmatprep.subr.bf16.mxu0 0
        %2384 = vmatpush1.bf16.msra.mxu0 %v2343
        %2385 = vmatprep.subr.bf16.mxu0 0
        %2386 = vmatpush1.bf16.msra.mxu0 %v2342
        %2387 = vmatprep.subr.bf16.mxu0 0
        %2388 = vmatpush1.bf16.msra.mxu0 %v2341
        %2389 = vmatprep.subr.bf16.mxu0 0
        %2390 = vmatpush2.bf16.msra.mxu0 %v2356
        %2391 = vmatprep.subr.bf16.mxu0 0
        %2392 = vmatpush2.bf16.msra.mxu0 %v2355
        %2393 = vmatprep.subr.bf16.mxu0 0
        %2394 = vmatpush2.bf16.msra.mxu0 %v2354
        %2395 = vmatprep.subr.bf16.mxu0 0
        %2396 = vmatpush2.bf16.msra.mxu0 %v2353
        %2397 = vmatprep.subr.bf16.mxu0 0
        %2398 = vmatpush2.bf16.msra.mxu0 %v2352
        %2399 = vmatprep.subr.bf16.mxu0 0
        %2400 = vmatpush2.bf16.msra.mxu0 %v2351
        %2401 = vmatprep.subr.bf16.mxu0 0
        %2402 = vmatpush2.bf16.msra.mxu0 %v2350
        %2403 = vmatprep.subr.bf16.mxu0 0
        %2404 = vmatpush2.bf16.msra.mxu0 %v2349
        %2405 = vmatprep.mubr.bf16.mxu0 %v2231
        %2406 = vmatmul.mubr.bf16.gmra.mxu0 %v2230
        %v2407 = vpop.f32.mrf.mxu0
        %v2408 = vadd.f32 %v2275, %v2407
        %v2409 = vpop.f32.mrf.mxu0
        %v2410 = vpop.f32.mrf.mxu0
        %v2411 = vadd.f32 %v2275, %v2410
        %v2412 = vpop.f32.mrf.mxu0
        %2413 = vmatprep.mubr.bf16.mxu0 %v2233
        %2414 = vmatmul.mubr.bf16.gmra.mxu0 %v2232
        %v2415 = vpop.f32.mrf.mxu0
        %v2416 = vadd.f32 %v2275, %v2415
        %v2417 = vpop.f32.mrf.mxu0
        %v2418 = vpop.f32.mrf.mxu0
        %v2419 = vadd.f32 %v2275, %v2418
        %v2420 = vpop.f32.mrf.mxu0
        %2421 = vdwg.mxu0
        %v2422 = vlaneseq
        %v2423 = vand.u32 %v2422, 127
        %v2424 = vstv %s33
        %vm2425 = vcmp.eq.s32.totalorder %v2423, %v2424
        %v2426 = vld [vmem:[#allocation3] sm:$0xff]
        %v2427 = vld [vmem:[#allocation3 + $0x8] sm:$0xff]
        %v2428 = vld [vmem:[#allocation3 + $0x10] sm:$0xff]
        %v2429 = vld [vmem:[#allocation3 + $0x18] sm:$0xff]
        %v2430 = vsel %vm2425, %v2426, 0.0
        %v2431 = vsel %vm2425, %v2427, 0.0
        %v2432 = vsel %vm2425, %v2428, 0.0
        %v2433 = vsel %vm2425, %v2429, 0.0
        %2434 = vadd.xlane.f32.xlu0 %v2430
        %v2435 = vpop.xlane.xlu0 %2434
        %2436 = vadd.xlane.f32.xlu0 %v2431
        %v2437 = vpop.xlane.xlu0 %2436
        %2438 = vadd.xlane.f32.xlu0 %v2432
        %v2439 = vpop.xlane.xlu0 %2438
        %2440 = vadd.xlane.f32.xlu0 %v2433
        %v2441 = vpop.xlane.xlu0 %2440
        %v2442 = vld [vmem:[#allocation4] sm:$0xff]
        %v2443 = vld [vmem:[#allocation4 + $0x8] sm:$0xff]
        %v2444 = vld [vmem:[#allocation4 + $0x10] sm:$0xff]
        %v2445 = vld [vmem:[#allocation4 + $0x18] sm:$0xff]
        %v2446 = vmul.f32 %v2435, %v2408
        %v2447 = vmul.f32 %v2437, %v2411
        %v2448 = vmul.f32 %v2439, %v2416
        %v2449 = vmul.f32 %v2441, %v2419
        %v2450 = vadd.f32 %v2442, %v2446
        %v2451 = vadd.f32 %v2443, %v2447
        %v2452 = vadd.f32 %v2444, %v2448
        %v2453 = vadd.f32 %v2445, %v2449
        %2454 = vst.msk [vmem:[#allocation4] sm:$0xff] %vm2134, %v2450
        %2455 = vst.msk [vmem:[#allocation4 + $0x8] sm:$0xff] %vm2134, %v2451
        %2456 = vst.msk [vmem:[#allocation4 + $0x10] sm:$0xff] %vm2134, %v2452
        %2457 = vst.msk [vmem:[#allocation4 + $0x18] sm:$0xff] %vm2134, %v2453
        %p2458 = scmp.eq.s32.totalorder %s33, 3
        // Predicated region
        $region77: #{tpu_custom_call.1} parent=71 // pred_check
          %p2459 = pneg %p2458
        $region78: #{tpu_custom_call.1} parent=71 // pred_check_branch
          %2461 = sbr.rel (%p2459) target = $region80
        $region79: #{tpu_custom_call.1} parent=71 // pred_region
          %v2462 = vld [vmem:[#allocation4] sm:$0xff]
          %v2463 = vld [vmem:[#allocation4 + $0x8] sm:$0xff]
          %v2464 = vld [vmem:[#allocation4 + $0x10] sm:$0xff]
          %v2465 = vld [vmem:[#allocation4 + $0x18] sm:$0xff]
          %v2466 = vmul.f32 %v2462, 2.0
          %v2467 = vmul.f32 %v2463, 2.0
          %v2468 = vmul.f32 %v2464, 2.0
          %v2469 = vmul.f32 %v2465, 2.0
          %2470 = vst.msk [vmem:[#allocation6] sm:$0xff] %vm2134, %v2466
          %2471 = vst.msk [vmem:[#allocation6 + $0x8] sm:$0xff] %vm2134, %v2467
          %2472 = vst.msk [vmem:[#allocation6 + $0x10] sm:$0xff] %vm2134, %v2468
          %2473 = vst.msk [vmem:[#allocation6 + $0x18] sm:$0xff] %vm2134, %v2469
        $region80: #{tpu_custom_call.1} parent=71 // pred_fallthru
          _
        // Predicated region
        $region81: #{tpu_custom_call.1} parent=71 // pred_check
          %p2474 = pneg %p336
        $region82: #{tpu_custom_call.1} parent=71 // pred_check_branch
          %2476 = sbr.rel (%p2474) target = $region84
        $region83: #{tpu_custom_call.1} parent=71 // pred_region
          %s2477 = smul.u32 2, %s32
          %s2479 = ssub.s32 512, 512
          %2480 = vsyncadd [#allocation7], %s2479
          %s2481 = smul.addr %s2477, 2
          %s2482 = smul.addr %s2481, 128
          %s2483 = scalar_lea.hbm %s13, %s2482
          %s2484 = sshll.u32 [#allocation6], 4
          %s2485 = int_to_ptr.vmem [resolvable:$true] %s2484
          %2490 = dma.vmem_to_hbm [thread:$0]  %s2485, 512, %s2483, [#allocation7], 128, 128, 8
        $region84: #{tpu_custom_call.1} parent=71 // pred_fallthru
          _
        // Predicated region
        $region85: #{tpu_custom_call.1} parent=71 // pred_check
          %p2491 = pneg %p362
        $region86: #{tpu_custom_call.1} parent=71 // pred_check_branch
          %2493 = sbr.rel (%p2491) target = $region88
        $region87: #{tpu_custom_call.1} parent=71 // pred_region
          %s2494 = smul.u32 2, %s32
          %s2496 = ssub.s32 512, 512
          %2497 = vsyncadd [#allocation9], %s2496
          %s2498 = smul.addr %s2494, 2
          %s2499 = smul.addr %s2498, 128
          %s2500 = scalar_lea.hbm %s14, %s2499
          %s2501 = sshll.u32 [#allocation8], 4
          %s2502 = int_to_ptr.vmem [resolvable:$true] %s2501
          %2507 = dma.vmem_to_hbm [thread:$0]  %s2502, 512, %s2500, [#allocation9], 128, 128, 8
        $region88: #{tpu_custom_call.1} parent=71 // pred_fallthru
          _
        // Predicated region
        $region89: #{tpu_custom_call.1} parent=71 // pred_check
          %p2508 = pneg %p336
        $region90: #{tpu_custom_call.1} parent=71 // pred_check_branch
          %2510 = sbr.rel (%p2508) target = $region92
        $region91: #{tpu_custom_call.1} parent=71 // pred_region
          %2511 = dma.done [#allocation7], 512
        $region92: #{tpu_custom_call.1} parent=71 // pred_fallthru
          _
        // Predicated region
        $region93: #{tpu_custom_call.1} parent=71 // pred_check
          %p2512 = pneg %p362
        $region94: #{tpu_custom_call.1} parent=71 // pred_check_branch
          %2514 = sbr.rel (%p2512) target = $region96
        $region95: #{tpu_custom_call.1} parent=71 // pred_region
          %2515 = dma.done [#allocation9], 512
        $region96: #{tpu_custom_call.1} parent=71 // pred_fallthru
          _
      $region72: #{tpu_custom_call.1} parent=5 // pred_fallthru
        _
      %p2516 = scmp.le.s32.totalorder 2, %s23
      // Predicated region
      $region97: #{tpu_custom_call.1} parent=5 // pred_check
        %p2517 = pneg %p2516
      $region98: #{tpu_custom_call.1} parent=5 // pred_check_branch
        %2519 = sbr.rel (%p2517) target = $region100
      $region99: #{tpu_custom_call.1} parent=5 // pred_region
        %s2520 = ssub.s32 %s23, 2
      $region100: #{tpu_custom_call.1} parent=5 // pred_fallthru
        _
    $region6: #{tpu_custom_call.1} parent=1 // loop_footer
      %s27 = sadd.s32 1, %s23
    $region7: #{tpu_custom_call.1} parent=1 // loop_footer_branch
      %22 = sbr.rel target = $region3
    $region8: #{tpu_custom_call.1} parent=1 // loop_exit
      _
    %2521 = vsyncpa [#allocation7], 1
    %s2522 = scalar_lea.sflag [#allocation7], 1
    %2523 = vsyncpa %s2522, 1
    %2524 = vsyncpa [#allocation9], 1

</llo_original>
